<compile_context>
chip_gen: v7x
topology: tpu7x:2x2x1
jax: 0.10.0
libtpu: 0.0.40
codegen_flags: <defaults>
</compile_context>

<pallas_src>
import functools

import jax
import jax.numpy as jnp
from jax.experimental import pallas as pl
from jax.experimental.pallas import tpu as pltpu


# ---------------------------------------------------------------------------
# Small helpers
# ---------------------------------------------------------------------------
def _vmem_limit_bytes():
    """Generation-aware scoped-VMEM budget (~3/4 of physical VMEM per core)."""
    try:
        cap = getattr(pltpu.get_tpu_info(), "vmem_capacity_bytes", None)
    except Exception:
        cap = None
    if not cap:
        return 48 * 1024 * 1024          # safe everywhere (v7x has 64 MiB per core)
    return int(cap) * 3 // 4             # 48 MiB on v7x, 96 MiB on v5e / v6e


def _sublane_align(dtype):
    # (8,128) native tile for 32-bit; sub-32-bit dtypes pack along sublanes.
    return {4: 8, 2: 16, 1: 32}.get(jnp.dtype(dtype).itemsize, 8)


def _pick_tile(dim, pref, align):
    """Largest tile <= pref that divides `dim` and is `align`-aligned, else the full dim."""
    if dim <= pref:
        return dim
    t = max(align, (pref // align) * align)
    while t >= align:
        if dim % t == 0:
            return t
        t -= align
    return dim  # TODO(synk): pad + mask ragged dims instead of this fallback.


# ---------------------------------------------------------------------------
# Tiled matmul + bias (fused QKV projection and output projection)
# ---------------------------------------------------------------------------
def _matmul_bias_kernel(x_ref, w_ref, b_ref, o_ref, acc_ref):
    @pl.when(pl.program_id(2) == 0)
    def _init():
        acc_ref[...] = jnp.zeros_like(acc_ref)

    acc_ref[...] += jnp.dot(x_ref[...], w_ref[...],
                            preferred_element_type=jnp.float32)

    @pl.when(pl.program_id(2) == pl.num_programs(2) - 1)
    def _finalize():
        o_ref[...] = (acc_ref[...] + b_ref[...].astype(jnp.float32)).astype(o_ref.dtype)


def _matmul_bias(x, w, b, *, out_dtype, tm=512, tn=512, tk=512):
    M, K = x.shape
    _, N = w.shape
    tm = _pick_tile(M, tm, _sublane_align(x.dtype))
    tn = _pick_tile(N, tn, 128)
    tk = _pick_tile(K, tk, 128)

    cost = pl.CostEstimate(
        flops=2 * M * N * K,
        transcendentals=0,
        bytes_accessed=int((M * K + K * N) * x.dtype.itemsize
                           + N * b.dtype.itemsize
                           + M * N * jnp.dtype(out_dtype).itemsize),
    )
    return pl.pallas_call(
        _matmul_bias_kernel,
        out_shape=jax.ShapeDtypeStruct((M, N), out_dtype),
        grid=(M // tm, N // tn, K // tk),
        in_specs=[
            pl.BlockSpec((tm, tk), lambda i, j, k: (i, k)),
            pl.BlockSpec((tk, tn), lambda i, j, k: (k, j)),
            pl.BlockSpec((1, tn), lambda i, j, k: (0, j)),
        ],
        out_specs=pl.BlockSpec((tm, tn), lambda i, j, k: (i, j)),
        scratch_shapes=[pltpu.VMEM((tm, tn), jnp.float32)],
        compiler_params=pltpu.CompilerParams(
            dimension_semantics=("parallel", "parallel", "arbitrary"),
            vmem_limit_bytes=_vmem_limit_bytes()),
        cost_estimate=cost,
    )(x, w, b)


# ---------------------------------------------------------------------------
# Flash-style grouped-query attention
# ---------------------------------------------------------------------------
def _flash_gqa_kernel(q_ref, k_ref, v_ref, o_ref, qf_ref, m_ref, l_ref, acc_ref):
    ki = pl.program_id(3)
    tq = q_ref.shape[1]
    dh = k_ref.shape[2]
    gh = q_ref.shape[2] // dh            # query heads per group (static)

    @pl.when(ki == 0)
    def _init():
        # Fold the group's query heads onto the matmul row axis (head-major),
        # once per q-tile.  1/sqrt(Dh) is already folded into the Q weights.
        q = q_ref[0]                                              # (tq, gh*Dh)
        for h in range(gh):                                       # small static unroll
            qf_ref[h * tq:(h + 1) * tq, :] = q[:, h * dh:(h + 1) * dh]
        m_ref[...] = jnp.full_like(m_ref, -jnp.inf)
        l_ref[...] = jnp.zeros_like(l_ref)
        acc_ref[...] = jnp.zeros_like(acc_ref)

    k = k_ref[0]                                                  # (tkv, Dh)
    v = v_ref[0]                                                  # (tkv, Dh)

    # NT scores: contract Dh directly, no transpose / relayout.
    s = jax.lax.dot_general(qf_ref[...], k, (((1,), (1,)), ((), ())),
                            preferred_element_type=jnp.float32)   # (gh*tq, tkv)

    # Online softmax (f32 state, even on the bf16 MXU path).
    m_prev = m_ref[...]
    m_new = jnp.maximum(m_prev, jnp.max(s, axis=-1, keepdims=True))
    alpha = jnp.exp(m_prev - m_new)
    p = jnp.exp(s - m_new)
    l_ref[...] = alpha * l_ref[...] + jnp.sum(p, axis=-1, keepdims=True)
    pv = jax.lax.dot_general(p.astype(v.dtype), v, (((1,), (0,)), ((), ())),
                             preferred_element_type=jnp.float32)  # (gh*tq, Dh)
    acc_ref[...] = alpha * acc_ref[...] + pv
    m_ref[...] = m_new
    # TODO(synk): dropout on attention weights skipped (eval / inference mode).

    @pl.when(ki == pl.num_programs(3) - 1)
    def _finalize():
        out = acc_ref[...] * pl.reciprocal(l_ref[...], approx=True)
        for h in range(gh):              # unfold heads back onto the lane axis
            o_ref[0, :, h * dh:(h + 1) * dh] = (
                out[h * tq:(h + 1) * tq, :].astype(o_ref.dtype))


def _flash_gqa(qkv, *, embed_dim, groups, group_heads, head_dim, out_dtype,
               q_tile=256, kv_tile=512):
    """qkv: (B, S, E + 2*G*Dh) fused projection output; returns (B, S, E)."""
    B, S, _ = qkv.shape
    E, G, gh, Dh = embed_dim, groups, group_heads, head_dim
    H = G * gh
    sub = _sublane_align(qkv.dtype)
    tq = _pick_tile(S, q_tile, sub)
    tkv = _pick_tile(S, kv_tile, 128 if S % 128 == 0 else sub)
    kv_base = E // Dh                    # K offset inside the fused QKV, in Dh-wide blocks

    cost = pl.CostEstimate(
        flops=4 * B * H * S * S * Dh,
        transcendentals=B * H * S * S,
        bytes_accessed=int(2 * B * S * (E + 2 * G * Dh) * qkv.dtype.itemsize),
    )
    return pl.pallas_call(
        _flash_gqa_kernel,
        out_shape=jax.ShapeDtypeStruct((B, S, E), out_dtype),
        grid=(B, G, S // tq, S // tkv),
        in_specs=[
            # Q of group g: columns [g*gh*Dh, (g+1)*gh*Dh) of the fused QKV activation.
            pl.BlockSpec((1, tq, gh * Dh), lambda b, g, qi, ki: (b, qi, g)),
            # K of group g: columns [E + g*Dh, E + (g+1)*Dh).
            pl.BlockSpec((1, tkv, Dh), lambda b, g, qi, ki: (b, ki, kv_base + g)),
            # V of group g: columns [E + G*Dh + g*Dh, ...).
            pl.BlockSpec((1, tkv, Dh), lambda b, g, qi, ki: (b, ki, kv_base + G + g)),
        ],
        out_specs=pl.BlockSpec((1, tq, gh * Dh), lambda b, g, qi, ki: (b, qi, g)),
        scratch_shapes=[
            pltpu.VMEM((gh * tq, Dh), qkv.dtype),    # folded Q (head-major rows)
            pltpu.VMEM((gh * tq, 1), jnp.float32),   # m (running max)
            pltpu.VMEM((gh * tq, 1), jnp.float32),   # l (running denominator)
            pltpu.VMEM((gh * tq, Dh), jnp.float32),  # acc (unnormalized output)
        ],
        compiler_params=pltpu.CompilerParams(
            dimension_semantics=("parallel", "parallel", "parallel", "arbitrary"),
            vmem_limit_bytes=_vmem_limit_bytes()),
        cost_estimate=cost,
    )(qkv, qkv, qkv)


# ---------------------------------------------------------------------------
# Parameter prep (one-time) and forward pass
# ---------------------------------------------------------------------------
def prepare_params(params, *, num_heads, groups, mxu_dtype=jnp.bfloat16):
    """One-time host prep: fuse QKV weights, fold 1/sqrt(Dh) into Q, cast to MXU dtype."""
    del groups  # layout of the fused weights does not depend on it
    wq, bq, wk, bk, wv, bv, wo, bo = params
    embed_dim = wq.shape[0]
    head_dim = embed_dim // num_heads
    scale = 1.0 / (head_dim ** 0.5)
    dtype = mxu_dtype if mxu_dtype is not None else wq.dtype
    w_qkv = jnp.concatenate([wq * scale, wk, wv], axis=1).astype(dtype)
    b_qkv = jnp.concatenate([bq * scale, bk, bv], axis=1).astype(jnp.float32)
    return {"w_qkv": w_qkv, "b_qkv": b_qkv,
            "wo": wo.astype(dtype), "bo": bo.astype(jnp.float32)}


def gqa_forward(x, prepared, *, num_heads, groups, q_tile=256, kv_tile=512):
    """GroupQueryAttention forward (eval mode).  `prepared` comes from prepare_params()."""
    B, S, E = x.shape
    H, G = num_heads, groups
    Dh = E // H            # ideally a multiple of 128 for lane-dense blocks
    gh = H // G
    dtype = prepared["w_qkv"].dtype

    # Fused QKV projection: one tiled matmul, x is read once.
    x2d = x.reshape(B * S, E).astype(dtype)
    qkv = _matmul_bias(x2d, prepared["w_qkv"], prepared["b_qkv"], out_dtype=dtype)
    qkv = qkv.reshape(B, S, E + 2 * G * Dh)          # free reshape, no transposes/slices

    attn = _flash_gqa(qkv, embed_dim=E, groups=G, group_heads=gh, head_dim=Dh,
                      out_dtype=dtype, q_tile=q_tile, kv_tile=kv_tile)   # (B, S, E)

    out2d = _matmul_bias(attn.reshape(B * S, E), prepared["wo"], prepared["bo"],
                         out_dtype=x.dtype)
    return out2d.reshape(B, S, E)


# ---------------------------------------------------------------------------
# Pure-JAX reference mirroring the PyTorch forward (eval mode)
# ---------------------------------------------------------------------------
def gqa_reference(x, params, *, num_heads, groups):
    B, S, E = x.shape
    head_dim = E // num_heads
    group_heads = num_heads // groups
    wq, bq, wk, bk, wv, bv, wo, bo = params

    q = x @ wq + bq[0]
    k = x @ wk + bk[0]
    v = x @ wv + bv[0]

    q = q.reshape(B, S, num_heads, head_dim).transpose(0, 2, 1, 3)      # (B,H,S,Dh)
    k = k.reshape(B, S, groups, head_dim).transpose(0, 2, 3, 1)         # (B,G,Dh,S)
    v = v.reshape(B, S, groups, head_dim).transpose(0, 2, 1, 3)         # (B,G,S,Dh)

    k = jnp.broadcast_to(k[:, :, None], (B, groups, group_heads, head_dim, S))
    k = k.reshape(B, num_heads, head_dim, S)
    v = jnp.broadcast_to(v[:, :, None], (B, groups, group_heads, S, head_dim))
    v = v.reshape(B, num_heads, S, head_dim)

    scores = jnp.matmul(q, k) / (head_dim ** 0.5)
    weights = jax.nn.softmax(scores, axis=-1)
    out = jnp.matmul(weights, v)
    out = out.transpose(0, 2, 1, 3).reshape(B, S, E)
    return out @ wo + bo[0]


def init_params(key, embed_dim, num_heads, groups, dtype=jnp.float32):
    head_dim = embed_dim // num_heads
    kv_dim = groups * head_dim
    ks = jax.random.split(key, 8)
    scale = 0.05
    wq = jax.random.normal(ks[0], (embed_dim, embed_dim), dtype) * scale
    bq = jax.random.normal(ks[1], (1, embed_dim), dtype) * scale
    wk = jax.random.normal(ks[2], (embed_dim, kv_dim), dtype) * scale
    bk = jax.random.normal(ks[3], (1, kv_dim), dtype) * scale
    wv = jax.random.normal(ks[4], (embed_dim, kv_dim), dtype) * scale
    bv = jax.random.normal(ks[5], (1, kv_dim), dtype) * scale
    wo = jax.random.normal(ks[6], (embed_dim, embed_dim), dtype) * scale
    bo = jax.random.normal(ks[7], (1, embed_dim), dtype) * scale
    return (wq, bq, wk, bk, wv, bv, wo, bo)


if __name__ == "__main__":
    # Small demo shapes.  head_dim = 128 keeps every attention block lane-dense
    # (Q/out blocks 256 lanes wide, K/V blocks 128 lanes wide).
    batch, seq_len = 2, 64
    embed_dim, num_heads, groups = 512, 4, 2

    key = jax.random.PRNGKey(0)
    kx, kp = jax.random.split(key)
    x = jax.random.normal(kx, (batch, seq_len, embed_dim), jnp.float32)
    params = init_params(kp, embed_dim, num_heads, groups)

    ref = gqa_reference(x, params, num_heads=num_heads, groups=groups)
    ref_scale = float(jnp.max(jnp.abs(ref))) + 1e-6

    fwd = jax.jit(functools.partial(gqa_forward, num_heads=num_heads, groups=groups))

    # Default path: bf16 MXU operands (all generations), f32 softmax + accumulation.
    prep = prepare_params(params, num_heads=num_heads, groups=groups)
    out = jax.block_until_ready(fwd(x, prep))
    assert out.shape == (batch, seq_len, embed_dim)
    rel = float(jnp.max(jnp.abs(out - ref))) / ref_scale
    assert rel < 5e-2, f"bf16 path relative error {rel}"

    # f32 path: tighter numerical check of the same kernels.
    prep32 = prepare_params(params, num_heads=num_heads, groups=groups, mxu_dtype=None)
    out32 = jax.block_until_ready(fwd(x, prep32))
    rel32 = float(jnp.max(jnp.abs(out32 - ref))) / ref_scale
    assert rel32 < 5e-3, f"f32 path relative error {rel32}"

    print("KERNEL_OK")
</pallas_src>

<mosaic_0001>
module attributes {stable_mosaic.version = 11 : i64} {
  func.func @_matmul_bias_kernel(%arg0: i32, %arg1: i32, %arg2: i32, %arg3: memref<128x512xbf16, #tpu.memory_space<vmem>>, %arg4: memref<512x512xbf16, #tpu.memory_space<vmem>>, %arg5: memref<1x512xf32, #tpu.memory_space<vmem>>, %arg6: memref<128x512xbf16, #tpu.memory_space<vmem>>, %arg7: memref<128x512xf32, #tpu.memory_space<vmem>>) attributes {dimension_semantics = [#tpu.dimension_semantics<parallel>, #tpu.dimension_semantics<parallel>, #tpu.dimension_semantics<arbitrary>], iteration_bounds = array<i64: 1, 2, 1>, scalar_prefetch = 0 : i64, scratch_operands = 1 : i64, tpu.core_type = #tpu.core_type<tc>, window_params = [{transform_indices = @transform_0, window_bounds = array<i64: 128, 512>}, {transform_indices = @transform_1, window_bounds = array<i64: 512, 512>}, {transform_indices = @transform_2, window_bounds = array<i64: 1, 512>}, {transform_indices = @transform_3, window_bounds = array<i64: 128, 512>}]} {
    %c0_i32 = arith.constant 0 : i32
    %0 = arith.cmpi eq, %arg2, %c0_i32 : i32
    %1 = arith.extui %0 : i1 to i32
    %c0_i32_0 = arith.constant 0 : i32
    %2 = arith.cmpi ne, %1, %c0_i32_0 : i32
    scf.if %2 {
      %cst_10 = arith.constant 0.000000e+00 : f32
      %12 = vector.broadcast %cst_10 : f32 to vector<128x512xf32>
      %c0_11 = arith.constant 0 : index
      %c0_12 = arith.constant 0 : index
      %13 = vector.load %arg7[%c0_11, %c0_12] : memref<128x512xf32, #tpu.memory_space<vmem>>, vector<128x512xf32>
      tpu.vector_store %arg7[%c0_11, %c0_12], %12 {strides = array<i32>} : memref<128x512xf32, #tpu.memory_space<vmem>>, vector<128x512xf32>,
    } else {
    }
    %c0 = arith.constant 0 : index
    %c0_1 = arith.constant 0 : index
    %3 = vector.load %arg7[%c0, %c0_1] : memref<128x512xf32, #tpu.memory_space<vmem>>, vector<128x512xf32>
    %c0_2 = arith.constant 0 : index
    %c0_3 = arith.constant 0 : index
    %4 = vector.load %arg3[%c0_2, %c0_3] : memref<128x512xbf16, #tpu.memory_space<vmem>>, vector<128x512xbf16>
    %c0_4 = arith.constant 0 : index
    %c0_5 = arith.constant 0 : index
    %5 = vector.load %arg4[%c0_4, %c0_5] : memref<512x512xbf16, #tpu.memory_space<vmem>>, vector<512x512xbf16>
    %cst = arith.constant dense<0.000000e+00> : vector<128x512xf32>
    %6 = tpu.matmul %4, %5, %cst {dimension_numbers = #tpu.dot_dimension_numbers<[1], [0], [0], [1], [0, 0, 1, 1], [], []>} : vector<128x512xbf16>, vector<512x512xbf16>, vector<128x512xf32> -> vector<128x512xf32>
    %7 = arith.addf %3, %6 : vector<128x512xf32>
    %c0_6 = arith.constant 0 : index
    %c0_7 = arith.constant 0 : index
    %8 = vector.load %arg7[%c0_6, %c0_7] : memref<128x512xf32, #tpu.memory_space<vmem>>, vector<128x512xf32>
    tpu.vector_store %arg7[%c0_6, %c0_7], %7 {strides = array<i32>} : memref<128x512xf32, #tpu.memory_space<vmem>>, vector<128x512xf32>,
    %c0_i32_8 = arith.constant 0 : i32
    %9 = arith.cmpi eq, %arg2, %c0_i32_8 : i32
    %10 = arith.extui %9 : i1 to i32
    %c0_i32_9 = arith.constant 0 : i32
    %11 = arith.cmpi ne, %10, %c0_i32_9 : i32
    scf.if %11 {
      %c0_10 = arith.constant 0 : index
      %c0_11 = arith.constant 0 : index
      %12 = vector.load %arg7[%c0_10, %c0_11] : memref<128x512xf32, #tpu.memory_space<vmem>>, vector<128x512xf32>
      %c0_12 = arith.constant 0 : index
      %c0_13 = arith.constant 0 : index
      %13 = vector.load %arg5[%c0_12, %c0_13] : memref<1x512xf32, #tpu.memory_space<vmem>>, vector<1x512xf32>
      %14 = vector.broadcast %13 : vector<1x512xf32> to vector<128x512xf32>
      %15 = arith.addf %12, %14 : vector<128x512xf32>
      %16 = arith.truncf %15 : vector<128x512xf32> to vector<128x512xbf16>
      %c0_14 = arith.constant 0 : index
      %c0_15 = arith.constant 0 : index
      %17 = vector.load %arg6[%c0_14, %c0_15] : memref<128x512xbf16, #tpu.memory_space<vmem>>, vector<128x512xbf16>
      tpu.vector_store %arg6[%c0_14, %c0_15], %16 {strides = array<i32>} : memref<128x512xbf16, #tpu.memory_space<vmem>>, vector<128x512xbf16>,
    } else {
    }
    return
  }
  func.func @transform_0(%arg0: i32, %arg1: i32, %arg2: i32) -> (i32, i32) {
    %c0_i32 = arith.constant 0 : i32
    return %arg0, %arg2 : i32, i32
  }
  func.func @transform_1(%arg0: i32, %arg1: i32, %arg2: i32) -> (i32, i32) {
    %c0_i32 = arith.constant 0 : i32
    return %arg2, %arg1 : i32, i32
  }
  func.func @transform_2(%arg0: i32, %arg1: i32, %arg2: i32) -> (i32, i32) {
    %c0_i32 = arith.constant 0 : i32
    %c0_i32_0 = arith.constant 0 : i32
    return %c0_i32, %arg1 : i32, i32
  }
  func.func @transform_3(%arg0: i32, %arg1: i32, %arg2: i32) -> (i32, i32) {
    %c0_i32 = arith.constant 0 : i32
    return %arg0, %arg1 : i32, i32
  }
}

module attributes {stable_mosaic.version = 11 : i64} {
  func.func @_matmul_bias_kernel(%arg0: i32, %arg1: i32, %arg2: i32, %arg3: memref<128x512xbf16, #tpu.memory_space<vmem>>, %arg4: memref<512x512xbf16, #tpu.memory_space<vmem>>, %arg5: memref<1x512xf32, #tpu.memory_space<vmem>>, %arg6: memref<128x512xf32, #tpu.memory_space<vmem>>, %arg7: memref<128x512xf32, #tpu.memory_space<vmem>>) attributes {dimension_semantics = [#tpu.dimension_semantics<parallel>, #tpu.dimension_semantics<parallel>, #tpu.dimension_semantics<arbitrary>], iteration_bounds = array<i64: 1, 1, 1>, scalar_prefetch = 0 : i64, scratch_operands = 1 : i64, tpu.core_type = #tpu.core_type<tc>, window_params = [{transform_indices = @transform_0, window_bounds = array<i64: 128, 512>}, {transform_indices = @transform_1, window_bounds = array<i64: 512, 512>}, {transform_indices = @transform_2, window_bounds = array<i64: 1, 512>}, {transform_indices = @transform_3, window_bounds = array<i64: 128, 512>}]} {
    %c0_i32 = arith.constant 0 : i32
    %0 = arith.cmpi eq, %arg2, %c0_i32 : i32
    %1 = arith.extui %0 : i1 to i32
    %c0_i32_0 = arith.constant 0 : i32
    %2 = arith.cmpi ne, %1, %c0_i32_0 : i32
    scf.if %2 {
      %cst_10 = arith.constant 0.000000e+00 : f32
      %12 = vector.broadcast %cst_10 : f32 to vector<128x512xf32>
      %c0_11 = arith.constant 0 : index
      %c0_12 = arith.constant 0 : index
      %13 = vector.load %arg7[%c0_11, %c0_12] : memref<128x512xf32, #tpu.memory_space<vmem>>, vector<128x512xf32>
      tpu.vector_store %arg7[%c0_11, %c0_12], %12 {strides = array<i32>} : memref<128x512xf32, #tpu.memory_space<vmem>>, vector<128x512xf32>,
    } else {
    }
    %c0 = arith.constant 0 : index
    %c0_1 = arith.constant 0 : index
    %3 = vector.load %arg7[%c0, %c0_1] : memref<128x512xf32, #tpu.memory_space<vmem>>, vector<128x512xf32>
    %c0_2 = arith.constant 0 : index
    %c0_3 = arith.constant 0 : index
    %4 = vector.load %arg3[%c0_2, %c0_3] : memref<128x512xbf16, #tpu.memory_space<vmem>>, vector<128x512xbf16>
    %c0_4 = arith.constant 0 : index
    %c0_5 = arith.constant 0 : index
    %5 = vector.load %arg4[%c0_4, %c0_5] : memref<512x512xbf16, #tpu.memory_space<vmem>>, vector<512x512xbf16>
    %cst = arith.constant dense<0.000000e+00> : vector<128x512xf32>
    %6 = tpu.matmul %4, %5, %cst {dimension_numbers = #tpu.dot_dimension_numbers<[1], [0], [0], [1], [0, 0, 1, 1], [], []>} : vector<128x512xbf16>, vector<512x512xbf16>, vector<128x512xf32> -> vector<128x512xf32>
    %7 = arith.addf %3, %6 : vector<128x512xf32>
    %c0_6 = arith.constant 0 : index
    %c0_7 = arith.constant 0 : index
    %8 = vector.load %arg7[%c0_6, %c0_7] : memref<128x512xf32, #tpu.memory_space<vmem>>, vector<128x512xf32>
    tpu.vector_store %arg7[%c0_6, %c0_7], %7 {strides = array<i32>} : memref<128x512xf32, #tpu.memory_space<vmem>>, vector<128x512xf32>,
    %c0_i32_8 = arith.constant 0 : i32
    %9 = arith.cmpi eq, %arg2, %c0_i32_8 : i32
    %10 = arith.extui %9 : i1 to i32
    %c0_i32_9 = arith.constant 0 : i32
    %11 = arith.cmpi ne, %10, %c0_i32_9 : i32
    scf.if %11 {
      %c0_10 = arith.constant 0 : index
      %c0_11 = arith.constant 0 : index
      %12 = vector.load %arg7[%c0_10, %c0_11] : memref<128x512xf32, #tpu.memory_space<vmem>>, vector<128x512xf32>
      %c0_12 = arith.constant 0 : index
      %c0_13 = arith.constant 0 : index
      %13 = vector.load %arg5[%c0_12, %c0_13] : memref<1x512xf32, #tpu.memory_space<vmem>>, vector<1x512xf32>
      %14 = vector.broadcast %13 : vector<1x512xf32> to vector<128x512xf32>
      %15 = arith.addf %12, %14 : vector<128x512xf32>
      %c0_14 = arith.constant 0 : index
      %c0_15 = arith.constant 0 : index
      %16 = vector.load %arg6[%c0_14, %c0_15] : memref<128x512xf32, #tpu.memory_space<vmem>>, vector<128x512xf32>
      tpu.vector_store %arg6[%c0_14, %c0_15], %15 {strides = array<i32>} : memref<128x512xf32, #tpu.memory_space<vmem>>, vector<128x512xf32>,
    } else {
    }
    return
  }
  func.func @transform_0(%arg0: i32, %arg1: i32, %arg2: i32) -> (i32, i32) {
    %c0_i32 = arith.constant 0 : i32
    return %arg0, %arg2 : i32, i32
  }
  func.func @transform_1(%arg0: i32, %arg1: i32, %arg2: i32) -> (i32, i32) {
    %c0_i32 = arith.constant 0 : i32
    return %arg2, %arg1 : i32, i32
  }
  func.func @transform_2(%arg0: i32, %arg1: i32, %arg2: i32) -> (i32, i32) {
    %c0_i32 = arith.constant 0 : i32
    %c0_i32_0 = arith.constant 0 : i32
    return %c0_i32, %arg1 : i32, i32
  }
  func.func @transform_3(%arg0: i32, %arg1: i32, %arg2: i32) -> (i32, i32) {
    %c0_i32 = arith.constant 0 : i32
    return %arg0, %arg1 : i32, i32
  }
}

module attributes {stable_mosaic.version = 11 : i64} {
  func.func @_flash_gqa_kernel(%arg0: i32, %arg1: i32, %arg2: i32, %arg3: i32, %arg4: memref<1x64x256xbf16, #tpu.memory_space<vmem>>, %arg5: memref<1x64x128xbf16, #tpu.memory_space<vmem>>, %arg6: memref<1x64x128xbf16, #tpu.memory_space<vmem>>, %arg7: memref<1x64x256xbf16, #tpu.memory_space<vmem>>, %arg8: memref<128x128xbf16, #tpu.memory_space<vmem>>, %arg9: memref<128x1xf32, #tpu.memory_space<vmem>>, %arg10: memref<128x1xf32, #tpu.memory_space<vmem>>, %arg11: memref<128x128xf32, #tpu.memory_space<vmem>>) attributes {dimension_semantics = [#tpu.dimension_semantics<parallel>, #tpu.dimension_semantics<parallel>, #tpu.dimension_semantics<parallel>, #tpu.dimension_semantics<arbitrary>], iteration_bounds = array<i64: 2, 2, 1, 1>, scalar_prefetch = 0 : i64, scratch_operands = 4 : i64, tpu.core_type = #tpu.core_type<tc>, window_params = [{transform_indices = @transform_0, window_bounds = array<i64: 1, 64, 256>}, {transform_indices = @transform_1, window_bounds = array<i64: 1, 64, 128>}, {transform_indices = @transform_2, window_bounds = array<i64: 1, 64, 128>}, {transform_indices = @transform_3, window_bounds = array<i64: 1, 64, 256>}]} {
    %c0_i32 = arith.constant 0 : i32
    %0 = arith.cmpi eq, %arg3, %c0_i32 : i32
    %1 = arith.extui %0 : i1 to i32
    %c0_i32_0 = arith.constant 0 : i32
    %2 = arith.cmpi ne, %1, %c0_i32_0 : i32
    scf.if %2 {
      %c0_25 = arith.constant 0 : index
      %c0_26 = arith.constant 0 : index
      %c0_27 = arith.constant 0 : index
      %35 = vector.load %arg4[%c0_25, %c0_26, %c0_27] : memref<1x64x256xbf16, #tpu.memory_space<vmem>>, vector<1x64x256xbf16>
      %36 = vector.shape_cast %35 : vector<1x64x256xbf16> to vector<64x256xbf16>
      %37 = vector.extract_strided_slice %36 {offsets = [0, 0], sizes = [64, 128], strides = [1, 1]} : vector<64x256xbf16> to vector<64x128xbf16>
      %c0_28 = arith.constant 0 : index
      %c0_29 = arith.constant 0 : index
      %38 = vector.load %arg8[%c0_28, %c0_29] : memref<128x128xbf16, #tpu.memory_space<vmem>>, vector<64x128xbf16>
      tpu.vector_store %arg8[%c0_28, %c0_29], %37 {strides = array<i32>} : memref<128x128xbf16, #tpu.memory_space<vmem>>, vector<64x128xbf16>,
      %39 = vector.extract_strided_slice %36 {offsets = [0, 128], sizes = [64, 128], strides = [1, 1]} : vector<64x256xbf16> to vector<64x128xbf16>
      %c64 = arith.constant 64 : index
      %c0_30 = arith.constant 0 : index
      %40 = vector.load %arg8[%c64, %c0_30] : memref<128x128xbf16, #tpu.memory_space<vmem>>, vector<64x128xbf16>
      tpu.vector_store %arg8[%c64, %c0_30], %39 {strides = array<i32>} : memref<128x128xbf16, #tpu.memory_space<vmem>>, vector<64x128xbf16>,
      %cst_31 = arith.constant 0xFF800000 : f32
      %41 = vector.broadcast %cst_31 : f32 to vector<128x1xf32>
      %c0_32 = arith.constant 0 : index
      %c0_33 = arith.constant 0 : index
      %42 = vector.load %arg9[%c0_32, %c0_33] : memref<128x1xf32, #tpu.memory_space<vmem>>, vector<128x1xf32>
      tpu.vector_store %arg9[%c0_32, %c0_33], %41 {strides = array<i32>} : memref<128x1xf32, #tpu.memory_space<vmem>>, vector<128x1xf32>,
      %cst_34 = arith.constant 0.000000e+00 : f32
      %43 = vector.broadcast %cst_34 : f32 to vector<128x1xf32>
      %c0_35 = arith.constant 0 : index
      %c0_36 = arith.constant 0 : index
      %44 = vector.load %arg10[%c0_35, %c0_36] : memref<128x1xf32, #tpu.memory_space<vmem>>, vector<128x1xf32>
      tpu.vector_store %arg10[%c0_35, %c0_36], %43 {strides = array<i32>} : memref<128x1xf32, #tpu.memory_space<vmem>>, vector<128x1xf32>,
      %cst_37 = arith.constant 0.000000e+00 : f32
      %45 = vector.broadcast %cst_37 : f32 to vector<128x128xf32>
      %c0_38 = arith.constant 0 : index
      %c0_39 = arith.constant 0 : index
      %46 = vector.load %arg11[%c0_38, %c0_39] : memref<128x128xf32, #tpu.memory_space<vmem>>, vector<128x128xf32>
      tpu.vector_store %arg11[%c0_38, %c0_39], %45 {strides = array<i32>} : memref<128x128xf32, #tpu.memory_space<vmem>>, vector<128x128xf32>,
    } else {
    }
    %c0 = arith.constant 0 : index
    %c0_1 = arith.constant 0 : index
    %c0_2 = arith.constant 0 : index
    %3 = vector.load %arg5[%c0, %c0_1, %c0_2] : memref<1x64x128xbf16, #tpu.memory_space<vmem>>, vector<1x64x128xbf16>
    %4 = vector.shape_cast %3 : vector<1x64x128xbf16> to vector<64x128xbf16>
    %c0_3 = arith.constant 0 : index
    %c0_4 = arith.constant 0 : index
    %c0_5 = arith.constant 0 : index
    %5 = vector.load %arg6[%c0_3, %c0_4, %c0_5] : memref<1x64x128xbf16, #tpu.memory_space<vmem>>, vector<1x64x128xbf16>
    %6 = vector.shape_cast %5 : vector<1x64x128xbf16> to vector<64x128xbf16>
    %c0_6 = arith.constant 0 : index
    %c0_7 = arith.constant 0 : index
    %7 = vector.load %arg8[%c0_6, %c0_7] : memref<128x128xbf16, #tpu.memory_space<vmem>>, vector<128x128xbf16>
    %cst = arith.constant dense<0.000000e+00> : vector<128x64xf32>
    %8 = tpu.matmul %7, %4, %cst {dimension_numbers = #tpu.dot_dimension_numbers<[1], [1], [0], [0], [0, 0, 1, 0], [], []>} : vector<128x128xbf16>, vector<64x128xbf16>, vector<128x64xf32> -> vector<128x64xf32>
    %c0_8 = arith.constant 0 : index
    %c0_9 = arith.constant 0 : index
    %9 = vector.load %arg9[%c0_8, %c0_9] : memref<128x1xf32, #tpu.memory_space<vmem>>, vector<128x1xf32>
    %cst_10 = arith.constant dense<0xFF800000> : vector<128xf32>
    %10 = vector.multi_reduction <maximumf>, %8, %cst_10 [1] : vector<128x64xf32> to vector<128xf32>
    %11 = vector.shape_cast %10 : vector<128xf32> to vector<128x1xf32>
    %12 = arith.maximumf %9, %11 : vector<128x1xf32>
    %13 = arith.subf %9, %12 : vector<128x1xf32>
    %14 = math.exp %13 : vector<128x1xf32>
    %15 = vector.broadcast %12 : vector<128x1xf32> to vector<128x64xf32>
    %16 = arith.subf %8, %15 : vector<128x64xf32>
    %17 = math.exp %16 : vector<128x64xf32>
    %c0_11 = arith.constant 0 : index
    %c0_12 = arith.constant 0 : index
    %18 = vector.load %arg10[%c0_11, %c0_12] : memref<128x1xf32, #tpu.memory_space<vmem>>, vector<128x1xf32>
    %19 = arith.mulf %14, %18 : vector<128x1xf32>
    %cst_13 = arith.constant dense<0.000000e+00> : vector<128xf32>
    %20 = vector.multi_reduction <add>, %17, %cst_13 [1] : vector<128x64xf32> to vector<128xf32>
    %21 = vector.shape_cast %20 : vector<128xf32> to vector<128x1xf32>
    %22 = arith.addf %19, %21 : vector<128x1xf32>
    %c0_14 = arith.constant 0 : index
    %c0_15 = arith.constant 0 : index
    %23 = vector.load %arg10[%c0_14, %c0_15] : memref<128x1xf32, #tpu.memory_space<vmem>>, vector<128x1xf32>
    tpu.vector_store %arg10[%c0_14, %c0_15], %22 {strides = array<i32>} : memref<128x1xf32, #tpu.memory_space<vmem>>, vector<128x1xf32>,
    %24 = arith.truncf %17 : vector<128x64xf32> to vector<128x64xbf16>
    %cst_16 = arith.constant dense<0.000000e+00> : vector<128x128xf32>
    %25 = tpu.matmul %24, %6, %cst_16 {dimension_numbers = #tpu.dot_dimension_numbers<[1], [0], [0], [1], [0, 0, 1, 1], [], []>} : vector<128x64xbf16>, vector<64x128xbf16>, vector<128x128xf32> -> vector<128x128xf32>
    %c0_17 = arith.constant 0 : index
    %c0_18 = arith.constant 0 : index
    %26 = vector.load %arg11[%c0_17, %c0_18] : memref<128x128xf32, #tpu.memory_space<vmem>>, vector<128x128xf32>
    %27 = vector.broadcast %14 : vector<128x1xf32> to vector<128x128xf32>
    %28 = arith.mulf %27, %26 : vector<128x128xf32>
    %29 = arith.addf %28, %25 : vector<128x128xf32>
    %c0_19 = arith.constant 0 : index
    %c0_20 = arith.constant 0 : index
    %30 = vector.load %arg11[%c0_19, %c0_20] : memref<128x128xf32, #tpu.memory_space<vmem>>, vector<128x128xf32>
    tpu.vector_store %arg11[%c0_19, %c0_20], %29 {strides = array<i32>} : memref<128x128xf32, #tpu.memory_space<vmem>>, vector<128x128xf32>,
    %c0_21 = arith.constant 0 : index
    %c0_22 = arith.constant 0 : index
    %31 = vector.load %arg9[%c0_21, %c0_22] : memref<128x1xf32, #tpu.memory_space<vmem>>, vector<128x1xf32>
    tpu.vector_store %arg9[%c0_21, %c0_22], %12 {strides = array<i32>} : memref<128x1xf32, #tpu.memory_space<vmem>>, vector<128x1xf32>,
    %c0_i32_23 = arith.constant 0 : i32
    %32 = arith.cmpi eq, %arg3, %c0_i32_23 : i32
    %33 = arith.extui %32 : i1 to i32
    %c0_i32_24 = arith.constant 0 : i32
    %34 = arith.cmpi ne, %33, %c0_i32_24 : i32
    scf.if %34 {
      %c0_25 = arith.constant 0 : index
      %c0_26 = arith.constant 0 : index
      %35 = vector.load %arg11[%c0_25, %c0_26] : memref<128x128xf32, #tpu.memory_space<vmem>>, vector<128x128xf32>
      %c0_27 = arith.constant 0 : index
      %c0_28 = arith.constant 0 : index
      %36 = vector.load %arg10[%c0_27, %c0_28] : memref<128x1xf32, #tpu.memory_space<vmem>>, vector<128x1xf32>
      %37 = tpu.reciprocal %36 {approx = true} : vector<128x1xf32> -> vector<128x1xf32>
      %38 = vector.broadcast %37 : vector<128x1xf32> to vector<128x128xf32>
      %39 = arith.mulf %35, %38 : vector<128x128xf32>
      %40 = vector.extract_strided_slice %39 {offsets = [0, 0], sizes = [64, 128], strides = [1, 1]} : vector<128x128xf32> to vector<64x128xf32>
      %41 = arith.truncf %40 : vector<64x128xf32> to vector<64x128xbf16>
      %c0_29 = arith.constant 0 : index
      %c0_30 = arith.constant 0 : index
      %c0_31 = arith.constant 0 : index
      %42 = vector.load %arg7[%c0_29, %c0_30, %c0_31] : memref<1x64x256xbf16, #tpu.memory_space<vmem>>, vector<1x64x128xbf16>
      %43 = vector.shape_cast %42 : vector<1x64x128xbf16> to vector<64x128xbf16>
      %44 = vector.shape_cast %41 : vector<64x128xbf16> to vector<1x64x128xbf16>
      tpu.vector_store %arg7[%c0_29, %c0_30, %c0_31], %44 {strides = array<i32>} : memref<1x64x256xbf16, #tpu.memory_space<vmem>>, vector<1x64x128xbf16>,
      %45 = vector.extract_strided_slice %39 {offsets = [64, 0], sizes = [64, 128], strides = [1, 1]} : vector<128x128xf32> to vector<64x128xf32>
      %46 = arith.truncf %45 : vector<64x128xf32> to vector<64x128xbf16>
      %c0_32 = arith.constant 0 : index
      %c0_33 = arith.constant 0 : index
      %c128 = arith.constant 128 : index
      %47 = vector.load %arg7[%c0_32, %c0_33, %c128] : memref<1x64x256xbf16, #tpu.memory_space<vmem>>, vector<1x64x128xbf16>
      %48 = vector.shape_cast %47 : vector<1x64x128xbf16> to vector<64x128xbf16>
      %49 = vector.shape_cast %46 : vector<64x128xbf16> to vector<1x64x128xbf16>
      tpu.vector_store %arg7[%c0_32, %c0_33, %c128], %49 {strides = array<i32>} : memref<1x64x256xbf16, #tpu.memory_space<vmem>>, vector<1x64x128xbf16>,
    } else {
    }
    return
  }
  func.func @transform_0(%arg0: i32, %arg1: i32, %arg2: i32, %arg3: i32) -> (i32, i32, i32) {
    %c0_i32 = arith.constant 0 : i32
    return %arg0, %arg2, %arg1 : i32, i32, i32
  }
  func.func @transform_1(%arg0: i32, %arg1: i32, %arg2: i32, %arg3: i32) -> (i32, i32, i32) {
    %c4_i32 = arith.constant 4 : i32
    %0 = arith.addi %c4_i32, %arg1 : i32
    %c0_i32 = arith.constant 0 : i32
    return %arg0, %arg3, %0 : i32, i32, i32
  }
  func.func @transform_2(%arg0: i32, %arg1: i32, %arg2: i32, %arg3: i32) -> (i32, i32, i32) {
    %c6_i32 = arith.constant 6 : i32
    %0 = arith.addi %c6_i32, %arg1 : i32
    %c0_i32 = arith.constant 0 : i32
    return %arg0, %arg3, %0 : i32, i32, i32
  }
  func.func @transform_3(%arg0: i32, %arg1: i32, %arg2: i32, %arg3: i32) -> (i32, i32, i32) {
    %c0_i32 = arith.constant 0 : i32
    return %arg0, %arg2, %arg1 : i32, i32, i32
  }
}

</mosaic_0001>

<llo_original>
// kernel: gqa_forward.4
$region0: #{gqa_forward.4}
  #allocation0 [shape = 'u32[]', space=smem, size = 0x4, offset = 0x4, fixed_abs, tag = 'smem constant byte address 0x4 - core index']
  #allocation1 [shape = 'u32[144,128]{1,0:T(1,128)}', space=vmem, size = 0x12000, scoped, tag = 'internal scratch']
  #allocation2 [shape = 'bf16[128,128]{1,0:T(16,128)(2,1)}', space=vmem, size = 0x8000, scoped, tag = 'scratch operand']
  #allocation3 [shape = 'f32[128,1]{1,0:T(8,128)}', space=vmem, size = 0x10000, scoped, tag = 'scratch operand']
  #allocation4 [shape = 'f32[128,1]{1,0:T(8,128)}', space=vmem, size = 0x10000, scoped, tag = 'scratch operand']
  #allocation5 [shape = 'f32[128,128]{1,0:T(8,128)}', space=vmem, size = 0x10000, scoped, tag = 'scratch operand']
  %s0 = inlined_call_operand.vmem [shape: bf16[2,64,1024], index: 0, kind: input, shape index: {}, may-alias: {0,1,2}]
  %s1 = inlined_call_operand.vmem [shape: bf16[2,64,1024], index: 1, kind: input, shape index: {}, may-alias: {0,1,2}]
  %s2 = inlined_call_operand.vmem [shape: bf16[2,64,1024], index: 2, kind: input, shape index: {}, may-alias: {0,1,2}]
  %s3 = inlined_call_operand.vmem [shape: bf16[2,64,512], index: 3, kind: output, shape index: {}]
  %s4 = sld [smem:[#allocation0]]
  $region207: #{gqa_forward.4} parent=0
    _
  %s6 = ssub.s32 1, %s4
  %s7 = scalar_select 0, %s6, %s4
  $region1: #{gqa_forward.4} parent=0
    #allocation6 [shape = 'u8[65536]{0}', space=vmem, size = 0x10000, scoped, tag = 'input window, operand 0']
    #allocation7 [shape = 'u8[32768]{0}', space=vmem, size = 0x8000, scoped, tag = 'input window, operand 1']
    #allocation8 [shape = 'u8[32768]{0}', space=vmem, size = 0x8000, scoped, tag = 'input window, operand 2']
    #allocation9 [shape = 'u8[65536]{0}', space=vmem, size = 0x10000, scoped, tag = 'output window, operand 0']
    loop: start=0, step=1, limit=6
    $region2: #{gqa_forward.4} parent=1 // loop_pre_header
      _
    $region3: #{gqa_forward.4} parent=1 // loop_header
      %s9 = sphi 0, %s13
      %p10 = scmp.ge.s32.totalorder %s9, 6
      %s16 = sphi 0, %s42
      %s17 = sphi 0, %s38
      %s18 = sphi 0, %s34
      %s19 = sphi 0, %s30
      %s20 = sphi 0, %s16
      %s21 = sphi 0, %s17
      %s22 = sphi 0, %s18
      %s23 = sphi 0, %s19
      %s24 = sphi 0, %s20
      %s25 = sphi 0, %s21
      %s26 = sphi 0, %s22
      %s27 = sphi 0, %s23
      %s49 = sphi 0, %s51
      %s52 = sphi 0, %s49
      %s53 = sphi 0, %s52
      %s69 = sphi 0, %s53
      %s81 = sphi 0, %s83
      %s84 = sphi 0, %s81
      %s85 = sphi 0, %s84
      %s101 = sphi 0, %s85
      %s113 = sphi 0, %s115
      %s116 = sphi 0, %s113
      %s117 = sphi 0, %s116
      %s133 = sphi 0, %s117
      %s143 = sphi 0, %s145
      %s146 = sphi 0, %s143
      %s147 = sphi 0, %s146
      %s163 = sphi 0, %s147
    $region4: #{gqa_forward.4} parent=1 // loop_header_branch
      %12 = sbr.rel (%p10) target = $region8
    $region5: #{gqa_forward.4} parent=1 // loop_body
      %s14 = ssub.s32 %s9, 1
      %s15 = ssub.s32 %s9, 2
      %s28 = sadd.s32 1, %s19
      %p29 = scmp.ge.s32.totalorder %s28, 1
      %s30 = scalar_select %p29, 0, %s28
      %s31 = sadd.s32 1, %s18
      %s32 = scalar_select %p29, %s31, %s18
      %p33 = scmp.ge.s32.totalorder %s32, 1
      %s34 = scalar_select %p33, 0, %s32
      %s35 = sadd.s32 1, %s17
      %s36 = scalar_select %p33, %s35, %s17
      %p37 = scmp.ge.s32.totalorder %s36, 2
      %s38 = scalar_select %p37, 0, %s36
      %s39 = sadd.s32 1, %s16
      %s40 = scalar_select %p37, %s39, %s16
      %p41 = scmp.ge.s32.totalorder %s40, 2
      %s42 = scalar_select %p41, 0, %s40
      %s43 = ssub.s32 %s16, %s42
      %s44 = ssub.s32 %s18, %s34
      %s45 = sor.u32 %s43, %s44
      %s46 = ssub.s32 %s17, %s38
      %s47 = sor.u32 %s45, %s46
      %p48 = scmp.eq.s32.totalorder %s47, 0
      %s50 = sadd.s32 %s49, 1
      %s51 = scalar_select %p48, %s49, %s50
      %p54 = pneg %p48
      %p55 = scmp.eq.s32.totalorder %s9, 3
      %p56 = por %p54, %p55
      %p57 = scmp.ne.s32.totalorder %s49, %s52
      %p58 = scmp.eq.s32.totalorder %s9, 0
      %p59 = por %p57, %p58
      %p60 = scmp.ne.s32.totalorder %s49, %s52
      %p61 = scmp.eq.s32.totalorder %s14, 3
      %p62 = por %p60, %p61
      %p63 = scmp.ne.s32.totalorder %s52, %s53
      %p64 = scmp.eq.s32.totalorder %s14, 0
      %p65 = por %p63, %p64
      %p66 = scmp.ne.s32.totalorder %s52, %s53
      %p67 = scmp.eq.s32.totalorder %s15, 3
      %p68 = por %p66, %p67
      %p70 = scmp.ne.s32.totalorder %s53, %s69
      %p71 = scmp.eq.s32.totalorder %s15, 0
      %p72 = por %p70, %p71
      %s73 = sadd.s32 %s17, 4
      %s74 = sadd.s32 %s38, 4
      %s75 = ssub.s32 %s16, %s42
      %s76 = ssub.s32 %s19, %s30
      %s77 = sor.u32 %s75, %s76
      %s78 = ssub.s32 %s73, %s74
      %s79 = sor.u32 %s77, %s78
      %p80 = scmp.eq.s32.totalorder %s79, 0
      %s82 = sadd.s32 %s81, 1
      %s83 = scalar_select %p80, %s81, %s82
      %p86 = pneg %p80
      %p87 = scmp.eq.s32.totalorder %s9, 3
      %p88 = por %p86, %p87
      %p89 = scmp.ne.s32.totalorder %s81, %s84
      %p90 = scmp.eq.s32.totalorder %s9, 0
      %p91 = por %p89, %p90
      %p92 = scmp.ne.s32.totalorder %s81, %s84
      %p93 = scmp.eq.s32.totalorder %s14, 3
      %p94 = por %p92, %p93
      %p95 = scmp.ne.s32.totalorder %s84, %s85
      %p96 = scmp.eq.s32.totalorder %s14, 0
      %p97 = por %p95, %p96
      %p98 = scmp.ne.s32.totalorder %s84, %s85
      %p99 = scmp.eq.s32.totalorder %s15, 3
      %p100 = por %p98, %p99
      %p102 = scmp.ne.s32.totalorder %s85, %s101
      %p103 = scmp.eq.s32.totalorder %s15, 0
      %p104 = por %p102, %p103
      %s105 = sadd.s32 %s17, 6
      %s106 = sadd.s32 %s38, 6
      %s107 = ssub.s32 %s16, %s42
      %s108 = ssub.s32 %s19, %s30
      %s109 = sor.u32 %s107, %s108
      %s110 = ssub.s32 %s105, %s106
      %s111 = sor.u32 %s109, %s110
      %p112 = scmp.eq.s32.totalorder %s111, 0
      %s114 = sadd.s32 %s113, 1
      %s115 = scalar_select %p112, %s113, %s114
      %p118 = pneg %p112
      %p119 = scmp.eq.s32.totalorder %s9, 3
      %p120 = por %p118, %p119
      %p121 = scmp.ne.s32.totalorder %s113, %s116
      %p122 = scmp.eq.s32.totalorder %s9, 0
      %p123 = por %p121, %p122
      %p124 = scmp.ne.s32.totalorder %s113, %s116
      %p125 = scmp.eq.s32.totalorder %s14, 3
      %p126 = por %p124, %p125
      %p127 = scmp.ne.s32.totalorder %s116, %s117
      %p128 = scmp.eq.s32.totalorder %s14, 0
      %p129 = por %p127, %p128
      %p130 = scmp.ne.s32.totalorder %s116, %s117
      %p131 = scmp.eq.s32.totalorder %s15, 3
      %p132 = por %p130, %p131
      %p134 = scmp.ne.s32.totalorder %s117, %s133
      %p135 = scmp.eq.s32.totalorder %s15, 0
      %p136 = por %p134, %p135
      %s137 = ssub.s32 %s16, %s42
      %s138 = ssub.s32 %s18, %s34
      %s139 = sor.u32 %s137, %s138
      %s140 = ssub.s32 %s17, %s38
      %s141 = sor.u32 %s139, %s140
      %p142 = scmp.eq.s32.totalorder %s141, 0
      %s144 = sadd.s32 %s143, 1
      %s145 = scalar_select %p142, %s143, %s144
      %p148 = pneg %p142
      %p149 = scmp.eq.s32.totalorder %s9, 3
      %p150 = por %p148, %p149
      %p151 = scmp.ne.s32.totalorder %s143, %s146
      %p152 = scmp.eq.s32.totalorder %s9, 0
      %p153 = por %p151, %p152
      %p154 = scmp.ne.s32.totalorder %s143, %s146
      %p155 = scmp.eq.s32.totalorder %s14, 3
      %p156 = por %p154, %p155
      %p157 = scmp.ne.s32.totalorder %s146, %s147
      %p158 = scmp.eq.s32.totalorder %s14, 0
      %p159 = por %p157, %p158
      %p160 = scmp.ne.s32.totalorder %s146, %s147
      %p161 = scmp.eq.s32.totalorder %s15, 3
      %p162 = por %p160, %p161
      %p164 = scmp.ne.s32.totalorder %s147, %s163
      %p165 = scmp.eq.s32.totalorder %s15, 0
      %p166 = por %p164, %p165
      %p167 = scmp.le.s32.totalorder 1, %s9
      %p168 = scmp.lt.s32.totalorder %s9, 5
      %p169 = pnand %p167, %p168
      %p170 = pneg %p169
      // Predicated region
      $region9: #{gqa_forward.4} parent=5 // pred_check
        _
      $region10: #{gqa_forward.4} parent=5 // pred_check_branch
        %172 = sbr.rel (%p169) target = $region12
      $region11: #{gqa_forward.4} parent=5 // pred_region
        %s173 = ssub.s32 %s9, 1
      $region12: #{gqa_forward.4} parent=5 // pred_fallthru
        _
      %p174 = scmp.lt.s32.totalorder %s9, 4
      // Predicated region
      $region13: #{gqa_forward.4} parent=5 // pred_check
        %p175 = pneg %p174
      $region14: #{gqa_forward.4} parent=5 // pred_check_branch
        %177 = sbr.rel (%p175) target = $region16
      $region15: #{gqa_forward.4} parent=5 // pred_region
        // Predicated region
        $region17: #{gqa_forward.4} parent=15 // pred_check
          %p178 = pneg %p59
        $region18: #{gqa_forward.4} parent=15 // pred_check_branch
          %180 = sbr.rel (%p178) target = $region20
        $region19: #{gqa_forward.4} parent=15 // pred_region
          %s181 = sand.u32 %s49, 1
          %s182 = sand.u32 %s49, 1
          %s183 = smul.addr %s182, 64
          %s184 = scalar_lea.vmem [#allocation6], %s183
          %s185 = smul.u32 8, %s18
          %s186 = smul.u32 2, %s17
          %s187 = smul.addr %s185, 8
          %s188 = sadd.s32 %s186, %s187
          %s189 = smul.addr %s16, 64
          %s190 = sadd.s32 %s188, %s189
          %s191 = smul.addr %s190, 4
          %s192 = scalar_lea.vmem %s0, %s191
          // Predicated region
          $region21: #{gqa_forward.4} parent=19 // pred_check
            _
          $region22: #{gqa_forward.4} parent=19 // pred_check_branch
            %194 = sbr.rel (0) target = $region24
          $region23: #{gqa_forward.4} parent=19 // pred_region
            // Predicated region
            $region25: #{gqa_forward.4} parent=23 // pred_check
              _
            $region26: #{gqa_forward.4} parent=23 // pred_check_branch
              %196 = sbr.rel (0) target = $region28
            $region27: #{gqa_forward.4} parent=23 // pred_region
              // Predicated region
              $region40: #{gqa_forward.4} parent=27 // pred_check
                _
              $region41: #{gqa_forward.4} parent=27 // pred_check_branch
                %225 = sbr.rel (0) target = $region43
              $region42: #{gqa_forward.4} parent=27 // pred_region
                loop: start=0, step=1, limit=1
                $region44: #{gqa_forward.4} parent=42 // loop_pre_header
                  _
                $region45: #{gqa_forward.4} parent=42 // loop_header
                  %s227 = sphi 0, %s231
                  %p228 = scmp.ge.s32.totalorder %s227, 1
                  %s232 = sphi %s192, %s192
                  %s233 = sphi %s184, %s184
                $region46: #{gqa_forward.4} parent=42 // loop_header_branch
                  %230 = sbr.rel (%p228) target = $region50
                $region47: #{gqa_forward.4} parent=42 // loop_body
                  %v234 = vld [vmem:[%s232] sm:$0xff]
                  %235 = vst [vmem:[%s233] sm:$0xff] %v234
                  %v236 = vld [vmem:[%s232 + $0x20] sm:$0xff]
                  %237 = vst [vmem:[%s233 + $0x8] sm:$0xff] %v236
                  %v238 = vld [vmem:[%s232 + $0x40] sm:$0xff]
                  %239 = vst [vmem:[%s233 + $0x10] sm:$0xff] %v238
                  %v240 = vld [vmem:[%s232 + $0x60] sm:$0xff]
                  %241 = vst [vmem:[%s233 + $0x18] sm:$0xff] %v240
                  %v242 = vld [vmem:[%s232 + $0x80] sm:$0xff]
                  %243 = vst [vmem:[%s233 + $0x20] sm:$0xff] %v242
                  %v244 = vld [vmem:[%s232 + $0xa0] sm:$0xff]
                  %245 = vst [vmem:[%s233 + $0x28] sm:$0xff] %v244
                  %v246 = vld [vmem:[%s232 + $0xc0] sm:$0xff]
                  %247 = vst [vmem:[%s233 + $0x30] sm:$0xff] %v246
                  %v248 = vld [vmem:[%s232 + $0xe0] sm:$0xff]
                  %249 = vst [vmem:[%s233 + $0x38] sm:$0xff] %v248
                $region48: #{gqa_forward.4} parent=42 // loop_footer
                  %s231 = sadd.s32 1, %s227
                $region49: #{gqa_forward.4} parent=42 // loop_footer_branch
                  %226 = sbr.rel target = $region45
                $region50: #{gqa_forward.4} parent=42 // loop_exit
                  _
              $region43: #{gqa_forward.4} parent=27 // pred_fallthru
                _
              // Predicated region
              $region51: #{gqa_forward.4} parent=27 // pred_check
                _
              $region52: #{gqa_forward.4} parent=27 // pred_check_branch
                %251 = sbr.rel target = $region54
              $region53: #{gqa_forward.4} parent=27 // pred_region
                _
              $region54: #{gqa_forward.4} parent=27 // pred_fallthru
                _
            $region28: #{gqa_forward.4} parent=23 // pred_fallthru
              _
            // Predicated region
            $region29: #{gqa_forward.4} parent=23 // pred_check
              _
            $region30: #{gqa_forward.4} parent=23 // pred_check_branch
              %198 = sbr.rel target = $region32
            $region31: #{gqa_forward.4} parent=23 // pred_region
              loop: start=0, step=1, limit=1
              $region33: #{gqa_forward.4} parent=31 // loop_pre_header
                _
              $region34: #{gqa_forward.4} parent=31 // loop_header
                %s201 = sphi 0, %s205
                %p202 = scmp.ge.s32.totalorder %s201, 1
                %s206 = sphi %s192, %s192
                %s207 = sphi %s184, %s184
              $region35: #{gqa_forward.4} parent=31 // loop_header_branch
                %204 = sbr.rel (%p202) target = $region39
              $region36: #{gqa_forward.4} parent=31 // loop_body
                %v208 = vld [vmem:[%s206] sm:$0xff]
                %209 = vst [vmem:[%s207] sm:$0xff] %v208
                %v210 = vld [vmem:[%s206 + $0x20] sm:$0xff]
                %211 = vst [vmem:[%s207 + $0x8] sm:$0xff] %v210
                %v212 = vld [vmem:[%s206 + $0x40] sm:$0xff]
                %213 = vst [vmem:[%s207 + $0x10] sm:$0xff] %v212
                %v214 = vld [vmem:[%s206 + $0x60] sm:$0xff]
                %215 = vst [vmem:[%s207 + $0x18] sm:$0xff] %v214
                %v216 = vld [vmem:[%s206 + $0x80] sm:$0xff]
                %217 = vst [vmem:[%s207 + $0x20] sm:$0xff] %v216
                %v218 = vld [vmem:[%s206 + $0xa0] sm:$0xff]
                %219 = vst [vmem:[%s207 + $0x28] sm:$0xff] %v218
                %v220 = vld [vmem:[%s206 + $0xc0] sm:$0xff]
                %221 = vst [vmem:[%s207 + $0x30] sm:$0xff] %v220
                %v222 = vld [vmem:[%s206 + $0xe0] sm:$0xff]
                %223 = vst [vmem:[%s207 + $0x38] sm:$0xff] %v222
              $region37: #{gqa_forward.4} parent=31 // loop_footer
                %s205 = sadd.s32 1, %s201
              $region38: #{gqa_forward.4} parent=31 // loop_footer_branch
                %200 = sbr.rel target = $region34
              $region39: #{gqa_forward.4} parent=31 // loop_exit
                _
            $region32: #{gqa_forward.4} parent=23 // pred_fallthru
              _
          $region24: #{gqa_forward.4} parent=19 // pred_fallthru
            _
          %252 = vnop
        $region20: #{gqa_forward.4} parent=15 // pred_fallthru
          _
        // Predicated region
        $region55: #{gqa_forward.4} parent=15 // pred_check
          %p253 = pneg %p91
        $region56: #{gqa_forward.4} parent=15 // pred_check_branch
          %255 = sbr.rel (%p253) target = $region58
        $region57: #{gqa_forward.4} parent=15 // pred_region
          %s256 = sand.u32 %s81, 1
          %s257 = sand.u32 %s81, 1
          %s258 = smul.addr %s257, 32
          %s259 = scalar_lea.vmem [#allocation7], %s258
          %s260 = sadd.s32 %s17, 4
          %s261 = smul.u32 8, %s19
          %s262 = smul.addr %s261, 8
          %s263 = sadd.s32 %s260, %s262
          %s264 = smul.addr %s16, 64
          %s265 = sadd.s32 %s263, %s264
          %s266 = smul.addr %s265, 4
          %s267 = scalar_lea.vmem %s1, %s266
          // Predicated region
          $region59: #{gqa_forward.4} parent=57 // pred_check
            _
          $region60: #{gqa_forward.4} parent=57 // pred_check_branch
            %269 = sbr.rel (0) target = $region62
          $region61: #{gqa_forward.4} parent=57 // pred_region
            // Predicated region
            $region63: #{gqa_forward.4} parent=61 // pred_check
              _
            $region64: #{gqa_forward.4} parent=61 // pred_check_branch
              %271 = sbr.rel target = $region66
            $region65: #{gqa_forward.4} parent=61 // pred_region
              // Predicated region
              $region78: #{gqa_forward.4} parent=65 // pred_check
                _
              $region79: #{gqa_forward.4} parent=65 // pred_check_branch
                %300 = sbr.rel (0) target = $region81
              $region80: #{gqa_forward.4} parent=65 // pred_region
                loop: start=0, step=1, limit=1
                $region82: #{gqa_forward.4} parent=80 // loop_pre_header
                  _
                $region83: #{gqa_forward.4} parent=80 // loop_header
                  %s302 = sphi 0, %s306
                  %p303 = scmp.ge.s32.totalorder %s302, 1
                  %s307 = sphi %s267, %s267
                  %s308 = sphi %s259, %s259
                $region84: #{gqa_forward.4} parent=80 // loop_header_branch
                  %305 = sbr.rel (%p303) target = $region88
                $region85: #{gqa_forward.4} parent=80 // loop_body
                  _
                $region86: #{gqa_forward.4} parent=80 // loop_footer
                  %s306 = sadd.s32 1, %s302
                $region87: #{gqa_forward.4} parent=80 // loop_footer_branch
                  %301 = sbr.rel target = $region83
                $region88: #{gqa_forward.4} parent=80 // loop_exit
                  _
                loop: start=0, step=1, limit=1
                $region89: #{gqa_forward.4} parent=80 // loop_pre_header
                  _
                $region90: #{gqa_forward.4} parent=80 // loop_header
                  %s311 = sphi 0, %s315
                  %p312 = scmp.ge.s32.totalorder %s311, 1
                  %s316 = sphi %s267, %s267
                  %s317 = sphi %s259, %s259
                $region91: #{gqa_forward.4} parent=80 // loop_header_branch
                  %314 = sbr.rel (%p312) target = $region95
                $region92: #{gqa_forward.4} parent=80 // loop_body
                  %v318 = vld [vmem:[%s316] sm:$0xf]
                  %319 = vst [vmem:[%s317] sm:$0xf] %v318
                  %v320 = vld [vmem:[%s316 + $0x20] sm:$0xf]
                  %321 = vst [vmem:[%s317 + $0x4] sm:$0xf] %v320
                  %v322 = vld [vmem:[%s316 + $0x40] sm:$0xf]
                  %323 = vst [vmem:[%s317 + $0x8] sm:$0xf] %v322
                  %v324 = vld [vmem:[%s316 + $0x60] sm:$0xf]
                  %325 = vst [vmem:[%s317 + $0xc] sm:$0xf] %v324
                  %v326 = vld [vmem:[%s316 + $0x80] sm:$0xf]
                  %327 = vst [vmem:[%s317 + $0x10] sm:$0xf] %v326
                  %v328 = vld [vmem:[%s316 + $0xa0] sm:$0xf]
                  %329 = vst [vmem:[%s317 + $0x14] sm:$0xf] %v328
                  %v330 = vld [vmem:[%s316 + $0xc0] sm:$0xf]
                  %331 = vst [vmem:[%s317 + $0x18] sm:$0xf] %v330
                  %v332 = vld [vmem:[%s316 + $0xe0] sm:$0xf]
                  %333 = vst [vmem:[%s317 + $0x1c] sm:$0xf] %v332
                $region93: #{gqa_forward.4} parent=80 // loop_footer
                  %s315 = sadd.s32 1, %s311
                $region94: #{gqa_forward.4} parent=80 // loop_footer_branch
                  %310 = sbr.rel target = $region90
                $region95: #{gqa_forward.4} parent=80 // loop_exit
                  _
              $region81: #{gqa_forward.4} parent=65 // pred_fallthru
                _
            $region66: #{gqa_forward.4} parent=61 // pred_fallthru
              _
            // Predicated region
            $region67: #{gqa_forward.4} parent=61 // pred_check
              _
            $region68: #{gqa_forward.4} parent=61 // pred_check_branch
              %273 = sbr.rel (0) target = $region70
            $region69: #{gqa_forward.4} parent=61 // pred_region
              loop: start=0, step=1, limit=1
              $region71: #{gqa_forward.4} parent=69 // loop_pre_header
                _
              $region72: #{gqa_forward.4} parent=69 // loop_header
                %s276 = sphi 0, %s280
                %p277 = scmp.ge.s32.totalorder %s276, 1
                %s281 = sphi %s267, %s267
                %s282 = sphi %s259, %s259
              $region73: #{gqa_forward.4} parent=69 // loop_header_branch
                %279 = sbr.rel (%p277) target = $region77
              $region74: #{gqa_forward.4} parent=69 // loop_body
                %v283 = vld [vmem:[%s281] sm:$0xf]
                %284 = vst [vmem:[%s282] sm:$0xf] %v283
                %v285 = vld [vmem:[%s281 + $0x20] sm:$0xf]
                %286 = vst [vmem:[%s282 + $0x4] sm:$0xf] %v285
                %v287 = vld [vmem:[%s281 + $0x40] sm:$0xf]
                %288 = vst [vmem:[%s282 + $0x8] sm:$0xf] %v287
                %v289 = vld [vmem:[%s281 + $0x60] sm:$0xf]
                %290 = vst [vmem:[%s282 + $0xc] sm:$0xf] %v289
                %v291 = vld [vmem:[%s281 + $0x80] sm:$0xf]
                %292 = vst [vmem:[%s282 + $0x10] sm:$0xf] %v291
                %v293 = vld [vmem:[%s281 + $0xa0] sm:$0xf]
                %294 = vst [vmem:[%s282 + $0x14] sm:$0xf] %v293
                %v295 = vld [vmem:[%s281 + $0xc0] sm:$0xf]
                %296 = vst [vmem:[%s282 + $0x18] sm:$0xf] %v295
                %v297 = vld [vmem:[%s281 + $0xe0] sm:$0xf]
                %298 = vst [vmem:[%s282 + $0x1c] sm:$0xf] %v297
              $region75: #{gqa_forward.4} parent=69 // loop_footer
                %s280 = sadd.s32 1, %s276
              $region76: #{gqa_forward.4} parent=69 // loop_footer_branch
                %275 = sbr.rel target = $region72
              $region77: #{gqa_forward.4} parent=69 // loop_exit
                _
            $region70: #{gqa_forward.4} parent=61 // pred_fallthru
              _
          $region62: #{gqa_forward.4} parent=57 // pred_fallthru
            _
          %334 = vnop
        $region58: #{gqa_forward.4} parent=15 // pred_fallthru
          _
        // Predicated region
        $region96: #{gqa_forward.4} parent=15 // pred_check
          %p335 = pneg %p123
        $region97: #{gqa_forward.4} parent=15 // pred_check_branch
          %337 = sbr.rel (%p335) target = $region99
        $region98: #{gqa_forward.4} parent=15 // pred_region
          %s338 = sand.u32 %s113, 1
          %s339 = sand.u32 %s113, 1
          %s340 = smul.addr %s339, 32
          %s341 = scalar_lea.vmem [#allocation8], %s340
          %s342 = sadd.s32 %s17, 6
          %s343 = smul.u32 8, %s19
          %s344 = smul.addr %s343, 8
          %s345 = sadd.s32 %s342, %s344
          %s346 = smul.addr %s16, 64
          %s347 = sadd.s32 %s345, %s346
          %s348 = smul.addr %s347, 4
          %s349 = scalar_lea.vmem %s2, %s348
          // Predicated region
          $region100: #{gqa_forward.4} parent=98 // pred_check
            _
          $region101: #{gqa_forward.4} parent=98 // pred_check_branch
            %351 = sbr.rel (0) target = $region103
          $region102: #{gqa_forward.4} parent=98 // pred_region
            // Predicated region
            $region104: #{gqa_forward.4} parent=102 // pred_check
              _
            $region105: #{gqa_forward.4} parent=102 // pred_check_branch
              %353 = sbr.rel target = $region107
            $region106: #{gqa_forward.4} parent=102 // pred_region
              // Predicated region
              $region119: #{gqa_forward.4} parent=106 // pred_check
                _
              $region120: #{gqa_forward.4} parent=106 // pred_check_branch
                %382 = sbr.rel (0) target = $region122
              $region121: #{gqa_forward.4} parent=106 // pred_region
                loop: start=0, step=1, limit=1
                $region123: #{gqa_forward.4} parent=121 // loop_pre_header
                  _
                $region124: #{gqa_forward.4} parent=121 // loop_header
                  %s384 = sphi 0, %s388
                  %p385 = scmp.ge.s32.totalorder %s384, 1
                  %s389 = sphi %s349, %s349
                  %s390 = sphi %s341, %s341
                $region125: #{gqa_forward.4} parent=121 // loop_header_branch
                  %387 = sbr.rel (%p385) target = $region129
                $region126: #{gqa_forward.4} parent=121 // loop_body
                  _
                $region127: #{gqa_forward.4} parent=121 // loop_footer
                  %s388 = sadd.s32 1, %s384
                $region128: #{gqa_forward.4} parent=121 // loop_footer_branch
                  %383 = sbr.rel target = $region124
                $region129: #{gqa_forward.4} parent=121 // loop_exit
                  _
                loop: start=0, step=1, limit=1
                $region130: #{gqa_forward.4} parent=121 // loop_pre_header
                  _
                $region131: #{gqa_forward.4} parent=121 // loop_header
                  %s393 = sphi 0, %s397
                  %p394 = scmp.ge.s32.totalorder %s393, 1
                  %s398 = sphi %s349, %s349
                  %s399 = sphi %s341, %s341
                $region132: #{gqa_forward.4} parent=121 // loop_header_branch
                  %396 = sbr.rel (%p394) target = $region136
                $region133: #{gqa_forward.4} parent=121 // loop_body
                  %v400 = vld [vmem:[%s398] sm:$0xf]
                  %401 = vst [vmem:[%s399] sm:$0xf] %v400
                  %v402 = vld [vmem:[%s398 + $0x20] sm:$0xf]
                  %403 = vst [vmem:[%s399 + $0x4] sm:$0xf] %v402
                  %v404 = vld [vmem:[%s398 + $0x40] sm:$0xf]
                  %405 = vst [vmem:[%s399 + $0x8] sm:$0xf] %v404
                  %v406 = vld [vmem:[%s398 + $0x60] sm:$0xf]
                  %407 = vst [vmem:[%s399 + $0xc] sm:$0xf] %v406
                  %v408 = vld [vmem:[%s398 + $0x80] sm:$0xf]
                  %409 = vst [vmem:[%s399 + $0x10] sm:$0xf] %v408
                  %v410 = vld [vmem:[%s398 + $0xa0] sm:$0xf]
                  %411 = vst [vmem:[%s399 + $0x14] sm:$0xf] %v410
                  %v412 = vld [vmem:[%s398 + $0xc0] sm:$0xf]
                  %413 = vst [vmem:[%s399 + $0x18] sm:$0xf] %v412
                  %v414 = vld [vmem:[%s398 + $0xe0] sm:$0xf]
                  %415 = vst [vmem:[%s399 + $0x1c] sm:$0xf] %v414
                $region134: #{gqa_forward.4} parent=121 // loop_footer
                  %s397 = sadd.s32 1, %s393
                $region135: #{gqa_forward.4} parent=121 // loop_footer_branch
                  %392 = sbr.rel target = $region131
                $region136: #{gqa_forward.4} parent=121 // loop_exit
                  _
              $region122: #{gqa_forward.4} parent=106 // pred_fallthru
                _
            $region107: #{gqa_forward.4} parent=102 // pred_fallthru
              _
            // Predicated region
            $region108: #{gqa_forward.4} parent=102 // pred_check
              _
            $region109: #{gqa_forward.4} parent=102 // pred_check_branch
              %355 = sbr.rel (0) target = $region111
            $region110: #{gqa_forward.4} parent=102 // pred_region
              loop: start=0, step=1, limit=1
              $region112: #{gqa_forward.4} parent=110 // loop_pre_header
                _
              $region113: #{gqa_forward.4} parent=110 // loop_header
                %s358 = sphi 0, %s362
                %p359 = scmp.ge.s32.totalorder %s358, 1
                %s363 = sphi %s349, %s349
                %s364 = sphi %s341, %s341
              $region114: #{gqa_forward.4} parent=110 // loop_header_branch
                %361 = sbr.rel (%p359) target = $region118
              $region115: #{gqa_forward.4} parent=110 // loop_body
                %v365 = vld [vmem:[%s363] sm:$0xf]
                %366 = vst [vmem:[%s364] sm:$0xf] %v365
                %v367 = vld [vmem:[%s363 + $0x20] sm:$0xf]
                %368 = vst [vmem:[%s364 + $0x4] sm:$0xf] %v367
                %v369 = vld [vmem:[%s363 + $0x40] sm:$0xf]
                %370 = vst [vmem:[%s364 + $0x8] sm:$0xf] %v369
                %v371 = vld [vmem:[%s363 + $0x60] sm:$0xf]
                %372 = vst [vmem:[%s364 + $0xc] sm:$0xf] %v371
                %v373 = vld [vmem:[%s363 + $0x80] sm:$0xf]
                %374 = vst [vmem:[%s364 + $0x10] sm:$0xf] %v373
                %v375 = vld [vmem:[%s363 + $0xa0] sm:$0xf]
                %376 = vst [vmem:[%s364 + $0x14] sm:$0xf] %v375
                %v377 = vld [vmem:[%s363 + $0xc0] sm:$0xf]
                %378 = vst [vmem:[%s364 + $0x18] sm:$0xf] %v377
                %v379 = vld [vmem:[%s363 + $0xe0] sm:$0xf]
                %380 = vst [vmem:[%s364 + $0x1c] sm:$0xf] %v379
              $region116: #{gqa_forward.4} parent=110 // loop_footer
                %s362 = sadd.s32 1, %s358
              $region117: #{gqa_forward.4} parent=110 // loop_footer_branch
                %357 = sbr.rel target = $region113
              $region118: #{gqa_forward.4} parent=110 // loop_exit
                _
            $region111: #{gqa_forward.4} parent=102 // pred_fallthru
              _
          $region103: #{gqa_forward.4} parent=98 // pred_fallthru
            _
          %416 = vnop
        $region99: #{gqa_forward.4} parent=15 // pred_fallthru
          _
      $region16: #{gqa_forward.4} parent=5 // pred_fallthru
        _
      %p417 = scmp.le.s32.totalorder 1, %s9
      %p418 = scmp.lt.s32.totalorder %s9, 5
      %p419 = pnand %p417, %p418
      %p420 = pneg %p419
      // Predicated region
      $region137: #{gqa_forward.4} parent=5 // pred_check
        _
      $region138: #{gqa_forward.4} parent=5 // pred_check_branch
        %422 = sbr.rel (%p419) target = $region140
      $region139: #{gqa_forward.4} parent=5 // pred_region
        %s423 = ssub.s32 %s9, 1
        %s424 = sand.u32 %s52, 1
        %s425 = sand.u32 %s52, 1
        %s426 = smul.addr %s425, 64
        %s427 = scalar_lea.vmem [#allocation6], %s426
        // Predicated region
        $region141: #{gqa_forward.4} parent=139 // pred_check
          %p428 = pneg %p65
        $region142: #{gqa_forward.4} parent=139 // pred_check_branch
          %430 = sbr.rel (%p428) target = $region144
        $region143: #{gqa_forward.4} parent=139 // pred_region
          _
        $region144: #{gqa_forward.4} parent=139 // pred_fallthru
          _
        %s431 = sand.u32 %s84, 1
        %s432 = sand.u32 %s84, 1
        %s433 = smul.addr %s432, 32
        %s434 = scalar_lea.vmem [#allocation7], %s433
        // Predicated region
        $region145: #{gqa_forward.4} parent=139 // pred_check
          %p435 = pneg %p97
        $region146: #{gqa_forward.4} parent=139 // pred_check_branch
          %437 = sbr.rel (%p435) target = $region148
        $region147: #{gqa_forward.4} parent=139 // pred_region
          _
        $region148: #{gqa_forward.4} parent=139 // pred_fallthru
          _
        %s438 = sand.u32 %s116, 1
        %s439 = sand.u32 %s116, 1
        %s440 = smul.addr %s439, 32
        %s441 = scalar_lea.vmem [#allocation8], %s440
        // Predicated region
        $region149: #{gqa_forward.4} parent=139 // pred_check
          %p442 = pneg %p129
        $region150: #{gqa_forward.4} parent=139 // pred_check_branch
          %444 = sbr.rel (%p442) target = $region152
        $region151: #{gqa_forward.4} parent=139 // pred_region
          _
        $region152: #{gqa_forward.4} parent=139 // pred_fallthru
          _
        %s445 = sand.u32 %s52, 1
        %s446 = sand.u32 %s52, 1
        %s447 = smul.addr %s446, 64
        %s448 = scalar_lea.vmem [#allocation6], %s447
        %p449 = pneg %p65
        %p450 = pneg %p62
        %s451 = sand.u32 %s84, 1
        %s452 = sand.u32 %s84, 1
        %s453 = smul.addr %s452, 32
        %s454 = scalar_lea.vmem [#allocation7], %s453
        %p455 = pneg %p97
        %p456 = pneg %p94
        %s457 = sand.u32 %s116, 1
        %s458 = sand.u32 %s116, 1
        %s459 = smul.addr %s458, 32
        %s460 = scalar_lea.vmem [#allocation8], %s459
        %p461 = pneg %p129
        %p462 = pneg %p126
        %p463 = pneg %p159
        %p464 = pneg %p156
        %s465 = sand.u32 %s146, 1
        %s466 = sand.u32 %s146, 1
        %s467 = smul.addr %s466, 64
        %s468 = scalar_lea.vmem [#allocation9], %s467
        %s469 = smul.u32 8, %s22
        %s470 = smul.u32 2, %s21
        %s471 = sadd.s32 %s21, 4
        %s472 = smul.u32 8, %s23
        %s473 = sadd.s32 %s21, 6
        %s474 = smul.u32 8, %s23
        %s475 = smul.u32 8, %s22
        %s476 = smul.u32 2, %s21
        %p478 = scmp.eq.s32.totalorder %s23, 0
        // Predicated region
        $region153: #{gqa_forward.4} parent=139 // pred_check
          %p479 = pneg %p478
        $region154: #{gqa_forward.4} parent=139 // pred_check_branch
          %481 = sbr.rel (%p479) target = $region156
        $region155: #{gqa_forward.4} parent=139 // pred_region
          %v482 = vld [vmem:[%s427] sm:$0xff]
          %v483 = vld [vmem:[%s427 + $0x8] sm:$0xff]
          %v484 = vld [vmem:[%s427 + $0x10] sm:$0xff]
          %v485 = vld [vmem:[%s427 + $0x18] sm:$0xff]
          %v486 = vld [vmem:[%s427 + $0x20] sm:$0xff]
          %v487 = vld [vmem:[%s427 + $0x28] sm:$0xff]
          %v488 = vld [vmem:[%s427 + $0x30] sm:$0xff]
          %v489 = vld [vmem:[%s427 + $0x38] sm:$0xff]
          %v498 = vunpack.c.l.b16 %v482
          %v499 = vunpack.c.l.b16 %v483
          %v500 = vunpack.c.l.b16 %v484
          %v501 = vunpack.c.l.b16 %v485
          %v502 = vunpack.c.l.b16 %v486
          %v503 = vunpack.c.l.b16 %v487
          %v504 = vunpack.c.l.b16 %v488
          %v505 = vunpack.c.l.b16 %v489
          %v506 = vpack.c.b16 %v499, %v498
          %v507 = vpack.c.b16 %v501, %v500
          %v508 = vpack.c.b16 %v503, %v502
          %v509 = vpack.c.b16 %v505, %v504
          %514 = vst [vmem:[#allocation2] sm:$0xff] %v506
          %515 = vst [vmem:[#allocation2 + $0x8] sm:$0xff] %v507
          %516 = vst [vmem:[#allocation2 + $0x10] sm:$0xff] %v508
          %517 = vst [vmem:[#allocation2 + $0x18] sm:$0xff] %v509
          %v518 = vunpack.c.h.b16 %v482
          %v519 = vunpack.c.h.b16 %v483
          %v520 = vunpack.c.h.b16 %v484
          %v521 = vunpack.c.h.b16 %v485
          %v522 = vunpack.c.h.b16 %v486
          %v523 = vunpack.c.h.b16 %v487
          %v524 = vunpack.c.h.b16 %v488
          %v525 = vunpack.c.h.b16 %v489
          %v526 = vpack.c.b16 %v519, %v518
          %v527 = vpack.c.b16 %v521, %v520
          %v528 = vpack.c.b16 %v523, %v522
          %v529 = vpack.c.b16 %v525, %v524
          %534 = vst [vmem:[#allocation2 + $0x20] sm:$0xff] %v526
          %535 = vst [vmem:[#allocation2 + $0x28] sm:$0xff] %v527
          %536 = vst [vmem:[#allocation2 + $0x30] sm:$0xff] %v528
          %537 = vst [vmem:[#allocation2 + $0x38] sm:$0xff] %v529
          %vm538 = vcmask 7168
          %539 = vst.msk [vmem:[#allocation3] sm:$0xff] %vm538, -inf
          %540 = vst.msk [vmem:[#allocation3 + $0x8] sm:$0xff] %vm538, -inf
          %541 = vst.msk [vmem:[#allocation3 + $0x10] sm:$0xff] %vm538, -inf
          %542 = vst.msk [vmem:[#allocation3 + $0x18] sm:$0xff] %vm538, -inf
          %543 = vst.msk [vmem:[#allocation3 + $0x20] sm:$0xff] %vm538, -inf
          %544 = vst.msk [vmem:[#allocation3 + $0x28] sm:$0xff] %vm538, -inf
          %545 = vst.msk [vmem:[#allocation3 + $0x30] sm:$0xff] %vm538, -inf
          %546 = vst.msk [vmem:[#allocation3 + $0x38] sm:$0xff] %vm538, -inf
          %547 = vst.msk [vmem:[#allocation3 + $0x40] sm:$0xff] %vm538, -inf
          %548 = vst.msk [vmem:[#allocation3 + $0x48] sm:$0xff] %vm538, -inf
          %549 = vst.msk [vmem:[#allocation3 + $0x50] sm:$0xff] %vm538, -inf
          %550 = vst.msk [vmem:[#allocation3 + $0x58] sm:$0xff] %vm538, -inf
          %551 = vst.msk [vmem:[#allocation3 + $0x60] sm:$0xff] %vm538, -inf
          %552 = vst.msk [vmem:[#allocation3 + $0x68] sm:$0xff] %vm538, -inf
          %553 = vst.msk [vmem:[#allocation3 + $0x70] sm:$0xff] %vm538, -inf
          %554 = vst.msk [vmem:[#allocation3 + $0x78] sm:$0xff] %vm538, -inf
          %555 = vst.msk [vmem:[#allocation4] sm:$0xff] %vm538, 0.0
          %556 = vst.msk [vmem:[#allocation4 + $0x8] sm:$0xff] %vm538, 0.0
          %557 = vst.msk [vmem:[#allocation4 + $0x10] sm:$0xff] %vm538, 0.0
          %558 = vst.msk [vmem:[#allocation4 + $0x18] sm:$0xff] %vm538, 0.0
          %559 = vst.msk [vmem:[#allocation4 + $0x20] sm:$0xff] %vm538, 0.0
          %560 = vst.msk [vmem:[#allocation4 + $0x28] sm:$0xff] %vm538, 0.0
          %561 = vst.msk [vmem:[#allocation4 + $0x30] sm:$0xff] %vm538, 0.0
          %562 = vst.msk [vmem:[#allocation4 + $0x38] sm:$0xff] %vm538, 0.0
          %563 = vst.msk [vmem:[#allocation4 + $0x40] sm:$0xff] %vm538, 0.0
          %564 = vst.msk [vmem:[#allocation4 + $0x48] sm:$0xff] %vm538, 0.0
          %565 = vst.msk [vmem:[#allocation4 + $0x50] sm:$0xff] %vm538, 0.0
          %566 = vst.msk [vmem:[#allocation4 + $0x58] sm:$0xff] %vm538, 0.0
          %567 = vst.msk [vmem:[#allocation4 + $0x60] sm:$0xff] %vm538, 0.0
          %568 = vst.msk [vmem:[#allocation4 + $0x68] sm:$0xff] %vm538, 0.0
          %569 = vst.msk [vmem:[#allocation4 + $0x70] sm:$0xff] %vm538, 0.0
          %570 = vst.msk [vmem:[#allocation4 + $0x78] sm:$0xff] %vm538, 0.0
          %571 = vst [vmem:[#allocation5] sm:$0xff] 0.0
          %572 = vst [vmem:[#allocation5 + $0x8] sm:$0xff] 0.0
          %573 = vst [vmem:[#allocation5 + $0x10] sm:$0xff] 0.0
          %574 = vst [vmem:[#allocation5 + $0x18] sm:$0xff] 0.0
          %575 = vst [vmem:[#allocation5 + $0x20] sm:$0xff] 0.0
          %576 = vst [vmem:[#allocation5 + $0x28] sm:$0xff] 0.0
          %577 = vst [vmem:[#allocation5 + $0x30] sm:$0xff] 0.0
          %578 = vst [vmem:[#allocation5 + $0x38] sm:$0xff] 0.0
          %579 = vst [vmem:[#allocation5 + $0x40] sm:$0xff] 0.0
          %580 = vst [vmem:[#allocation5 + $0x48] sm:$0xff] 0.0
          %581 = vst [vmem:[#allocation5 + $0x50] sm:$0xff] 0.0
          %582 = vst [vmem:[#allocation5 + $0x58] sm:$0xff] 0.0
          %583 = vst [vmem:[#allocation5 + $0x60] sm:$0xff] 0.0
          %584 = vst [vmem:[#allocation5 + $0x68] sm:$0xff] 0.0
          %585 = vst [vmem:[#allocation5 + $0x70] sm:$0xff] 0.0
          %586 = vst [vmem:[#allocation5 + $0x78] sm:$0xff] 0.0
        $region156: #{gqa_forward.4} parent=139 // pred_fallthru
          _
        %v587 = vld [vmem:[%s434] sm:$0xf]
        %v588 = vld [vmem:[%s434 + $0x4] sm:$0xf]
        %v589 = vld [vmem:[%s434 + $0x8] sm:$0xf]
        %v590 = vld [vmem:[%s434 + $0xc] sm:$0xf]
        %v591 = vld [vmem:[%s434 + $0x10] sm:$0xf]
        %v592 = vld [vmem:[%s434 + $0x14] sm:$0xf]
        %v593 = vld [vmem:[%s434 + $0x18] sm:$0xf]
        %v594 = vld [vmem:[%s434 + $0x1c] sm:$0xf]
        %v595 = vld [vmem:[%s441] sm:$0xf]
        %v596 = vld [vmem:[%s441 + $0x4] sm:$0xf]
        %v597 = vld [vmem:[%s441 + $0x8] sm:$0xf]
        %v598 = vld [vmem:[%s441 + $0xc] sm:$0xf]
        %v599 = vld [vmem:[%s441 + $0x10] sm:$0xf]
        %v600 = vld [vmem:[%s441 + $0x14] sm:$0xf]
        %v601 = vld [vmem:[%s441 + $0x18] sm:$0xf]
        %v602 = vld [vmem:[%s441 + $0x1c] sm:$0xf]
        %v603 = vld [vmem:[#allocation2] sm:$0xff]
        %v604 = vld [vmem:[#allocation2 + $0x8] sm:$0xff]
        %v605 = vld [vmem:[#allocation2 + $0x10] sm:$0xff]
        %v606 = vld [vmem:[#allocation2 + $0x18] sm:$0xff]
        %v607 = vld [vmem:[#allocation2 + $0x20] sm:$0xff]
        %v608 = vld [vmem:[#allocation2 + $0x28] sm:$0xff]
        %v609 = vld [vmem:[#allocation2 + $0x30] sm:$0xff]
        %v610 = vld [vmem:[#allocation2 + $0x38] sm:$0xff]
        %v619 = vunpack.c.l.b16 %v587
        %v620 = vunpack.c.l.b16 %v588
        %v621 = vunpack.c.l.b16 %v589
        %v622 = vunpack.c.l.b16 %v590
        %v623 = vunpack.c.l.b16 %v591
        %v624 = vunpack.c.l.b16 %v592
        %v625 = vunpack.c.l.b16 %v593
        %v626 = vunpack.c.l.b16 %v594
        %v627 = vpack.c.b16 %v620, %v619
        %v628 = vpack.c.b16 %v622, %v621
        %v629 = vpack.c.b16 %v624, %v623
        %v630 = vpack.c.b16 %v626, %v625
        %635 = vmatprep.subr.bf16.mxu0 0
        %636 = vmatpush1.bf16.xpose.msra.mxu0 %v627
        %637 = vmatprep.subr.bf16.mxu0 0
        %638 = vmatpush1.bf16.xpose.msra.mxu0 %v628
        %639 = vmatprep.subr.bf16.mxu0 0
        %640 = vmatpush1.bf16.xpose.msra.mxu0 %v629
        %641 = vmatprep.subr.bf16.mxu0 0
        %642 = vmatpush1.bf16.xpose.msra.mxu0 %v630
        %643 = vmatprep.subr.bf16.mxu0 0
        %644 = vmatpush1.bf16.xpose.msra.mxu0 0
        %645 = vmatprep.subr.bf16.mxu0 0
        %646 = vmatpush1.bf16.xpose.msra.mxu0 0
        %647 = vmatprep.subr.bf16.mxu0 0
        %648 = vmatpush1.bf16.xpose.msra.mxu0 0
        %649 = vmatprep.subr.bf16.mxu0 0
        %650 = vmatpush1.bf16.xpose.msra.mxu0 0
        %651 = vmatprep.subr.bf16.mxu0 0
        %652 = vmatpush1.bf16.xpose.msra.mxu0 0
        %653 = vmatprep.subr.bf16.mxu0 0
        %654 = vmatpush1.bf16.xpose.msra.mxu0 0
        %655 = vmatprep.subr.bf16.mxu0 0
        %656 = vmatpush1.bf16.xpose.msra.mxu0 0
        %657 = vmatprep.subr.bf16.mxu0 0
        %658 = vmatpush1.bf16.xpose.msra.mxu0 0
        %659 = vmatprep.subr.bf16.mxu0 0
        %660 = vmatpush1.bf16.xpose.msra.mxu0 0
        %661 = vmatprep.subr.bf16.mxu0 0
        %662 = vmatpush1.bf16.xpose.msra.mxu0 0
        %663 = vmatprep.subr.bf16.mxu0 0
        %664 = vmatpush1.bf16.xpose.msra.mxu0 0
        %665 = vmatprep.subr.bf16.mxu0 0
        %666 = vmatpush1.bf16.xpose.msra.mxu0 0
        %667 = vmatprep.mubr.bf16.mxu0 0
        %668 = vmatmul.mubr.bf16.gmra.mrb[0].mxu0 %v603
        %v669 = vpop.f32.mrb[0].mxu0
        %v670 = vadd.f32 0.0, %v669
        %v671 = vpop.f32.mrb[0].mxu0
        %v672 = vpop.f32.mrb[0].mxu0
        %v673 = vadd.f32 0.0, %v672
        %v674 = vpop.f32.mrb[0].mxu0
        %675 = vmatprep.mubr.bf16.mxu0 0
        %676 = vmatmul.mubr.bf16.gmra.mrb[0].mxu0 %v604
        %v677 = vpop.f32.mrb[0].mxu0
        %v678 = vadd.f32 0.0, %v677
        %v679 = vpop.f32.mrb[0].mxu0
        %v680 = vpop.f32.mrb[0].mxu0
        %v681 = vadd.f32 0.0, %v680
        %v682 = vpop.f32.mrb[0].mxu0
        %683 = vmatprep.mubr.bf16.mxu0 0
        %684 = vmatmul.mubr.bf16.gmra.mrb[0].mxu0 %v605
        %v685 = vpop.f32.mrb[0].mxu0
        %v686 = vadd.f32 0.0, %v685
        %v687 = vpop.f32.mrb[0].mxu0
        %v688 = vpop.f32.mrb[0].mxu0
        %v689 = vadd.f32 0.0, %v688
        %v690 = vpop.f32.mrb[0].mxu0
        %691 = vmatprep.mubr.bf16.mxu0 0
        %692 = vmatmul.mubr.bf16.gmra.mrb[0].mxu0 %v606
        %v693 = vpop.f32.mrb[0].mxu0
        %v694 = vadd.f32 0.0, %v693
        %v695 = vpop.f32.mrb[0].mxu0
        %v696 = vpop.f32.mrb[0].mxu0
        %v697 = vadd.f32 0.0, %v696
        %v698 = vpop.f32.mrb[0].mxu0
        %699 = vmatprep.mubr.bf16.mxu0 0
        %700 = vmatmul.mubr.bf16.gmra.mrb[0].mxu0 %v607
        %v701 = vpop.f32.mrb[0].mxu0
        %v702 = vadd.f32 0.0, %v701
        %v703 = vpop.f32.mrb[0].mxu0
        %v704 = vpop.f32.mrb[0].mxu0
        %v705 = vadd.f32 0.0, %v704
        %v706 = vpop.f32.mrb[0].mxu0
        %707 = vmatprep.mubr.bf16.mxu0 0
        %708 = vmatmul.mubr.bf16.gmra.mrb[0].mxu0 %v608
        %v709 = vpop.f32.mrb[0].mxu0
        %v710 = vadd.f32 0.0, %v709
        %v711 = vpop.f32.mrb[0].mxu0
        %v712 = vpop.f32.mrb[0].mxu0
        %v713 = vadd.f32 0.0, %v712
        %v714 = vpop.f32.mrb[0].mxu0
        %715 = vmatprep.mubr.bf16.mxu0 0
        %716 = vmatmul.mubr.bf16.gmra.mrb[0].mxu0 %v609
        %v717 = vpop.f32.mrb[0].mxu0
        %v718 = vadd.f32 0.0, %v717
        %v719 = vpop.f32.mrb[0].mxu0
        %v720 = vpop.f32.mrb[0].mxu0
        %v721 = vadd.f32 0.0, %v720
        %v722 = vpop.f32.mrb[0].mxu0
        %723 = vmatprep.mubr.bf16.mxu0 0
        %724 = vmatmul.mubr.bf16.gmra.mrb[0].mxu0 %v610
        %v725 = vpop.f32.mrb[0].mxu0
        %v726 = vadd.f32 0.0, %v725
        %v727 = vpop.f32.mrb[0].mxu0
        %v728 = vpop.f32.mrb[0].mxu0
        %v729 = vadd.f32 0.0, %v728
        %v730 = vpop.f32.mrb[0].mxu0
        %731 = vdwg.mxu0
        %v732 = vld [vmem:[#allocation3] sm:$0xff]
        %v733 = vld [vmem:[#allocation3 + $0x8] sm:$0xff]
        %v734 = vld [vmem:[#allocation3 + $0x10] sm:$0xff]
        %v735 = vld [vmem:[#allocation3 + $0x18] sm:$0xff]
        %v736 = vld [vmem:[#allocation3 + $0x20] sm:$0xff]
        %v737 = vld [vmem:[#allocation3 + $0x28] sm:$0xff]
        %v738 = vld [vmem:[#allocation3 + $0x30] sm:$0xff]
        %v739 = vld [vmem:[#allocation3 + $0x38] sm:$0xff]
        %v740 = vld [vmem:[#allocation3 + $0x40] sm:$0xff]
        %v741 = vld [vmem:[#allocation3 + $0x48] sm:$0xff]
        %v742 = vld [vmem:[#allocation3 + $0x50] sm:$0xff]
        %v743 = vld [vmem:[#allocation3 + $0x58] sm:$0xff]
        %v744 = vld [vmem:[#allocation3 + $0x60] sm:$0xff]
        %v745 = vld [vmem:[#allocation3 + $0x68] sm:$0xff]
        %v746 = vld [vmem:[#allocation3 + $0x70] sm:$0xff]
        %v747 = vld [vmem:[#allocation3 + $0x78] sm:$0xff]
        %vm748 = vcmask 523264
        %v749 = vsel %vm748, %v670, -inf
        %750 = vmax.xlane.f32.xlu0 %v749
        %v751 = vpop.xlane.xlu0 %750
        %v752 = vsel %vm748, %v673, -inf
        %753 = vmax.xlane.f32.xlu0 %v752
        %v754 = vpop.xlane.xlu0 %753
        %v755 = vsel %vm748, %v678, -inf
        %756 = vmax.xlane.f32.xlu0 %v755
        %v757 = vpop.xlane.xlu0 %756
        %v758 = vsel %vm748, %v681, -inf
        %759 = vmax.xlane.f32.xlu0 %v758
        %v760 = vpop.xlane.xlu0 %759
        %v761 = vsel %vm748, %v686, -inf
        %762 = vmax.xlane.f32.xlu0 %v761
        %v763 = vpop.xlane.xlu0 %762
        %v764 = vsel %vm748, %v689, -inf
        %765 = vmax.xlane.f32.xlu0 %v764
        %v766 = vpop.xlane.xlu0 %765
        %v767 = vsel %vm748, %v694, -inf
        %768 = vmax.xlane.f32.xlu0 %v767
        %v769 = vpop.xlane.xlu0 %768
        %v770 = vsel %vm748, %v697, -inf
        %771 = vmax.xlane.f32.xlu0 %v770
        %v772 = vpop.xlane.xlu0 %771
        %v773 = vsel %vm748, %v702, -inf
        %774 = vmax.xlane.f32.xlu0 %v773
        %v775 = vpop.xlane.xlu0 %774
        %v776 = vsel %vm748, %v705, -inf
        %777 = vmax.xlane.f32.xlu0 %v776
        %v778 = vpop.xlane.xlu0 %777
        %v779 = vsel %vm748, %v710, -inf
        %780 = vmax.xlane.f32.xlu0 %v779
        %v781 = vpop.xlane.xlu0 %780
        %v782 = vsel %vm748, %v713, -inf
        %783 = vmax.xlane.f32.xlu0 %v782
        %v784 = vpop.xlane.xlu0 %783
        %v785 = vsel %vm748, %v718, -inf
        %786 = vmax.xlane.f32.xlu0 %v785
        %v787 = vpop.xlane.xlu0 %786
        %v788 = vsel %vm748, %v721, -inf
        %789 = vmax.xlane.f32.xlu0 %v788
        %v790 = vpop.xlane.xlu0 %789
        %v791 = vsel %vm748, %v726, -inf
        %792 = vmax.xlane.f32.xlu0 %v791
        %v793 = vpop.xlane.xlu0 %792
        %v794 = vsel %vm748, %v729, -inf
        %795 = vmax.xlane.f32.xlu0 %v794
        %v796 = vpop.xlane.xlu0 %795
        %v797 = vmax.f32 %v732, %v751
        %v798 = vmax.f32 %v733, %v754
        %v799 = vmax.f32 %v734, %v757
        %v800 = vmax.f32 %v735, %v760
        %v801 = vmax.f32 %v736, %v763
        %v802 = vmax.f32 %v737, %v766
        %v803 = vmax.f32 %v738, %v769
        %v804 = vmax.f32 %v739, %v772
        %v805 = vmax.f32 %v740, %v775
        %v806 = vmax.f32 %v741, %v778
        %v807 = vmax.f32 %v742, %v781
        %v808 = vmax.f32 %v743, %v784
        %v809 = vmax.f32 %v744, %v787
        %v810 = vmax.f32 %v745, %v790
        %v811 = vmax.f32 %v746, %v793
        %v812 = vmax.f32 %v747, %v796
        %v813 = vsub.f32 %v732, %v797
        %v814 = vsub.f32 %v733, %v798
        %v815 = vsub.f32 %v734, %v799
        %v816 = vsub.f32 %v735, %v800
        %v817 = vsub.f32 %v736, %v801
        %v818 = vsub.f32 %v737, %v802
        %v819 = vsub.f32 %v738, %v803
        %v820 = vsub.f32 %v739, %v804
        %v821 = vsub.f32 %v740, %v805
        %v822 = vsub.f32 %v741, %v806
        %v823 = vsub.f32 %v742, %v807
        %v824 = vsub.f32 %v743, %v808
        %v825 = vsub.f32 %v744, %v809
        %v826 = vsub.f32 %v745, %v810
        %v827 = vsub.f32 %v746, %v811
        %v828 = vsub.f32 %v747, %v812
        %v829 = vmul.f32 %v813, 1.442695
        %v830 = vpow.pop %v829
        %v831 = vmul.f32 %v814, 1.442695
        %v832 = vpow.pop %v831
        %v833 = vmul.f32 %v815, 1.442695
        %v834 = vpow.pop %v833
        %v835 = vmul.f32 %v816, 1.442695
        %v836 = vpow.pop %v835
        %v837 = vmul.f32 %v817, 1.442695
        %v838 = vpow.pop %v837
        %v839 = vmul.f32 %v818, 1.442695
        %v840 = vpow.pop %v839
        %v841 = vmul.f32 %v819, 1.442695
        %v842 = vpow.pop %v841
        %v843 = vmul.f32 %v820, 1.442695
        %v844 = vpow.pop %v843
        %v845 = vmul.f32 %v821, 1.442695
        %v846 = vpow.pop %v845
        %v847 = vmul.f32 %v822, 1.442695
        %v848 = vpow.pop %v847
        %v849 = vmul.f32 %v823, 1.442695
        %v850 = vpow.pop %v849
        %v851 = vmul.f32 %v824, 1.442695
        %v852 = vpow.pop %v851
        %v853 = vmul.f32 %v825, 1.442695
        %v854 = vpow.pop %v853
        %v855 = vmul.f32 %v826, 1.442695
        %v856 = vpow.pop %v855
        %v857 = vmul.f32 %v827, 1.442695
        %v858 = vpow.pop %v857
        %v859 = vmul.f32 %v828, 1.442695
        %v860 = vpow.pop %v859
        %862 = vset.pattern.permute.xlu0 0
        %863 = vperm.xlu0 %862, %v797
        %v864 = vpop.permute.xlu0 %863
        %867 = vset.pattern.permute.xlu0 0
        %868 = vperm.xlu0 %867, %v798
        %v869 = vpop.permute.xlu0 %868
        %872 = vset.pattern.permute.xlu0 0
        %873 = vperm.xlu0 %872, %v799
        %v874 = vpop.permute.xlu0 %873
        %877 = vset.pattern.permute.xlu0 0
        %878 = vperm.xlu0 %877, %v800
        %v879 = vpop.permute.xlu0 %878
        %882 = vset.pattern.permute.xlu0 0
        %883 = vperm.xlu0 %882, %v801
        %v884 = vpop.permute.xlu0 %883
        %887 = vset.pattern.permute.xlu0 0
        %888 = vperm.xlu0 %887, %v802
        %v889 = vpop.permute.xlu0 %888
        %892 = vset.pattern.permute.xlu0 0
        %893 = vperm.xlu0 %892, %v803
        %v894 = vpop.permute.xlu0 %893
        %897 = vset.pattern.permute.xlu0 0
        %898 = vperm.xlu0 %897, %v804
        %v899 = vpop.permute.xlu0 %898
        %902 = vset.pattern.permute.xlu0 0
        %903 = vperm.xlu0 %902, %v805
        %v904 = vpop.permute.xlu0 %903
        %907 = vset.pattern.permute.xlu0 0
        %908 = vperm.xlu0 %907, %v806
        %v909 = vpop.permute.xlu0 %908
        %912 = vset.pattern.permute.xlu0 0
        %913 = vperm.xlu0 %912, %v807
        %v914 = vpop.permute.xlu0 %913
        %917 = vset.pattern.permute.xlu0 0
        %918 = vperm.xlu0 %917, %v808
        %v919 = vpop.permute.xlu0 %918
        %922 = vset.pattern.permute.xlu0 0
        %923 = vperm.xlu0 %922, %v809
        %v924 = vpop.permute.xlu0 %923
        %927 = vset.pattern.permute.xlu0 0
        %928 = vperm.xlu0 %927, %v810
        %v929 = vpop.permute.xlu0 %928
        %932 = vset.pattern.permute.xlu0 0
        %933 = vperm.xlu0 %932, %v811
        %v934 = vpop.permute.xlu0 %933
        %937 = vset.pattern.permute.xlu0 0
        %938 = vperm.xlu0 %937, %v812
        %v939 = vpop.permute.xlu0 %938
        %v941 = vsub.f32 %v670, %v864
        %v942 = vsub.f32 %v673, %v869
        %v943 = vsub.f32 %v678, %v874
        %v944 = vsub.f32 %v681, %v879
        %v945 = vsub.f32 %v686, %v884
        %v946 = vsub.f32 %v689, %v889
        %v947 = vsub.f32 %v694, %v894
        %v948 = vsub.f32 %v697, %v899
        %v949 = vsub.f32 %v702, %v904
        %v950 = vsub.f32 %v705, %v909
        %v951 = vsub.f32 %v710, %v914
        %v952 = vsub.f32 %v713, %v919
        %v953 = vsub.f32 %v718, %v924
        %v954 = vsub.f32 %v721, %v929
        %v955 = vsub.f32 %v726, %v934
        %v956 = vsub.f32 %v729, %v939
        %v957 = vmul.f32 %v941, 1.442695
        %v958 = vpow.pop %v957
        %v959 = vmul.f32 %v942, 1.442695
        %v960 = vpow.pop %v959
        %v961 = vmul.f32 %v943, 1.442695
        %v962 = vpow.pop %v961
        %v963 = vmul.f32 %v944, 1.442695
        %v964 = vpow.pop %v963
        %v965 = vmul.f32 %v945, 1.442695
        %v966 = vpow.pop %v965
        %v967 = vmul.f32 %v946, 1.442695
        %v968 = vpow.pop %v967
        %v969 = vmul.f32 %v947, 1.442695
        %v970 = vpow.pop %v969
        %v971 = vmul.f32 %v948, 1.442695
        %v972 = vpow.pop %v971
        %v973 = vmul.f32 %v949, 1.442695
        %v974 = vpow.pop %v973
        %v975 = vmul.f32 %v950, 1.442695
        %v976 = vpow.pop %v975
        %v977 = vmul.f32 %v951, 1.442695
        %v978 = vpow.pop %v977
        %v979 = vmul.f32 %v952, 1.442695
        %v980 = vpow.pop %v979
        %v981 = vmul.f32 %v953, 1.442695
        %v982 = vpow.pop %v981
        %v983 = vmul.f32 %v954, 1.442695
        %v984 = vpow.pop %v983
        %v985 = vmul.f32 %v955, 1.442695
        %v986 = vpow.pop %v985
        %v987 = vmul.f32 %v956, 1.442695
        %v988 = vpow.pop %v987
        %v989 = vld [vmem:[#allocation4] sm:$0xff]
        %v990 = vld [vmem:[#allocation4 + $0x8] sm:$0xff]
        %v991 = vld [vmem:[#allocation4 + $0x10] sm:$0xff]
        %v992 = vld [vmem:[#allocation4 + $0x18] sm:$0xff]
        %v993 = vld [vmem:[#allocation4 + $0x20] sm:$0xff]
        %v994 = vld [vmem:[#allocation4 + $0x28] sm:$0xff]
        %v995 = vld [vmem:[#allocation4 + $0x30] sm:$0xff]
        %v996 = vld [vmem:[#allocation4 + $0x38] sm:$0xff]
        %v997 = vld [vmem:[#allocation4 + $0x40] sm:$0xff]
        %v998 = vld [vmem:[#allocation4 + $0x48] sm:$0xff]
        %v999 = vld [vmem:[#allocation4 + $0x50] sm:$0xff]
        %v1000 = vld [vmem:[#allocation4 + $0x58] sm:$0xff]
        %v1001 = vld [vmem:[#allocation4 + $0x60] sm:$0xff]
        %v1002 = vld [vmem:[#allocation4 + $0x68] sm:$0xff]
        %v1003 = vld [vmem:[#allocation4 + $0x70] sm:$0xff]
        %v1004 = vld [vmem:[#allocation4 + $0x78] sm:$0xff]
        %v1005 = vmul.f32 %v830, %v989
        %v1006 = vmul.f32 %v832, %v990
        %v1007 = vmul.f32 %v834, %v991
        %v1008 = vmul.f32 %v836, %v992
        %v1009 = vmul.f32 %v838, %v993
        %v1010 = vmul.f32 %v840, %v994
        %v1011 = vmul.f32 %v842, %v995
        %v1012 = vmul.f32 %v844, %v996
        %v1013 = vmul.f32 %v846, %v997
        %v1014 = vmul.f32 %v848, %v998
        %v1015 = vmul.f32 %v850, %v999
        %v1016 = vmul.f32 %v852, %v1000
        %v1017 = vmul.f32 %v854, %v1001
        %v1018 = vmul.f32 %v856, %v1002
        %v1019 = vmul.f32 %v858, %v1003
        %v1020 = vmul.f32 %v860, %v1004
        %v1021 = vsel %vm748, %v958, 0.0
        %1022 = vadd.xlane.f32.xlu0 %v1021
        %v1023 = vpop.xlane.xlu0 %1022
        %v1024 = vsel %vm748, %v960, 0.0
        %1025 = vadd.xlane.f32.xlu0 %v1024
        %v1026 = vpop.xlane.xlu0 %1025
        %v1027 = vsel %vm748, %v962, 0.0
        %1028 = vadd.xlane.f32.xlu0 %v1027
        %v1029 = vpop.xlane.xlu0 %1028
        %v1030 = vsel %vm748, %v964, 0.0
        %1031 = vadd.xlane.f32.xlu0 %v1030
        %v1032 = vpop.xlane.xlu0 %1031
        %v1033 = vsel %vm748, %v966, 0.0
        %1034 = vadd.xlane.f32.xlu0 %v1033
        %v1035 = vpop.xlane.xlu0 %1034
        %v1036 = vsel %vm748, %v968, 0.0
        %1037 = vadd.xlane.f32.xlu0 %v1036
        %v1038 = vpop.xlane.xlu0 %1037
        %v1039 = vsel %vm748, %v970, 0.0
        %1040 = vadd.xlane.f32.xlu0 %v1039
        %v1041 = vpop.xlane.xlu0 %1040
        %v1042 = vsel %vm748, %v972, 0.0
        %1043 = vadd.xlane.f32.xlu0 %v1042
        %v1044 = vpop.xlane.xlu0 %1043
        %v1045 = vsel %vm748, %v974, 0.0
        %1046 = vadd.xlane.f32.xlu0 %v1045
        %v1047 = vpop.xlane.xlu0 %1046
        %v1048 = vsel %vm748, %v976, 0.0
        %1049 = vadd.xlane.f32.xlu0 %v1048
        %v1050 = vpop.xlane.xlu0 %1049
        %v1051 = vsel %vm748, %v978, 0.0
        %1052 = vadd.xlane.f32.xlu0 %v1051
        %v1053 = vpop.xlane.xlu0 %1052
        %v1054 = vsel %vm748, %v980, 0.0
        %1055 = vadd.xlane.f32.xlu0 %v1054
        %v1056 = vpop.xlane.xlu0 %1055
        %v1057 = vsel %vm748, %v982, 0.0
        %1058 = vadd.xlane.f32.xlu0 %v1057
        %v1059 = vpop.xlane.xlu0 %1058
        %v1060 = vsel %vm748, %v984, 0.0
        %1061 = vadd.xlane.f32.xlu0 %v1060
        %v1062 = vpop.xlane.xlu0 %1061
        %v1063 = vsel %vm748, %v986, 0.0
        %1064 = vadd.xlane.f32.xlu0 %v1063
        %v1065 = vpop.xlane.xlu0 %1064
        %v1066 = vsel %vm748, %v988, 0.0
        %1067 = vadd.xlane.f32.xlu0 %v1066
        %v1068 = vpop.xlane.xlu0 %1067
        %v1069 = vadd.f32 %v1005, %v1023
        %v1070 = vadd.f32 %v1006, %v1026
        %v1071 = vadd.f32 %v1007, %v1029
        %v1072 = vadd.f32 %v1008, %v1032
        %v1073 = vadd.f32 %v1009, %v1035
        %v1074 = vadd.f32 %v1010, %v1038
        %v1075 = vadd.f32 %v1011, %v1041
        %v1076 = vadd.f32 %v1012, %v1044
        %v1077 = vadd.f32 %v1013, %v1047
        %v1078 = vadd.f32 %v1014, %v1050
        %v1079 = vadd.f32 %v1015, %v1053
        %v1080 = vadd.f32 %v1016, %v1056
        %v1081 = vadd.f32 %v1017, %v1059
        %v1082 = vadd.f32 %v1018, %v1062
        %v1083 = vadd.f32 %v1019, %v1065
        %v1084 = vadd.f32 %v1020, %v1068
        %vm1085 = vcmask 7168
        %1086 = vst.msk [vmem:[#allocation4] sm:$0xff] %vm1085, %v1069
        %1087 = vst.msk [vmem:[#allocation4 + $0x8] sm:$0xff] %vm1085, %v1070
        %1088 = vst.msk [vmem:[#allocation4 + $0x10] sm:$0xff] %vm1085, %v1071
        %1089 = vst.msk [vmem:[#allocation4 + $0x18] sm:$0xff] %vm1085, %v1072
        %1090 = vst.msk [vmem:[#allocation4 + $0x20] sm:$0xff] %vm1085, %v1073
        %1091 = vst.msk [vmem:[#allocation4 + $0x28] sm:$0xff] %vm1085, %v1074
        %1092 = vst.msk [vmem:[#allocation4 + $0x30] sm:$0xff] %vm1085, %v1075
        %1093 = vst.msk [vmem:[#allocation4 + $0x38] sm:$0xff] %vm1085, %v1076
        %1094 = vst.msk [vmem:[#allocation4 + $0x40] sm:$0xff] %vm1085, %v1077
        %1095 = vst.msk [vmem:[#allocation4 + $0x48] sm:$0xff] %vm1085, %v1078
        %1096 = vst.msk [vmem:[#allocation4 + $0x50] sm:$0xff] %vm1085, %v1079
        %1097 = vst.msk [vmem:[#allocation4 + $0x58] sm:$0xff] %vm1085, %v1080
        %1098 = vst.msk [vmem:[#allocation4 + $0x60] sm:$0xff] %vm1085, %v1081
        %1099 = vst.msk [vmem:[#allocation4 + $0x68] sm:$0xff] %vm1085, %v1082
        %1100 = vst.msk [vmem:[#allocation4 + $0x70] sm:$0xff] %vm1085, %v1083
        %1101 = vst.msk [vmem:[#allocation4 + $0x78] sm:$0xff] %vm1085, %v1084
        %v1102 = vpack.c.bf16 %v960, %v958
        %v1103 = vpack.c.bf16 %v964, %v962
        %v1104 = vpack.c.bf16 %v968, %v966
        %v1105 = vpack.c.bf16 %v972, %v970
        %v1106 = vpack.c.bf16 %v976, %v974
        %v1107 = vpack.c.bf16 %v980, %v978
        %v1108 = vpack.c.bf16 %v984, %v982
        %v1109 = vpack.c.bf16 %v988, %v986
        %v1118 = vunpack.c.l.b16 %v595
        %v1119 = vunpack.c.l.b16 %v596
        %v1120 = vunpack.c.l.b16 %v597
        %v1121 = vunpack.c.l.b16 %v598
        %v1122 = vunpack.c.l.b16 %v599
        %v1123 = vunpack.c.l.b16 %v600
        %v1124 = vunpack.c.l.b16 %v601
        %v1125 = vunpack.c.l.b16 %v602
        %v1126 = vpack.c.b16 %v1119, %v1118
        %v1127 = vpack.c.b16 %v1121, %v1120
        %v1128 = vpack.c.b16 %v1123, %v1122
        %v1129 = vpack.c.b16 %v1125, %v1124
        %v1135 = vsel %vm748, %v1102, 0
        %v1138 = vsel %vm748, %v1103, 0
        %v1141 = vsel %vm748, %v1104, 0
        %v1144 = vsel %vm748, %v1105, 0
        %v1147 = vsel %vm748, %v1106, 0
        %v1150 = vsel %vm748, %v1107, 0
        %v1153 = vsel %vm748, %v1108, 0
        %v1156 = vsel %vm748, %v1109, 0
        %1158 = vmatprep.subr.bf16.mxu0 0
        %1159 = vmatpush1.bf16.msra.mxu0 %v1126
        %1160 = vmatprep.subr.bf16.mxu0 0
        %1161 = vmatpush1.bf16.msra.mxu0 %v1127
        %1162 = vmatprep.subr.bf16.mxu0 0
        %1163 = vmatpush1.bf16.msra.mxu0 %v1128
        %1164 = vmatprep.subr.bf16.mxu0 0
        %1165 = vmatpush1.bf16.msra.mxu0 %v1129
        %1166 = vmatprep.subr.bf16.mxu0 0
        %1167 = vmatpush1.bf16.msra.mxu0 0
        %1168 = vmatprep.subr.bf16.mxu0 0
        %1169 = vmatpush1.bf16.msra.mxu0 0
        %1170 = vmatprep.subr.bf16.mxu0 0
        %1171 = vmatpush1.bf16.msra.mxu0 0
        %1172 = vmatprep.subr.bf16.mxu0 0
        %1173 = vmatpush1.bf16.msra.mxu0 0
        %1174 = vmatprep.subr.bf16.mxu0 0
        %1175 = vmatpush1.bf16.msra.mxu0 0
        %1176 = vmatprep.subr.bf16.mxu0 0
        %1177 = vmatpush1.bf16.msra.mxu0 0
        %1178 = vmatprep.subr.bf16.mxu0 0
        %1179 = vmatpush1.bf16.msra.mxu0 0
        %1180 = vmatprep.subr.bf16.mxu0 0
        %1181 = vmatpush1.bf16.msra.mxu0 0
        %1182 = vmatprep.subr.bf16.mxu0 0
        %1183 = vmatpush1.bf16.msra.mxu0 0
        %1184 = vmatprep.subr.bf16.mxu0 0
        %1185 = vmatpush1.bf16.msra.mxu0 0
        %1186 = vmatprep.subr.bf16.mxu0 0
        %1187 = vmatpush1.bf16.msra.mxu0 0
        %1188 = vmatprep.subr.bf16.mxu0 0
        %1189 = vmatpush1.bf16.msra.mxu0 0
        %1190 = vmatprep.mubr.bf16.mxu0 0
        %1191 = vmatmul.mubr.bf16.gmra.mrb[0].mxu0 %v1135
        %v1192 = vpop.f32.mrb[0].mxu0
        %v1193 = vadd.f32 0.0, %v1192
        %v1194 = vpop.f32.mrb[0].mxu0
        %v1195 = vpop.f32.mrb[0].mxu0
        %v1196 = vadd.f32 0.0, %v1195
        %v1197 = vpop.f32.mrb[0].mxu0
        %1198 = vmatprep.mubr.bf16.mxu0 0
        %1199 = vmatmul.mubr.bf16.gmra.mrb[0].mxu0 %v1138
        %v1200 = vpop.f32.mrb[0].mxu0
        %v1201 = vadd.f32 0.0, %v1200
        %v1202 = vpop.f32.mrb[0].mxu0
        %v1203 = vpop.f32.mrb[0].mxu0
        %v1204 = vadd.f32 0.0, %v1203
        %v1205 = vpop.f32.mrb[0].mxu0
        %1206 = vmatprep.mubr.bf16.mxu0 0
        %1207 = vmatmul.mubr.bf16.gmra.mrb[0].mxu0 %v1141
        %v1208 = vpop.f32.mrb[0].mxu0
        %v1209 = vadd.f32 0.0, %v1208
        %v1210 = vpop.f32.mrb[0].mxu0
        %v1211 = vpop.f32.mrb[0].mxu0
        %v1212 = vadd.f32 0.0, %v1211
        %v1213 = vpop.f32.mrb[0].mxu0
        %1214 = vmatprep.mubr.bf16.mxu0 0
        %1215 = vmatmul.mubr.bf16.gmra.mrb[0].mxu0 %v1144
        %v1216 = vpop.f32.mrb[0].mxu0
        %v1217 = vadd.f32 0.0, %v1216
        %v1218 = vpop.f32.mrb[0].mxu0
        %v1219 = vpop.f32.mrb[0].mxu0
        %v1220 = vadd.f32 0.0, %v1219
        %v1221 = vpop.f32.mrb[0].mxu0
        %1222 = vmatprep.mubr.bf16.mxu0 0
        %1223 = vmatmul.mubr.bf16.gmra.mrb[0].mxu0 %v1147
        %v1224 = vpop.f32.mrb[0].mxu0
        %v1225 = vadd.f32 0.0, %v1224
        %v1226 = vpop.f32.mrb[0].mxu0
        %v1227 = vpop.f32.mrb[0].mxu0
        %v1228 = vadd.f32 0.0, %v1227
        %v1229 = vpop.f32.mrb[0].mxu0
        %1230 = vmatprep.mubr.bf16.mxu0 0
        %1231 = vmatmul.mubr.bf16.gmra.mrb[0].mxu0 %v1150
        %v1232 = vpop.f32.mrb[0].mxu0
        %v1233 = vadd.f32 0.0, %v1232
        %v1234 = vpop.f32.mrb[0].mxu0
        %v1235 = vpop.f32.mrb[0].mxu0
        %v1236 = vadd.f32 0.0, %v1235
        %v1237 = vpop.f32.mrb[0].mxu0
        %1238 = vmatprep.mubr.bf16.mxu0 0
        %1239 = vmatmul.mubr.bf16.gmra.mrb[0].mxu0 %v1153
        %v1240 = vpop.f32.mrb[0].mxu0
        %v1241 = vadd.f32 0.0, %v1240
        %v1242 = vpop.f32.mrb[0].mxu0
        %v1243 = vpop.f32.mrb[0].mxu0
        %v1244 = vadd.f32 0.0, %v1243
        %v1245 = vpop.f32.mrb[0].mxu0
        %1246 = vmatprep.mubr.bf16.mxu0 0
        %1247 = vmatmul.mubr.bf16.gmra.mrb[0].mxu0 %v1156
        %v1248 = vpop.f32.mrb[0].mxu0
        %v1249 = vadd.f32 0.0, %v1248
        %v1250 = vpop.f32.mrb[0].mxu0
        %v1251 = vpop.f32.mrb[0].mxu0
        %v1252 = vadd.f32 0.0, %v1251
        %v1253 = vpop.f32.mrb[0].mxu0
        %1254 = vdwg.mxu0
        %v1255 = vld [vmem:[#allocation5] sm:$0xff]
        %v1256 = vld [vmem:[#allocation5 + $0x8] sm:$0xff]
        %v1257 = vld [vmem:[#allocation5 + $0x10] sm:$0xff]
        %v1258 = vld [vmem:[#allocation5 + $0x18] sm:$0xff]
        %v1259 = vld [vmem:[#allocation5 + $0x20] sm:$0xff]
        %v1260 = vld [vmem:[#allocation5 + $0x28] sm:$0xff]
        %v1261 = vld [vmem:[#allocation5 + $0x30] sm:$0xff]
        %v1262 = vld [vmem:[#allocation5 + $0x38] sm:$0xff]
        %v1263 = vld [vmem:[#allocation5 + $0x40] sm:$0xff]
        %v1264 = vld [vmem:[#allocation5 + $0x48] sm:$0xff]
        %v1265 = vld [vmem:[#allocation5 + $0x50] sm:$0xff]
        %v1266 = vld [vmem:[#allocation5 + $0x58] sm:$0xff]
        %v1267 = vld [vmem:[#allocation5 + $0x60] sm:$0xff]
        %v1268 = vld [vmem:[#allocation5 + $0x68] sm:$0xff]
        %v1269 = vld [vmem:[#allocation5 + $0x70] sm:$0xff]
        %v1270 = vld [vmem:[#allocation5 + $0x78] sm:$0xff]
        %1272 = vset.pattern.permute.xlu0 0
        %1273 = vperm.xlu0 %1272, %v830
        %v1274 = vpop.permute.xlu0 %1273
        %1277 = vset.pattern.permute.xlu0 0
        %1278 = vperm.xlu0 %1277, %v832
        %v1279 = vpop.permute.xlu0 %1278
        %1282 = vset.pattern.permute.xlu0 0
        %1283 = vperm.xlu0 %1282, %v834
        %v1284 = vpop.permute.xlu0 %1283
        %1287 = vset.pattern.permute.xlu0 0
        %1288 = vperm.xlu0 %1287, %v836
        %v1289 = vpop.permute.xlu0 %1288
        %1292 = vset.pattern.permute.xlu0 0
        %1293 = vperm.xlu0 %1292, %v838
        %v1294 = vpop.permute.xlu0 %1293
        %1297 = vset.pattern.permute.xlu0 0
        %1298 = vperm.xlu0 %1297, %v840
        %v1299 = vpop.permute.xlu0 %1298
        %1302 = vset.pattern.permute.xlu0 0
        %1303 = vperm.xlu0 %1302, %v842
        %v1304 = vpop.permute.xlu0 %1303
        %1307 = vset.pattern.permute.xlu0 0
        %1308 = vperm.xlu0 %1307, %v844
        %v1309 = vpop.permute.xlu0 %1308
        %1312 = vset.pattern.permute.xlu0 0
        %1313 = vperm.xlu0 %1312, %v846
        %v1314 = vpop.permute.xlu0 %1313
        %1317 = vset.pattern.permute.xlu0 0
        %1318 = vperm.xlu0 %1317, %v848
        %v1319 = vpop.permute.xlu0 %1318
        %1322 = vset.pattern.permute.xlu0 0
        %1323 = vperm.xlu0 %1322, %v850
        %v1324 = vpop.permute.xlu0 %1323
        %1327 = vset.pattern.permute.xlu0 0
        %1328 = vperm.xlu0 %1327, %v852
        %v1329 = vpop.permute.xlu0 %1328
        %1332 = vset.pattern.permute.xlu0 0
        %1333 = vperm.xlu0 %1332, %v854
        %v1334 = vpop.permute.xlu0 %1333
        %1337 = vset.pattern.permute.xlu0 0
        %1338 = vperm.xlu0 %1337, %v856
        %v1339 = vpop.permute.xlu0 %1338
        %1342 = vset.pattern.permute.xlu0 0
        %1343 = vperm.xlu0 %1342, %v858
        %v1344 = vpop.permute.xlu0 %1343
        %1347 = vset.pattern.permute.xlu0 0
        %1348 = vperm.xlu0 %1347, %v860
        %v1349 = vpop.permute.xlu0 %1348
        %v1351 = vmul.f32 %v1274, %v1255
        %v1352 = vmul.f32 %v1279, %v1256
        %v1353 = vmul.f32 %v1284, %v1257
        %v1354 = vmul.f32 %v1289, %v1258
        %v1355 = vmul.f32 %v1294, %v1259
        %v1356 = vmul.f32 %v1299, %v1260
        %v1357 = vmul.f32 %v1304, %v1261
        %v1358 = vmul.f32 %v1309, %v1262
        %v1359 = vmul.f32 %v1314, %v1263
        %v1360 = vmul.f32 %v1319, %v1264
        %v1361 = vmul.f32 %v1324, %v1265
        %v1362 = vmul.f32 %v1329, %v1266
        %v1363 = vmul.f32 %v1334, %v1267
        %v1364 = vmul.f32 %v1339, %v1268
        %v1365 = vmul.f32 %v1344, %v1269
        %v1366 = vmul.f32 %v1349, %v1270
        %v1367 = vadd.f32 %v1351, %v1193
        %v1368 = vadd.f32 %v1352, %v1196
        %v1369 = vadd.f32 %v1353, %v1201
        %v1370 = vadd.f32 %v1354, %v1204
        %v1371 = vadd.f32 %v1355, %v1209
        %v1372 = vadd.f32 %v1356, %v1212
        %v1373 = vadd.f32 %v1357, %v1217
        %v1374 = vadd.f32 %v1358, %v1220
        %v1375 = vadd.f32 %v1359, %v1225
        %v1376 = vadd.f32 %v1360, %v1228
        %v1377 = vadd.f32 %v1361, %v1233
        %v1378 = vadd.f32 %v1362, %v1236
        %v1379 = vadd.f32 %v1363, %v1241
        %v1380 = vadd.f32 %v1364, %v1244
        %v1381 = vadd.f32 %v1365, %v1249
        %v1382 = vadd.f32 %v1366, %v1252
        %1383 = vst [vmem:[#allocation5] sm:$0xff] %v1367
        %1384 = vst [vmem:[#allocation5 + $0x8] sm:$0xff] %v1368
        %1385 = vst [vmem:[#allocation5 + $0x10] sm:$0xff] %v1369
        %1386 = vst [vmem:[#allocation5 + $0x18] sm:$0xff] %v1370
        %1387 = vst [vmem:[#allocation5 + $0x20] sm:$0xff] %v1371
        %1388 = vst [vmem:[#allocation5 + $0x28] sm:$0xff] %v1372
        %1389 = vst [vmem:[#allocation5 + $0x30] sm:$0xff] %v1373
        %1390 = vst [vmem:[#allocation5 + $0x38] sm:$0xff] %v1374
        %1391 = vst [vmem:[#allocation5 + $0x40] sm:$0xff] %v1375
        %1392 = vst [vmem:[#allocation5 + $0x48] sm:$0xff] %v1376
        %1393 = vst [vmem:[#allocation5 + $0x50] sm:$0xff] %v1377
        %1394 = vst [vmem:[#allocation5 + $0x58] sm:$0xff] %v1378
        %1395 = vst [vmem:[#allocation5 + $0x60] sm:$0xff] %v1379
        %1396 = vst [vmem:[#allocation5 + $0x68] sm:$0xff] %v1380
        %1397 = vst [vmem:[#allocation5 + $0x70] sm:$0xff] %v1381
        %1398 = vst [vmem:[#allocation5 + $0x78] sm:$0xff] %v1382
        %1399 = vst.msk [vmem:[#allocation3] sm:$0xff] %vm1085, %v797
        %1400 = vst.msk [vmem:[#allocation3 + $0x8] sm:$0xff] %vm1085, %v798
        %1401 = vst.msk [vmem:[#allocation3 + $0x10] sm:$0xff] %vm1085, %v799
        %1402 = vst.msk [vmem:[#allocation3 + $0x18] sm:$0xff] %vm1085, %v800
        %1403 = vst.msk [vmem:[#allocation3 + $0x20] sm:$0xff] %vm1085, %v801
        %1404 = vst.msk [vmem:[#allocation3 + $0x28] sm:$0xff] %vm1085, %v802
        %1405 = vst.msk [vmem:[#allocation3 + $0x30] sm:$0xff] %vm1085, %v803
        %1406 = vst.msk [vmem:[#allocation3 + $0x38] sm:$0xff] %vm1085, %v804
        %1407 = vst.msk [vmem:[#allocation3 + $0x40] sm:$0xff] %vm1085, %v805
        %1408 = vst.msk [vmem:[#allocation3 + $0x48] sm:$0xff] %vm1085, %v806
        %1409 = vst.msk [vmem:[#allocation3 + $0x50] sm:$0xff] %vm1085, %v807
        %1410 = vst.msk [vmem:[#allocation3 + $0x58] sm:$0xff] %vm1085, %v808
        %1411 = vst.msk [vmem:[#allocation3 + $0x60] sm:$0xff] %vm1085, %v809
        %1412 = vst.msk [vmem:[#allocation3 + $0x68] sm:$0xff] %vm1085, %v810
        %1413 = vst.msk [vmem:[#allocation3 + $0x70] sm:$0xff] %vm1085, %v811
        %1414 = vst.msk [vmem:[#allocation3 + $0x78] sm:$0xff] %vm1085, %v812
        // Predicated region
        $region157: #{gqa_forward.4} parent=139 // pred_check
          %p1415 = pneg %p478
        $region158: #{gqa_forward.4} parent=139 // pred_check_branch
          %1417 = sbr.rel (%p1415) target = $region160
        $region159: #{gqa_forward.4} parent=139 // pred_region
          %v1418 = vld [vmem:[#allocation5] sm:$0xff]
          %v1419 = vld [vmem:[#allocation5 + $0x8] sm:$0xff]
          %v1420 = vld [vmem:[#allocation5 + $0x10] sm:$0xff]
          %v1421 = vld [vmem:[#allocation5 + $0x18] sm:$0xff]
          %v1422 = vld [vmem:[#allocation5 + $0x20] sm:$0xff]
          %v1423 = vld [vmem:[#allocation5 + $0x28] sm:$0xff]
          %v1424 = vld [vmem:[#allocation5 + $0x30] sm:$0xff]
          %v1425 = vld [vmem:[#allocation5 + $0x38] sm:$0xff]
          %v1426 = vld [vmem:[#allocation5 + $0x40] sm:$0xff]
          %v1427 = vld [vmem:[#allocation5 + $0x48] sm:$0xff]
          %v1428 = vld [vmem:[#allocation5 + $0x50] sm:$0xff]
          %v1429 = vld [vmem:[#allocation5 + $0x58] sm:$0xff]
          %v1430 = vld [vmem:[#allocation5 + $0x60] sm:$0xff]
          %v1431 = vld [vmem:[#allocation5 + $0x68] sm:$0xff]
          %v1432 = vld [vmem:[#allocation5 + $0x70] sm:$0xff]
          %v1433 = vld [vmem:[#allocation5 + $0x78] sm:$0xff]
          %v1434 = vld [vmem:[#allocation4] sm:$0xff]
          %v1435 = vld [vmem:[#allocation4 + $0x8] sm:$0xff]
          %v1436 = vld [vmem:[#allocation4 + $0x10] sm:$0xff]
          %v1437 = vld [vmem:[#allocation4 + $0x18] sm:$0xff]
          %v1438 = vld [vmem:[#allocation4 + $0x20] sm:$0xff]
          %v1439 = vld [vmem:[#allocation4 + $0x28] sm:$0xff]
          %v1440 = vld [vmem:[#allocation4 + $0x30] sm:$0xff]
          %v1441 = vld [vmem:[#allocation4 + $0x38] sm:$0xff]
          %v1442 = vld [vmem:[#allocation4 + $0x40] sm:$0xff]
          %v1443 = vld [vmem:[#allocation4 + $0x48] sm:$0xff]
          %v1444 = vld [vmem:[#allocation4 + $0x50] sm:$0xff]
          %v1445 = vld [vmem:[#allocation4 + $0x58] sm:$0xff]
          %v1446 = vld [vmem:[#allocation4 + $0x60] sm:$0xff]
          %v1447 = vld [vmem:[#allocation4 + $0x68] sm:$0xff]
          %v1448 = vld [vmem:[#allocation4 + $0x70] sm:$0xff]
          %v1449 = vld [vmem:[#allocation4 + $0x78] sm:$0xff]
          %v1450 = vrcp.pop %v1434
          %v1451 = vrcp.pop %v1435
          %v1452 = vrcp.pop %v1436
          %v1453 = vrcp.pop %v1437
          %v1454 = vrcp.pop %v1438
          %v1455 = vrcp.pop %v1439
          %v1456 = vrcp.pop %v1440
          %v1457 = vrcp.pop %v1441
          %v1458 = vrcp.pop %v1442
          %v1459 = vrcp.pop %v1443
          %v1460 = vrcp.pop %v1444
          %v1461 = vrcp.pop %v1445
          %v1462 = vrcp.pop %v1446
          %v1463 = vrcp.pop %v1447
          %v1464 = vrcp.pop %v1448
          %v1465 = vrcp.pop %v1449
          %1467 = vset.pattern.permute.xlu0 0
          %1468 = vperm.xlu0 %1467, %v1450
          %v1469 = vpop.permute.xlu0 %1468
          %1472 = vset.pattern.permute.xlu0 0
          %1473 = vperm.xlu0 %1472, %v1451
          %v1474 = vpop.permute.xlu0 %1473
          %1477 = vset.pattern.permute.xlu0 0
          %1478 = vperm.xlu0 %1477, %v1452
          %v1479 = vpop.permute.xlu0 %1478
          %1482 = vset.pattern.permute.xlu0 0
          %1483 = vperm.xlu0 %1482, %v1453
          %v1484 = vpop.permute.xlu0 %1483
          %1487 = vset.pattern.permute.xlu0 0
          %1488 = vperm.xlu0 %1487, %v1454
          %v1489 = vpop.permute.xlu0 %1488
          %1492 = vset.pattern.permute.xlu0 0
          %1493 = vperm.xlu0 %1492, %v1455
          %v1494 = vpop.permute.xlu0 %1493
          %1497 = vset.pattern.permute.xlu0 0
          %1498 = vperm.xlu0 %1497, %v1456
          %v1499 = vpop.permute.xlu0 %1498
          %1502 = vset.pattern.permute.xlu0 0
          %1503 = vperm.xlu0 %1502, %v1457
          %v1504 = vpop.permute.xlu0 %1503
          %1507 = vset.pattern.permute.xlu0 0
          %1508 = vperm.xlu0 %1507, %v1458
          %v1509 = vpop.permute.xlu0 %1508
          %1512 = vset.pattern.permute.xlu0 0
          %1513 = vperm.xlu0 %1512, %v1459
          %v1514 = vpop.permute.xlu0 %1513
          %1517 = vset.pattern.permute.xlu0 0
          %1518 = vperm.xlu0 %1517, %v1460
          %v1519 = vpop.permute.xlu0 %1518
          %1522 = vset.pattern.permute.xlu0 0
          %1523 = vperm.xlu0 %1522, %v1461
          %v1524 = vpop.permute.xlu0 %1523
          %1527 = vset.pattern.permute.xlu0 0
          %1528 = vperm.xlu0 %1527, %v1462
          %v1529 = vpop.permute.xlu0 %1528
          %1532 = vset.pattern.permute.xlu0 0
          %1533 = vperm.xlu0 %1532, %v1463
          %v1534 = vpop.permute.xlu0 %1533
          %1537 = vset.pattern.permute.xlu0 0
          %1538 = vperm.xlu0 %1537, %v1464
          %v1539 = vpop.permute.xlu0 %1538
          %1542 = vset.pattern.permute.xlu0 0
          %1543 = vperm.xlu0 %1542, %v1465
          %v1544 = vpop.permute.xlu0 %1543
          %v1546 = vmul.f32 %v1418, %v1469
          %v1547 = vmul.f32 %v1419, %v1474
          %v1548 = vmul.f32 %v1420, %v1479
          %v1549 = vmul.f32 %v1421, %v1484
          %v1550 = vmul.f32 %v1422, %v1489
          %v1551 = vmul.f32 %v1423, %v1494
          %v1552 = vmul.f32 %v1424, %v1499
          %v1553 = vmul.f32 %v1425, %v1504
          %v1554 = vmul.f32 %v1426, %v1509
          %v1555 = vmul.f32 %v1427, %v1514
          %v1556 = vmul.f32 %v1428, %v1519
          %v1557 = vmul.f32 %v1429, %v1524
          %v1558 = vmul.f32 %v1430, %v1529
          %v1559 = vmul.f32 %v1431, %v1534
          %v1560 = vmul.f32 %v1432, %v1539
          %v1561 = vmul.f32 %v1433, %v1544
          %v1562 = vpack.c.bf16 %v1547, %v1546
          %v1563 = vpack.c.bf16 %v1549, %v1548
          %v1564 = vpack.c.bf16 %v1551, %v1550
          %v1565 = vpack.c.bf16 %v1553, %v1552
          %v1570 = vunpack.c.l.b16 %v1562
          %v1571 = vunpack.c.h.b16 %v1562
          %v1572 = vunpack.c.l.b16 %v1563
          %v1573 = vunpack.c.h.b16 %v1563
          %v1574 = vunpack.c.l.b16 %v1564
          %v1575 = vunpack.c.h.b16 %v1564
          %v1576 = vunpack.c.l.b16 %v1565
          %v1577 = vunpack.c.h.b16 %v1565
          %v1578 = vpack.c.b16 %v1570, %v1570
          %v1579 = vpack.c.b16 %v1571, %v1571
          %v1580 = vpack.c.b16 %v1572, %v1572
          %v1581 = vpack.c.b16 %v1573, %v1573
          %v1582 = vpack.c.b16 %v1574, %v1574
          %v1583 = vpack.c.b16 %v1575, %v1575
          %v1584 = vpack.c.b16 %v1576, %v1576
          %v1585 = vpack.c.b16 %v1577, %v1577
          %1594 = vst [vmem:[%s468] sm:$0xf] %v1578
          %1595 = vst [vmem:[%s468 + $0x8] sm:$0xf] %v1579
          %1596 = vst [vmem:[%s468 + $0x10] sm:$0xf] %v1580
          %1597 = vst [vmem:[%s468 + $0x18] sm:$0xf] %v1581
          %1598 = vst [vmem:[%s468 + $0x20] sm:$0xf] %v1582
          %1599 = vst [vmem:[%s468 + $0x28] sm:$0xf] %v1583
          %1600 = vst [vmem:[%s468 + $0x30] sm:$0xf] %v1584
          %1601 = vst [vmem:[%s468 + $0x38] sm:$0xf] %v1585
          %v1602 = vpack.c.bf16 %v1555, %v1554
          %v1603 = vpack.c.bf16 %v1557, %v1556
          %v1604 = vpack.c.bf16 %v1559, %v1558
          %v1605 = vpack.c.bf16 %v1561, %v1560
          %v1610 = vunpack.c.l.b16 %v1602
          %v1611 = vunpack.c.h.b16 %v1602
          %v1612 = vunpack.c.l.b16 %v1603
          %v1613 = vunpack.c.h.b16 %v1603
          %v1614 = vunpack.c.l.b16 %v1604
          %v1615 = vunpack.c.h.b16 %v1604
          %v1616 = vunpack.c.l.b16 %v1605
          %v1617 = vunpack.c.h.b16 %v1605
          %v1618 = vpack.c.b16 %v1610, %v1610
          %v1619 = vpack.c.b16 %v1611, %v1611
          %v1620 = vpack.c.b16 %v1612, %v1612
          %v1621 = vpack.c.b16 %v1613, %v1613
          %v1622 = vpack.c.b16 %v1614, %v1614
          %v1623 = vpack.c.b16 %v1615, %v1615
          %v1624 = vpack.c.b16 %v1616, %v1616
          %v1625 = vpack.c.b16 %v1617, %v1617
          %1634 = vst [vmem:[%s468 + $0x4] sm:$0xf] %v1618
          %1635 = vst [vmem:[%s468 + $0xc] sm:$0xf] %v1619
          %1636 = vst [vmem:[%s468 + $0x14] sm:$0xf] %v1620
          %1637 = vst [vmem:[%s468 + $0x1c] sm:$0xf] %v1621
          %1638 = vst [vmem:[%s468 + $0x24] sm:$0xf] %v1622
          %1639 = vst [vmem:[%s468 + $0x2c] sm:$0xf] %v1623
          %1640 = vst [vmem:[%s468 + $0x34] sm:$0xf] %v1624
          %1641 = vst [vmem:[%s468 + $0x3c] sm:$0xf] %v1625
        $region160: #{gqa_forward.4} parent=139 // pred_fallthru
          _
        %s1642 = sand.u32 %s146, 1
        %s1643 = sand.u32 %s146, 1
        %s1644 = smul.addr %s1643, 64
        %s1645 = scalar_lea.vmem [#allocation9], %s1644
        // Predicated region
        $region161: #{gqa_forward.4} parent=139 // pred_check
          %p1646 = pneg %p156
        $region162: #{gqa_forward.4} parent=139 // pred_check_branch
          %1648 = sbr.rel (%p1646) target = $region164
        $region163: #{gqa_forward.4} parent=139 // pred_region
          %s1649 = smul.u32 8, %s22
          %s1650 = smul.u32 2, %s21
          %s1651 = smul.addr %s1649, 4
          %s1652 = sadd.s32 %s1650, %s1651
          %s1653 = smul.addr %s20, 32
          %s1654 = sadd.s32 %s1652, %s1653
          %s1655 = smul.addr %s1654, 4
          %s1656 = scalar_lea.vmem %s3, %s1655
          // Predicated region
          $region165: #{gqa_forward.4} parent=163 // pred_check
            _
          $region166: #{gqa_forward.4} parent=163 // pred_check_branch
            %1658 = sbr.rel (0) target = $region168
          $region167: #{gqa_forward.4} parent=163 // pred_region
            // Predicated region
            $region169: #{gqa_forward.4} parent=167 // pred_check
              _
            $region170: #{gqa_forward.4} parent=167 // pred_check_branch
              %1660 = sbr.rel (0) target = $region172
            $region171: #{gqa_forward.4} parent=167 // pred_region
              // Predicated region
              $region184: #{gqa_forward.4} parent=171 // pred_check
                _
              $region185: #{gqa_forward.4} parent=171 // pred_check_branch
                %1689 = sbr.rel (0) target = $region187
              $region186: #{gqa_forward.4} parent=171 // pred_region
                loop: start=0, step=1, limit=1
                $region188: #{gqa_forward.4} parent=186 // loop_pre_header
                  _
                $region189: #{gqa_forward.4} parent=186 // loop_header
                  %s1691 = sphi 0, %s1695
                  %p1692 = scmp.ge.s32.totalorder %s1691, 1
                  %s1696 = sphi %s1645, %s1645
                  %s1697 = sphi %s1656, %s1656
                $region190: #{gqa_forward.4} parent=186 // loop_header_branch
                  %1694 = sbr.rel (%p1692) target = $region194
                $region191: #{gqa_forward.4} parent=186 // loop_body
                  %v1698 = vld [vmem:[%s1696] sm:$0xff]
                  %1699 = vst [vmem:[%s1697] sm:$0xff] %v1698
                  %v1700 = vld [vmem:[%s1696 + $0x8] sm:$0xff]
                  %1701 = vst [vmem:[%s1697 + $0x10] sm:$0xff] %v1700
                  %v1702 = vld [vmem:[%s1696 + $0x10] sm:$0xff]
                  %1703 = vst [vmem:[%s1697 + $0x20] sm:$0xff] %v1702
                  %v1704 = vld [vmem:[%s1696 + $0x18] sm:$0xff]
                  %1705 = vst [vmem:[%s1697 + $0x30] sm:$0xff] %v1704
                  %v1706 = vld [vmem:[%s1696 + $0x20] sm:$0xff]
                  %1707 = vst [vmem:[%s1697 + $0x40] sm:$0xff] %v1706
                  %v1708 = vld [vmem:[%s1696 + $0x28] sm:$0xff]
                  %1709 = vst [vmem:[%s1697 + $0x50] sm:$0xff] %v1708
                  %v1710 = vld [vmem:[%s1696 + $0x30] sm:$0xff]
                  %1711 = vst [vmem:[%s1697 + $0x60] sm:$0xff] %v1710
                  %v1712 = vld [vmem:[%s1696 + $0x38] sm:$0xff]
                  %1713 = vst [vmem:[%s1697 + $0x70] sm:$0xff] %v1712
                $region192: #{gqa_forward.4} parent=186 // loop_footer
                  %s1695 = sadd.s32 1, %s1691
                $region193: #{gqa_forward.4} parent=186 // loop_footer_branch
                  %1690 = sbr.rel target = $region189
                $region194: #{gqa_forward.4} parent=186 // loop_exit
                  _
              $region187: #{gqa_forward.4} parent=171 // pred_fallthru
                _
              // Predicated region
              $region195: #{gqa_forward.4} parent=171 // pred_check
                _
              $region196: #{gqa_forward.4} parent=171 // pred_check_branch
                %1715 = sbr.rel target = $region198
              $region197: #{gqa_forward.4} parent=171 // pred_region
                _
              $region198: #{gqa_forward.4} parent=171 // pred_fallthru
                _
            $region172: #{gqa_forward.4} parent=167 // pred_fallthru
              _
            // Predicated region
            $region173: #{gqa_forward.4} parent=167 // pred_check
              _
            $region174: #{gqa_forward.4} parent=167 // pred_check_branch
              %1662 = sbr.rel target = $region176
            $region175: #{gqa_forward.4} parent=167 // pred_region
              loop: start=0, step=1, limit=1
              $region177: #{gqa_forward.4} parent=175 // loop_pre_header
                _
              $region178: #{gqa_forward.4} parent=175 // loop_header
                %s1665 = sphi 0, %s1669
                %p1666 = scmp.ge.s32.totalorder %s1665, 1
                %s1670 = sphi %s1645, %s1645
                %s1671 = sphi %s1656, %s1656
              $region179: #{gqa_forward.4} parent=175 // loop_header_branch
                %1668 = sbr.rel (%p1666) target = $region183
              $region180: #{gqa_forward.4} parent=175 // loop_body
                %v1672 = vld [vmem:[%s1670] sm:$0xff]
                %1673 = vst [vmem:[%s1671] sm:$0xff] %v1672
                %v1674 = vld [vmem:[%s1670 + $0x8] sm:$0xff]
                %1675 = vst [vmem:[%s1671 + $0x10] sm:$0xff] %v1674
                %v1676 = vld [vmem:[%s1670 + $0x10] sm:$0xff]
                %1677 = vst [vmem:[%s1671 + $0x20] sm:$0xff] %v1676
                %v1678 = vld [vmem:[%s1670 + $0x18] sm:$0xff]
                %1679 = vst [vmem:[%s1671 + $0x30] sm:$0xff] %v1678
                %v1680 = vld [vmem:[%s1670 + $0x20] sm:$0xff]
                %1681 = vst [vmem:[%s1671 + $0x40] sm:$0xff] %v1680
                %v1682 = vld [vmem:[%s1670 + $0x28] sm:$0xff]
                %1683 = vst [vmem:[%s1671 + $0x50] sm:$0xff] %v1682
                %v1684 = vld [vmem:[%s1670 + $0x30] sm:$0xff]
                %1685 = vst [vmem:[%s1671 + $0x60] sm:$0xff] %v1684
                %v1686 = vld [vmem:[%s1670 + $0x38] sm:$0xff]
                %1687 = vst [vmem:[%s1671 + $0x70] sm:$0xff] %v1686
              $region181: #{gqa_forward.4} parent=175 // loop_footer
                %s1669 = sadd.s32 1, %s1665
              $region182: #{gqa_forward.4} parent=175 // loop_footer_branch
                %1664 = sbr.rel target = $region178
              $region183: #{gqa_forward.4} parent=175 // loop_exit
                _
            $region176: #{gqa_forward.4} parent=167 // pred_fallthru
              _
          $region168: #{gqa_forward.4} parent=163 // pred_fallthru
            _
          %1716 = vnop
        $region164: #{gqa_forward.4} parent=139 // pred_fallthru
          _
      $region140: #{gqa_forward.4} parent=5 // pred_fallthru
        _
      %p1717 = scmp.le.s32.totalorder 2, %s9
      // Predicated region
      $region199: #{gqa_forward.4} parent=5 // pred_check
        %p1718 = pneg %p1717
      $region200: #{gqa_forward.4} parent=5 // pred_check_branch
        %1720 = sbr.rel (%p1718) target = $region202
      $region201: #{gqa_forward.4} parent=5 // pred_region
        %s1721 = ssub.s32 %s9, 2
        // Predicated region
        $region203: #{gqa_forward.4} parent=201 // pred_check
          %p1722 = pneg %p162
        $region204: #{gqa_forward.4} parent=201 // pred_check_branch
          %1724 = sbr.rel (%p1722) target = $region206
        $region205: #{gqa_forward.4} parent=201 // pred_region
          %s1725 = sand.u32 %s147, 1
          %s1726 = sand.u32 %s147, 1
          %s1727 = smul.addr %s1726, 64
          %s1728 = scalar_lea.vmem [#allocation9], %s1727
        $region206: #{gqa_forward.4} parent=201 // pred_fallthru
          _
      $region202: #{gqa_forward.4} parent=5 // pred_fallthru
        _
    $region6: #{gqa_forward.4} parent=1 // loop_footer
      %s13 = sadd.s32 1, %s9
    $region7: #{gqa_forward.4} parent=1 // loop_footer_branch
      %8 = sbr.rel target = $region3
    $region8: #{gqa_forward.4} parent=1 // loop_exit
      _

// kernel: gqa_forward.5
$region0: #{gqa_forward.5}
  #allocation0 [shape = 'u32[]', space=smem, size = 0x4, offset = 0x4, fixed_abs, tag = 'smem constant byte address 0x4 - core index']
  #allocation1 [shape = 'u32[144,128]{1,0:T(1,128)}', space=vmem, size = 0x12000, scoped, tag = 'internal scratch']
  #allocation2 [shape = 'f32[128,512]{1,0:T(8,128)}', space=vmem, size = 0x40000, scoped, tag = 'scratch operand']
  %s0 = inlined_call_operand.vmem [shape: bf16[128,512], index: 0, kind: input, shape index: {}]
  %s1 = inlined_call_operand.vmem [shape: bf16[512,512], index: 1, kind: input, shape index: {}]
  %s2 = inlined_call_operand.vmem [shape: f32[1,512], index: 2, kind: input, shape index: {}]
  %s3 = inlined_call_operand.hbm [shape: f32[128,512], index: 3, kind: output, shape index: {}]
  %s4 = sld [smem:[#allocation0]]
  $region30: #{gqa_forward.5} parent=0
    _
  %s6 = ssub.s32 1, %s4
  %s7 = scalar_select 0, %s6, %s4
  $region1: #{gqa_forward.5} parent=0
    #allocation3 [shape = 'u8[262144]{0}', space=vmem, size = 0x40000, scoped, tag = 'output window, operand 0, single buffered']
    #allocation4 [shape = 's32[1]{0}', space=sflag, size = 0x4, scoped, tag = 'scoped memory for gqa_forward.5']
    %8 = vsyncpa [#allocation4], 0
    // Predicated region
    $region2: #{gqa_forward.5} parent=1 // pred_check
      _
    $region3: #{gqa_forward.5} parent=1 // pred_check_branch
      %10 = sbr.rel (0) target = $region5
    $region4: #{gqa_forward.5} parent=1 // pred_region
      _
    $region5: #{gqa_forward.5} parent=1 // pred_fallthru
      _
    // Predicated region
    $region6: #{gqa_forward.5} parent=1 // pred_check
      _
    $region7: #{gqa_forward.5} parent=1 // pred_check_branch
      %12 = sbr.rel (0) target = $region9
    $region8: #{gqa_forward.5} parent=1 // pred_region
      _
    $region9: #{gqa_forward.5} parent=1 // pred_fallthru
      _
    // Predicated region
    $region10: #{gqa_forward.5} parent=1 // pred_check
      _
    $region11: #{gqa_forward.5} parent=1 // pred_check_branch
      %14 = sbr.rel (0) target = $region13
    $region12: #{gqa_forward.5} parent=1 // pred_region
      _
    $region13: #{gqa_forward.5} parent=1 // pred_fallthru
      _
    %p15 = scmp.eq.s32.totalorder 0, 0
    // Predicated region
    $region14: #{gqa_forward.5} parent=1 // pred_check
      %p16 = pneg %p15
    $region15: #{gqa_forward.5} parent=1 // pred_check_branch
      %18 = sbr.rel (%p16) target = $region17
    $region16: #{gqa_forward.5} parent=1 // pred_region
      %19 = vst [vmem:[#allocation2] sm:$0xff] 0.0
      %20 = vst [vmem:[#allocation2 + $0x8] sm:$0xff] 0.0
      %21 = vst [vmem:[#allocation2 + $0x10] sm:$0xff] 0.0
      %22 = vst [vmem:[#allocation2 + $0x18] sm:$0xff] 0.0
      %23 = vst [vmem:[#allocation2 + $0x20] sm:$0xff] 0.0
      %24 = vst [vmem:[#allocation2 + $0x28] sm:$0xff] 0.0
      %25 = vst [vmem:[#allocation2 + $0x30] sm:$0xff] 0.0
      %26 = vst [vmem:[#allocation2 + $0x38] sm:$0xff] 0.0
      %27 = vst [vmem:[#allocation2 + $0x40] sm:$0xff] 0.0
      %28 = vst [vmem:[#allocation2 + $0x48] sm:$0xff] 0.0
      %29 = vst [vmem:[#allocation2 + $0x50] sm:$0xff] 0.0
      %30 = vst [vmem:[#allocation2 + $0x58] sm:$0xff] 0.0
      %31 = vst [vmem:[#allocation2 + $0x60] sm:$0xff] 0.0
      %32 = vst [vmem:[#allocation2 + $0x68] sm:$0xff] 0.0
      %33 = vst [vmem:[#allocation2 + $0x70] sm:$0xff] 0.0
      %34 = vst [vmem:[#allocation2 + $0x78] sm:$0xff] 0.0
      %35 = vst [vmem:[#allocation2 + $0x80] sm:$0xff] 0.0
      %36 = vst [vmem:[#allocation2 + $0x88] sm:$0xff] 0.0
      %37 = vst [vmem:[#allocation2 + $0x90] sm:$0xff] 0.0
      %38 = vst [vmem:[#allocation2 + $0x98] sm:$0xff] 0.0
      %39 = vst [vmem:[#allocation2 + $0xa0] sm:$0xff] 0.0
      %40 = vst [vmem:[#allocation2 + $0xa8] sm:$0xff] 0.0
      %41 = vst [vmem:[#allocation2 + $0xb0] sm:$0xff] 0.0
      %42 = vst [vmem:[#allocation2 + $0xb8] sm:$0xff] 0.0
      %43 = vst [vmem:[#allocation2 + $0xc0] sm:$0xff] 0.0
      %44 = vst [vmem:[#allocation2 + $0xc8] sm:$0xff] 0.0
      %45 = vst [vmem:[#allocation2 + $0xd0] sm:$0xff] 0.0
      %46 = vst [vmem:[#allocation2 + $0xd8] sm:$0xff] 0.0
      %47 = vst [vmem:[#allocation2 + $0xe0] sm:$0xff] 0.0
      %48 = vst [vmem:[#allocation2 + $0xe8] sm:$0xff] 0.0
      %49 = vst [vmem:[#allocation2 + $0xf0] sm:$0xff] 0.0
      %50 = vst [vmem:[#allocation2 + $0xf8] sm:$0xff] 0.0
      %51 = vst [vmem:[#allocation2 + $0x100] sm:$0xff] 0.0
      %52 = vst [vmem:[#allocation2 + $0x108] sm:$0xff] 0.0
      %53 = vst [vmem:[#allocation2 + $0x110] sm:$0xff] 0.0
      %54 = vst [vmem:[#allocation2 + $0x118] sm:$0xff] 0.0
      %55 = vst [vmem:[#allocation2 + $0x120] sm:$0xff] 0.0
      %56 = vst [vmem:[#allocation2 + $0x128] sm:$0xff] 0.0
      %57 = vst [vmem:[#allocation2 + $0x130] sm:$0xff] 0.0
      %58 = vst [vmem:[#allocation2 + $0x138] sm:$0xff] 0.0
      %59 = vst [vmem:[#allocation2 + $0x140] sm:$0xff] 0.0
      %60 = vst [vmem:[#allocation2 + $0x148] sm:$0xff] 0.0
      %61 = vst [vmem:[#allocation2 + $0x150] sm:$0xff] 0.0
      %62 = vst [vmem:[#allocation2 + $0x158] sm:$0xff] 0.0
      %63 = vst [vmem:[#allocation2 + $0x160] sm:$0xff] 0.0
      %64 = vst [vmem:[#allocation2 + $0x168] sm:$0xff] 0.0
      %65 = vst [vmem:[#allocation2 + $0x170] sm:$0xff] 0.0
      %66 = vst [vmem:[#allocation2 + $0x178] sm:$0xff] 0.0
      %67 = vst [vmem:[#allocation2 + $0x180] sm:$0xff] 0.0
      %68 = vst [vmem:[#allocation2 + $0x188] sm:$0xff] 0.0
      %69 = vst [vmem:[#allocation2 + $0x190] sm:$0xff] 0.0
      %70 = vst [vmem:[#allocation2 + $0x198] sm:$0xff] 0.0
      %71 = vst [vmem:[#allocation2 + $0x1a0] sm:$0xff] 0.0
      %72 = vst [vmem:[#allocation2 + $0x1a8] sm:$0xff] 0.0
      %73 = vst [vmem:[#allocation2 + $0x1b0] sm:$0xff] 0.0
      %74 = vst [vmem:[#allocation2 + $0x1b8] sm:$0xff] 0.0
      %75 = vst [vmem:[#allocation2 + $0x1c0] sm:$0xff] 0.0
      %76 = vst [vmem:[#allocation2 + $0x1c8] sm:$0xff] 0.0
      %77 = vst [vmem:[#allocation2 + $0x1d0] sm:$0xff] 0.0
      %78 = vst [vmem:[#allocation2 + $0x1d8] sm:$0xff] 0.0
      %79 = vst [vmem:[#allocation2 + $0x1e0] sm:$0xff] 0.0
      %80 = vst [vmem:[#allocation2 + $0x1e8] sm:$0xff] 0.0
      %81 = vst [vmem:[#allocation2 + $0x1f0] sm:$0xff] 0.0
      %82 = vst [vmem:[#allocation2 + $0x1f8] sm:$0xff] 0.0
    $region17: #{gqa_forward.5} parent=1 // pred_fallthru
      _
    %v83 = vld [vmem:[#allocation2] sm:$0xff]
    %v84 = vld [vmem:[#allocation2 + $0x8] sm:$0xff]
    %v85 = vld [vmem:[#allocation2 + $0x10] sm:$0xff]
    %v86 = vld [vmem:[#allocation2 + $0x18] sm:$0xff]
    %v87 = vld [vmem:[#allocation2 + $0x20] sm:$0xff]
    %v88 = vld [vmem:[#allocation2 + $0x28] sm:$0xff]
    %v89 = vld [vmem:[#allocation2 + $0x30] sm:$0xff]
    %v90 = vld [vmem:[#allocation2 + $0x38] sm:$0xff]
    %v91 = vld [vmem:[#allocation2 + $0x40] sm:$0xff]
    %v92 = vld [vmem:[#allocation2 + $0x48] sm:$0xff]
    %v93 = vld [vmem:[#allocation2 + $0x50] sm:$0xff]
    %v94 = vld [vmem:[#allocation2 + $0x58] sm:$0xff]
    %v95 = vld [vmem:[#allocation2 + $0x60] sm:$0xff]
    %v96 = vld [vmem:[#allocation2 + $0x68] sm:$0xff]
    %v97 = vld [vmem:[#allocation2 + $0x70] sm:$0xff]
    %v98 = vld [vmem:[#allocation2 + $0x78] sm:$0xff]
    %v99 = vld [vmem:[#allocation2 + $0x80] sm:$0xff]
    %v100 = vld [vmem:[#allocation2 + $0x88] sm:$0xff]
    %v101 = vld [vmem:[#allocation2 + $0x90] sm:$0xff]
    %v102 = vld [vmem:[#allocation2 + $0x98] sm:$0xff]
    %v103 = vld [vmem:[#allocation2 + $0xa0] sm:$0xff]
    %v104 = vld [vmem:[#allocation2 + $0xa8] sm:$0xff]
    %v105 = vld [vmem:[#allocation2 + $0xb0] sm:$0xff]
    %v106 = vld [vmem:[#allocation2 + $0xb8] sm:$0xff]
    %v107 = vld [vmem:[#allocation2 + $0xc0] sm:$0xff]
    %v108 = vld [vmem:[#allocation2 + $0xc8] sm:$0xff]
    %v109 = vld [vmem:[#allocation2 + $0xd0] sm:$0xff]
    %v110 = vld [vmem:[#allocation2 + $0xd8] sm:$0xff]
    %v111 = vld [vmem:[#allocation2 + $0xe0] sm:$0xff]
    %v112 = vld [vmem:[#allocation2 + $0xe8] sm:$0xff]
    %v113 = vld [vmem:[#allocation2 + $0xf0] sm:$0xff]
    %v114 = vld [vmem:[#allocation2 + $0xf8] sm:$0xff]
    %v115 = vld [vmem:[#allocation2 + $0x100] sm:$0xff]
    %v116 = vld [vmem:[#allocation2 + $0x108] sm:$0xff]
    %v117 = vld [vmem:[#allocation2 + $0x110] sm:$0xff]
    %v118 = vld [vmem:[#allocation2 + $0x118] sm:$0xff]
    %v119 = vld [vmem:[#allocation2 + $0x120] sm:$0xff]
    %v120 = vld [vmem:[#allocation2 + $0x128] sm:$0xff]
    %v121 = vld [vmem:[#allocation2 + $0x130] sm:$0xff]
    %v122 = vld [vmem:[#allocation2 + $0x138] sm:$0xff]
    %v123 = vld [vmem:[#allocation2 + $0x140] sm:$0xff]
    %v124 = vld [vmem:[#allocation2 + $0x148] sm:$0xff]
    %v125 = vld [vmem:[#allocation2 + $0x150] sm:$0xff]
    %v126 = vld [vmem:[#allocation2 + $0x158] sm:$0xff]
    %v127 = vld [vmem:[#allocation2 + $0x160] sm:$0xff]
    %v128 = vld [vmem:[#allocation2 + $0x168] sm:$0xff]
    %v129 = vld [vmem:[#allocation2 + $0x170] sm:$0xff]
    %v130 = vld [vmem:[#allocation2 + $0x178] sm:$0xff]
    %v131 = vld [vmem:[#allocation2 + $0x180] sm:$0xff]
    %v132 = vld [vmem:[#allocation2 + $0x188] sm:$0xff]
    %v133 = vld [vmem:[#allocation2 + $0x190] sm:$0xff]
    %v134 = vld [vmem:[#allocation2 + $0x198] sm:$0xff]
    %v135 = vld [vmem:[#allocation2 + $0x1a0] sm:$0xff]
    %v136 = vld [vmem:[#allocation2 + $0x1a8] sm:$0xff]
    %v137 = vld [vmem:[#allocation2 + $0x1b0] sm:$0xff]
    %v138 = vld [vmem:[#allocation2 + $0x1b8] sm:$0xff]
    %v139 = vld [vmem:[#allocation2 + $0x1c0] sm:$0xff]
    %v140 = vld [vmem:[#allocation2 + $0x1c8] sm:$0xff]
    %v141 = vld [vmem:[#allocation2 + $0x1d0] sm:$0xff]
    %v142 = vld [vmem:[#allocation2 + $0x1d8] sm:$0xff]
    %v143 = vld [vmem:[#allocation2 + $0x1e0] sm:$0xff]
    %v144 = vld [vmem:[#allocation2 + $0x1e8] sm:$0xff]
    %v145 = vld [vmem:[#allocation2 + $0x1f0] sm:$0xff]
    %v146 = vld [vmem:[#allocation2 + $0x1f8] sm:$0xff]
    %v147 = vld [vmem:[%s0] sm:$0xff]
    %v148 = vld [vmem:[%s0 + $0x8] sm:$0xff]
    %v149 = vld [vmem:[%s0 + $0x10] sm:$0xff]
    %v150 = vld [vmem:[%s0 + $0x18] sm:$0xff]
    %v151 = vld [vmem:[%s0 + $0x20] sm:$0xff]
    %v152 = vld [vmem:[%s0 + $0x28] sm:$0xff]
    %v153 = vld [vmem:[%s0 + $0x30] sm:$0xff]
    %v154 = vld [vmem:[%s0 + $0x38] sm:$0xff]
    %v155 = vld [vmem:[%s0 + $0x40] sm:$0xff]
    %v156 = vld [vmem:[%s0 + $0x48] sm:$0xff]
    %v157 = vld [vmem:[%s0 + $0x50] sm:$0xff]
    %v158 = vld [vmem:[%s0 + $0x58] sm:$0xff]
    %v159 = vld [vmem:[%s0 + $0x60] sm:$0xff]
    %v160 = vld [vmem:[%s0 + $0x68] sm:$0xff]
    %v161 = vld [vmem:[%s0 + $0x70] sm:$0xff]
    %v162 = vld [vmem:[%s0 + $0x78] sm:$0xff]
    %v163 = vld [vmem:[%s0 + $0x80] sm:$0xff]
    %v164 = vld [vmem:[%s0 + $0x88] sm:$0xff]
    %v165 = vld [vmem:[%s0 + $0x90] sm:$0xff]
    %v166 = vld [vmem:[%s0 + $0x98] sm:$0xff]
    %v167 = vld [vmem:[%s0 + $0xa0] sm:$0xff]
    %v168 = vld [vmem:[%s0 + $0xa8] sm:$0xff]
    %v169 = vld [vmem:[%s0 + $0xb0] sm:$0xff]
    %v170 = vld [vmem:[%s0 + $0xb8] sm:$0xff]
    %v171 = vld [vmem:[%s0 + $0xc0] sm:$0xff]
    %v172 = vld [vmem:[%s0 + $0xc8] sm:$0xff]
    %v173 = vld [vmem:[%s0 + $0xd0] sm:$0xff]
    %v174 = vld [vmem:[%s0 + $0xd8] sm:$0xff]
    %v175 = vld [vmem:[%s0 + $0xe0] sm:$0xff]
    %v176 = vld [vmem:[%s0 + $0xe8] sm:$0xff]
    %v177 = vld [vmem:[%s0 + $0xf0] sm:$0xff]
    %v178 = vld [vmem:[%s0 + $0xf8] sm:$0xff]
    %v179 = vld [vmem:[%s1] sm:$0xff]
    %v180 = vld [vmem:[%s1 + $0x8] sm:$0xff]
    %v181 = vld [vmem:[%s1 + $0x10] sm:$0xff]
    %v182 = vld [vmem:[%s1 + $0x18] sm:$0xff]
    %v183 = vld [vmem:[%s1 + $0x20] sm:$0xff]
    %v184 = vld [vmem:[%s1 + $0x28] sm:$0xff]
    %v185 = vld [vmem:[%s1 + $0x30] sm:$0xff]
    %v186 = vld [vmem:[%s1 + $0x38] sm:$0xff]
    %v187 = vld [vmem:[%s1 + $0x40] sm:$0xff]
    %v188 = vld [vmem:[%s1 + $0x48] sm:$0xff]
    %v189 = vld [vmem:[%s1 + $0x50] sm:$0xff]
    %v190 = vld [vmem:[%s1 + $0x58] sm:$0xff]
    %v191 = vld [vmem:[%s1 + $0x60] sm:$0xff]
    %v192 = vld [vmem:[%s1 + $0x68] sm:$0xff]
    %v193 = vld [vmem:[%s1 + $0x70] sm:$0xff]
    %v194 = vld [vmem:[%s1 + $0x78] sm:$0xff]
    %v195 = vld [vmem:[%s1 + $0x80] sm:$0xff]
    %v196 = vld [vmem:[%s1 + $0x88] sm:$0xff]
    %v197 = vld [vmem:[%s1 + $0x90] sm:$0xff]
    %v198 = vld [vmem:[%s1 + $0x98] sm:$0xff]
    %v199 = vld [vmem:[%s1 + $0xa0] sm:$0xff]
    %v200 = vld [vmem:[%s1 + $0xa8] sm:$0xff]
    %v201 = vld [vmem:[%s1 + $0xb0] sm:$0xff]
    %v202 = vld [vmem:[%s1 + $0xb8] sm:$0xff]
    %v203 = vld [vmem:[%s1 + $0xc0] sm:$0xff]
    %v204 = vld [vmem:[%s1 + $0xc8] sm:$0xff]
    %v205 = vld [vmem:[%s1 + $0xd0] sm:$0xff]
    %v206 = vld [vmem:[%s1 + $0xd8] sm:$0xff]
    %v207 = vld [vmem:[%s1 + $0xe0] sm:$0xff]
    %v208 = vld [vmem:[%s1 + $0xe8] sm:$0xff]
    %v209 = vld [vmem:[%s1 + $0xf0] sm:$0xff]
    %v210 = vld [vmem:[%s1 + $0xf8] sm:$0xff]
    %v211 = vld [vmem:[%s1 + $0x100] sm:$0xff]
    %v212 = vld [vmem:[%s1 + $0x108] sm:$0xff]
    %v213 = vld [vmem:[%s1 + $0x110] sm:$0xff]
    %v214 = vld [vmem:[%s1 + $0x118] sm:$0xff]
    %v215 = vld [vmem:[%s1 + $0x120] sm:$0xff]
    %v216 = vld [vmem:[%s1 + $0x128] sm:$0xff]
    %v217 = vld [vmem:[%s1 + $0x130] sm:$0xff]
    %v218 = vld [vmem:[%s1 + $0x138] sm:$0xff]
    %v219 = vld [vmem:[%s1 + $0x140] sm:$0xff]
    %v220 = vld [vmem:[%s1 + $0x148] sm:$0xff]
    %v221 = vld [vmem:[%s1 + $0x150] sm:$0xff]
    %v222 = vld [vmem:[%s1 + $0x158] sm:$0xff]
    %v223 = vld [vmem:[%s1 + $0x160] sm:$0xff]
    %v224 = vld [vmem:[%s1 + $0x168] sm:$0xff]
    %v225 = vld [vmem:[%s1 + $0x170] sm:$0xff]
    %v226 = vld [vmem:[%s1 + $0x178] sm:$0xff]
    %v227 = vld [vmem:[%s1 + $0x180] sm:$0xff]
    %v228 = vld [vmem:[%s1 + $0x188] sm:$0xff]
    %v229 = vld [vmem:[%s1 + $0x190] sm:$0xff]
    %v230 = vld [vmem:[%s1 + $0x198] sm:$0xff]
    %v231 = vld [vmem:[%s1 + $0x1a0] sm:$0xff]
    %v232 = vld [vmem:[%s1 + $0x1a8] sm:$0xff]
    %v233 = vld [vmem:[%s1 + $0x1b0] sm:$0xff]
    %v234 = vld [vmem:[%s1 + $0x1b8] sm:$0xff]
    %v235 = vld [vmem:[%s1 + $0x1c0] sm:$0xff]
    %v236 = vld [vmem:[%s1 + $0x1c8] sm:$0xff]
    %v237 = vld [vmem:[%s1 + $0x1d0] sm:$0xff]
    %v238 = vld [vmem:[%s1 + $0x1d8] sm:$0xff]
    %v239 = vld [vmem:[%s1 + $0x1e0] sm:$0xff]
    %v240 = vld [vmem:[%s1 + $0x1e8] sm:$0xff]
    %v241 = vld [vmem:[%s1 + $0x1f0] sm:$0xff]
    %v242 = vld [vmem:[%s1 + $0x1f8] sm:$0xff]
    %v243 = vld [vmem:[%s1 + $0x200] sm:$0xff]
    %v244 = vld [vmem:[%s1 + $0x208] sm:$0xff]
    %v245 = vld [vmem:[%s1 + $0x210] sm:$0xff]
    %v246 = vld [vmem:[%s1 + $0x218] sm:$0xff]
    %v247 = vld [vmem:[%s1 + $0x220] sm:$0xff]
    %v248 = vld [vmem:[%s1 + $0x228] sm:$0xff]
    %v249 = vld [vmem:[%s1 + $0x230] sm:$0xff]
    %v250 = vld [vmem:[%s1 + $0x238] sm:$0xff]
    %v251 = vld [vmem:[%s1 + $0x240] sm:$0xff]
    %v252 = vld [vmem:[%s1 + $0x248] sm:$0xff]
    %v253 = vld [vmem:[%s1 + $0x250] sm:$0xff]
    %v254 = vld [vmem:[%s1 + $0x258] sm:$0xff]
    %v255 = vld [vmem:[%s1 + $0x260] sm:$0xff]
    %v256 = vld [vmem:[%s1 + $0x268] sm:$0xff]
    %v257 = vld [vmem:[%s1 + $0x270] sm:$0xff]
    %v258 = vld [vmem:[%s1 + $0x278] sm:$0xff]
    %v259 = vld [vmem:[%s1 + $0x280] sm:$0xff]
    %v260 = vld [vmem:[%s1 + $0x288] sm:$0xff]
    %v261 = vld [vmem:[%s1 + $0x290] sm:$0xff]
    %v262 = vld [vmem:[%s1 + $0x298] sm:$0xff]
    %v263 = vld [vmem:[%s1 + $0x2a0] sm:$0xff]
    %v264 = vld [vmem:[%s1 + $0x2a8] sm:$0xff]
    %v265 = vld [vmem:[%s1 + $0x2b0] sm:$0xff]
    %v266 = vld [vmem:[%s1 + $0x2b8] sm:$0xff]
    %v267 = vld [vmem:[%s1 + $0x2c0] sm:$0xff]
    %v268 = vld [vmem:[%s1 + $0x2c8] sm:$0xff]
    %v269 = vld [vmem:[%s1 + $0x2d0] sm:$0xff]
    %v270 = vld [vmem:[%s1 + $0x2d8] sm:$0xff]
    %v271 = vld [vmem:[%s1 + $0x2e0] sm:$0xff]
    %v272 = vld [vmem:[%s1 + $0x2e8] sm:$0xff]
    %v273 = vld [vmem:[%s1 + $0x2f0] sm:$0xff]
    %v274 = vld [vmem:[%s1 + $0x2f8] sm:$0xff]
    %v275 = vld [vmem:[%s1 + $0x300] sm:$0xff]
    %v276 = vld [vmem:[%s1 + $0x308] sm:$0xff]
    %v277 = vld [vmem:[%s1 + $0x310] sm:$0xff]
    %v278 = vld [vmem:[%s1 + $0x318] sm:$0xff]
    %v279 = vld [vmem:[%s1 + $0x320] sm:$0xff]
    %v280 = vld [vmem:[%s1 + $0x328] sm:$0xff]
    %v281 = vld [vmem:[%s1 + $0x330] sm:$0xff]
    %v282 = vld [vmem:[%s1 + $0x338] sm:$0xff]
    %v283 = vld [vmem:[%s1 + $0x340] sm:$0xff]
    %v284 = vld [vmem:[%s1 + $0x348] sm:$0xff]
    %v285 = vld [vmem:[%s1 + $0x350] sm:$0xff]
    %v286 = vld [vmem:[%s1 + $0x358] sm:$0xff]
    %v287 = vld [vmem:[%s1 + $0x360] sm:$0xff]
    %v288 = vld [vmem:[%s1 + $0x368] sm:$0xff]
    %v289 = vld [vmem:[%s1 + $0x370] sm:$0xff]
    %v290 = vld [vmem:[%s1 + $0x378] sm:$0xff]
    %v291 = vld [vmem:[%s1 + $0x380] sm:$0xff]
    %v292 = vld [vmem:[%s1 + $0x388] sm:$0xff]
    %v293 = vld [vmem:[%s1 + $0x390] sm:$0xff]
    %v294 = vld [vmem:[%s1 + $0x398] sm:$0xff]
    %v295 = vld [vmem:[%s1 + $0x3a0] sm:$0xff]
    %v296 = vld [vmem:[%s1 + $0x3a8] sm:$0xff]
    %v297 = vld [vmem:[%s1 + $0x3b0] sm:$0xff]
    %v298 = vld [vmem:[%s1 + $0x3b8] sm:$0xff]
    %v299 = vld [vmem:[%s1 + $0x3c0] sm:$0xff]
    %v300 = vld [vmem:[%s1 + $0x3c8] sm:$0xff]
    %v301 = vld [vmem:[%s1 + $0x3d0] sm:$0xff]
    %v302 = vld [vmem:[%s1 + $0x3d8] sm:$0xff]
    %v303 = vld [vmem:[%s1 + $0x3e0] sm:$0xff]
    %v304 = vld [vmem:[%s1 + $0x3e8] sm:$0xff]
    %v305 = vld [vmem:[%s1 + $0x3f0] sm:$0xff]
    %v306 = vld [vmem:[%s1 + $0x3f8] sm:$0xff]
    %v339 = vunpack.c.l.b16 %v147
    %v340 = vunpack.c.h.b16 %v147
    %v341 = vunpack.c.l.b16 %v148
    %v342 = vunpack.c.h.b16 %v148
    %v343 = vunpack.c.l.b16 %v149
    %v344 = vunpack.c.h.b16 %v149
    %v345 = vunpack.c.l.b16 %v150
    %v346 = vunpack.c.h.b16 %v150
    %v347 = vunpack.c.l.b16 %v151
    %v348 = vunpack.c.h.b16 %v151
    %v349 = vunpack.c.l.b16 %v152
    %v350 = vunpack.c.h.b16 %v152
    %v351 = vunpack.c.l.b16 %v153
    %v352 = vunpack.c.h.b16 %v153
    %v353 = vunpack.c.l.b16 %v154
    %v354 = vunpack.c.h.b16 %v154
    %v355 = vunpack.c.l.b16 %v155
    %v356 = vunpack.c.h.b16 %v155
    %v357 = vunpack.c.l.b16 %v156
    %v358 = vunpack.c.h.b16 %v156
    %v359 = vunpack.c.l.b16 %v157
    %v360 = vunpack.c.h.b16 %v157
    %v361 = vunpack.c.l.b16 %v158
    %v362 = vunpack.c.h.b16 %v158
    %v363 = vunpack.c.l.b16 %v159
    %v364 = vunpack.c.h.b16 %v159
    %v365 = vunpack.c.l.b16 %v160
    %v366 = vunpack.c.h.b16 %v160
    %v367 = vunpack.c.l.b16 %v161
    %v368 = vunpack.c.h.b16 %v161
    %v369 = vunpack.c.l.b16 %v162
    %v370 = vunpack.c.h.b16 %v162
    %v371 = vunpack.c.l.b16 %v163
    %v372 = vunpack.c.h.b16 %v163
    %v373 = vunpack.c.l.b16 %v164
    %v374 = vunpack.c.h.b16 %v164
    %v375 = vunpack.c.l.b16 %v165
    %v376 = vunpack.c.h.b16 %v165
    %v377 = vunpack.c.l.b16 %v166
    %v378 = vunpack.c.h.b16 %v166
    %v379 = vunpack.c.l.b16 %v167
    %v380 = vunpack.c.h.b16 %v167
    %v381 = vunpack.c.l.b16 %v168
    %v382 = vunpack.c.h.b16 %v168
    %v383 = vunpack.c.l.b16 %v169
    %v384 = vunpack.c.h.b16 %v169
    %v385 = vunpack.c.l.b16 %v170
    %v386 = vunpack.c.h.b16 %v170
    %v387 = vunpack.c.l.b16 %v171
    %v388 = vunpack.c.h.b16 %v171
    %v389 = vunpack.c.l.b16 %v172
    %v390 = vunpack.c.h.b16 %v172
    %v391 = vunpack.c.l.b16 %v173
    %v392 = vunpack.c.h.b16 %v173
    %v393 = vunpack.c.l.b16 %v174
    %v394 = vunpack.c.h.b16 %v174
    %v395 = vunpack.c.l.b16 %v175
    %v396 = vunpack.c.h.b16 %v175
    %v397 = vunpack.c.l.b16 %v176
    %v398 = vunpack.c.h.b16 %v176
    %v399 = vunpack.c.l.b16 %v177
    %v400 = vunpack.c.h.b16 %v177
    %v401 = vunpack.c.l.b16 %v178
    %v402 = vunpack.c.h.b16 %v178
    %v403 = vpack.c.b16 %v343, %v339
    %v404 = vpack.c.b16 %v344, %v340
    %v405 = vpack.c.b16 %v345, %v341
    %v406 = vpack.c.b16 %v346, %v342
    %v407 = vpack.c.b16 %v351, %v347
    %v408 = vpack.c.b16 %v352, %v348
    %v409 = vpack.c.b16 %v353, %v349
    %v410 = vpack.c.b16 %v354, %v350
    %v411 = vpack.c.b16 %v359, %v355
    %v412 = vpack.c.b16 %v360, %v356
    %v413 = vpack.c.b16 %v361, %v357
    %v414 = vpack.c.b16 %v362, %v358
    %v415 = vpack.c.b16 %v367, %v363
    %v416 = vpack.c.b16 %v368, %v364
    %v417 = vpack.c.b16 %v369, %v365
    %v418 = vpack.c.b16 %v370, %v366
    %v419 = vpack.c.b16 %v375, %v371
    %v420 = vpack.c.b16 %v376, %v372
    %v421 = vpack.c.b16 %v377, %v373
    %v422 = vpack.c.b16 %v378, %v374
    %v423 = vpack.c.b16 %v383, %v379
    %v424 = vpack.c.b16 %v384, %v380
    %v425 = vpack.c.b16 %v385, %v381
    %v426 = vpack.c.b16 %v386, %v382
    %v427 = vpack.c.b16 %v391, %v387
    %v428 = vpack.c.b16 %v392, %v388
    %v429 = vpack.c.b16 %v393, %v389
    %v430 = vpack.c.b16 %v394, %v390
    %v431 = vpack.c.b16 %v399, %v395
    %v432 = vpack.c.b16 %v400, %v396
    %v433 = vpack.c.b16 %v401, %v397
    %v434 = vpack.c.b16 %v402, %v398
    %v595 = vunpack.c.l.b16 %v179
    %v596 = vunpack.c.h.b16 %v179
    %v597 = vunpack.c.l.b16 %v180
    %v598 = vunpack.c.h.b16 %v180
    %v599 = vunpack.c.l.b16 %v181
    %v600 = vunpack.c.h.b16 %v181
    %v601 = vunpack.c.l.b16 %v182
    %v602 = vunpack.c.h.b16 %v182
    %v603 = vunpack.c.l.b16 %v183
    %v604 = vunpack.c.h.b16 %v183
    %v605 = vunpack.c.l.b16 %v184
    %v606 = vunpack.c.h.b16 %v184
    %v607 = vunpack.c.l.b16 %v185
    %v608 = vunpack.c.h.b16 %v185
    %v609 = vunpack.c.l.b16 %v186
    %v610 = vunpack.c.h.b16 %v186
    %v611 = vunpack.c.l.b16 %v187
    %v612 = vunpack.c.h.b16 %v187
    %v613 = vunpack.c.l.b16 %v188
    %v614 = vunpack.c.h.b16 %v188
    %v615 = vunpack.c.l.b16 %v189
    %v616 = vunpack.c.h.b16 %v189
    %v617 = vunpack.c.l.b16 %v190
    %v618 = vunpack.c.h.b16 %v190
    %v619 = vunpack.c.l.b16 %v191
    %v620 = vunpack.c.h.b16 %v191
    %v621 = vunpack.c.l.b16 %v192
    %v622 = vunpack.c.h.b16 %v192
    %v623 = vunpack.c.l.b16 %v193
    %v624 = vunpack.c.h.b16 %v193
    %v625 = vunpack.c.l.b16 %v194
    %v626 = vunpack.c.h.b16 %v194
    %v627 = vunpack.c.l.b16 %v195
    %v628 = vunpack.c.h.b16 %v195
    %v629 = vunpack.c.l.b16 %v196
    %v630 = vunpack.c.h.b16 %v196
    %v631 = vunpack.c.l.b16 %v197
    %v632 = vunpack.c.h.b16 %v197
    %v633 = vunpack.c.l.b16 %v198
    %v634 = vunpack.c.h.b16 %v198
    %v635 = vunpack.c.l.b16 %v199
    %v636 = vunpack.c.h.b16 %v199
    %v637 = vunpack.c.l.b16 %v200
    %v638 = vunpack.c.h.b16 %v200
    %v639 = vunpack.c.l.b16 %v201
    %v640 = vunpack.c.h.b16 %v201
    %v641 = vunpack.c.l.b16 %v202
    %v642 = vunpack.c.h.b16 %v202
    %v643 = vunpack.c.l.b16 %v203
    %v644 = vunpack.c.h.b16 %v203
    %v645 = vunpack.c.l.b16 %v204
    %v646 = vunpack.c.h.b16 %v204
    %v647 = vunpack.c.l.b16 %v205
    %v648 = vunpack.c.h.b16 %v205
    %v649 = vunpack.c.l.b16 %v206
    %v650 = vunpack.c.h.b16 %v206
    %v651 = vunpack.c.l.b16 %v207
    %v652 = vunpack.c.h.b16 %v207
    %v653 = vunpack.c.l.b16 %v208
    %v654 = vunpack.c.h.b16 %v208
    %v655 = vunpack.c.l.b16 %v209
    %v656 = vunpack.c.h.b16 %v209
    %v657 = vunpack.c.l.b16 %v210
    %v658 = vunpack.c.h.b16 %v210
    %v659 = vunpack.c.l.b16 %v211
    %v660 = vunpack.c.h.b16 %v211
    %v661 = vunpack.c.l.b16 %v212
    %v662 = vunpack.c.h.b16 %v212
    %v663 = vunpack.c.l.b16 %v213
    %v664 = vunpack.c.h.b16 %v213
    %v665 = vunpack.c.l.b16 %v214
    %v666 = vunpack.c.h.b16 %v214
    %v667 = vunpack.c.l.b16 %v215
    %v668 = vunpack.c.h.b16 %v215
    %v669 = vunpack.c.l.b16 %v216
    %v670 = vunpack.c.h.b16 %v216
    %v671 = vunpack.c.l.b16 %v217
    %v672 = vunpack.c.h.b16 %v217
    %v673 = vunpack.c.l.b16 %v218
    %v674 = vunpack.c.h.b16 %v218
    %v675 = vunpack.c.l.b16 %v219
    %v676 = vunpack.c.h.b16 %v219
    %v677 = vunpack.c.l.b16 %v220
    %v678 = vunpack.c.h.b16 %v220
    %v679 = vunpack.c.l.b16 %v221
    %v680 = vunpack.c.h.b16 %v221
    %v681 = vunpack.c.l.b16 %v222
    %v682 = vunpack.c.h.b16 %v222
    %v683 = vunpack.c.l.b16 %v223
    %v684 = vunpack.c.h.b16 %v223
    %v685 = vunpack.c.l.b16 %v224
    %v686 = vunpack.c.h.b16 %v224
    %v687 = vunpack.c.l.b16 %v225
    %v688 = vunpack.c.h.b16 %v225
    %v689 = vunpack.c.l.b16 %v226
    %v690 = vunpack.c.h.b16 %v226
    %v691 = vunpack.c.l.b16 %v227
    %v692 = vunpack.c.h.b16 %v227
    %v693 = vunpack.c.l.b16 %v228
    %v694 = vunpack.c.h.b16 %v228
    %v695 = vunpack.c.l.b16 %v229
    %v696 = vunpack.c.h.b16 %v229
    %v697 = vunpack.c.l.b16 %v230
    %v698 = vunpack.c.h.b16 %v230
    %v699 = vunpack.c.l.b16 %v231
    %v700 = vunpack.c.h.b16 %v231
    %v701 = vunpack.c.l.b16 %v232
    %v702 = vunpack.c.h.b16 %v232
    %v703 = vunpack.c.l.b16 %v233
    %v704 = vunpack.c.h.b16 %v233
    %v705 = vunpack.c.l.b16 %v234
    %v706 = vunpack.c.h.b16 %v234
    %v707 = vunpack.c.l.b16 %v235
    %v708 = vunpack.c.h.b16 %v235
    %v709 = vunpack.c.l.b16 %v236
    %v710 = vunpack.c.h.b16 %v236
    %v711 = vunpack.c.l.b16 %v237
    %v712 = vunpack.c.h.b16 %v237
    %v713 = vunpack.c.l.b16 %v238
    %v714 = vunpack.c.h.b16 %v238
    %v715 = vunpack.c.l.b16 %v239
    %v716 = vunpack.c.h.b16 %v239
    %v717 = vunpack.c.l.b16 %v240
    %v718 = vunpack.c.h.b16 %v240
    %v719 = vunpack.c.l.b16 %v241
    %v720 = vunpack.c.h.b16 %v241
    %v721 = vunpack.c.l.b16 %v242
    %v722 = vunpack.c.h.b16 %v242
    %v723 = vunpack.c.l.b16 %v243
    %v724 = vunpack.c.h.b16 %v243
    %v725 = vunpack.c.l.b16 %v244
    %v726 = vunpack.c.h.b16 %v244
    %v727 = vunpack.c.l.b16 %v245
    %v728 = vunpack.c.h.b16 %v245
    %v729 = vunpack.c.l.b16 %v246
    %v730 = vunpack.c.h.b16 %v246
    %v731 = vunpack.c.l.b16 %v247
    %v732 = vunpack.c.h.b16 %v247
    %v733 = vunpack.c.l.b16 %v248
    %v734 = vunpack.c.h.b16 %v248
    %v735 = vunpack.c.l.b16 %v249
    %v736 = vunpack.c.h.b16 %v249
    %v737 = vunpack.c.l.b16 %v250
    %v738 = vunpack.c.h.b16 %v250
    %v739 = vunpack.c.l.b16 %v251
    %v740 = vunpack.c.h.b16 %v251
    %v741 = vunpack.c.l.b16 %v252
    %v742 = vunpack.c.h.b16 %v252
    %v743 = vunpack.c.l.b16 %v253
    %v744 = vunpack.c.h.b16 %v253
    %v745 = vunpack.c.l.b16 %v254
    %v746 = vunpack.c.h.b16 %v254
    %v747 = vunpack.c.l.b16 %v255
    %v748 = vunpack.c.h.b16 %v255
    %v749 = vunpack.c.l.b16 %v256
    %v750 = vunpack.c.h.b16 %v256
    %v751 = vunpack.c.l.b16 %v257
    %v752 = vunpack.c.h.b16 %v257
    %v753 = vunpack.c.l.b16 %v258
    %v754 = vunpack.c.h.b16 %v258
    %v755 = vunpack.c.l.b16 %v259
    %v756 = vunpack.c.h.b16 %v259
    %v757 = vunpack.c.l.b16 %v260
    %v758 = vunpack.c.h.b16 %v260
    %v759 = vunpack.c.l.b16 %v261
    %v760 = vunpack.c.h.b16 %v261
    %v761 = vunpack.c.l.b16 %v262
    %v762 = vunpack.c.h.b16 %v262
    %v763 = vunpack.c.l.b16 %v263
    %v764 = vunpack.c.h.b16 %v263
    %v765 = vunpack.c.l.b16 %v264
    %v766 = vunpack.c.h.b16 %v264
    %v767 = vunpack.c.l.b16 %v265
    %v768 = vunpack.c.h.b16 %v265
    %v769 = vunpack.c.l.b16 %v266
    %v770 = vunpack.c.h.b16 %v266
    %v771 = vunpack.c.l.b16 %v267
    %v772 = vunpack.c.h.b16 %v267
    %v773 = vunpack.c.l.b16 %v268
    %v774 = vunpack.c.h.b16 %v268
    %v775 = vunpack.c.l.b16 %v269
    %v776 = vunpack.c.h.b16 %v269
    %v777 = vunpack.c.l.b16 %v270
    %v778 = vunpack.c.h.b16 %v270
    %v779 = vunpack.c.l.b16 %v271
    %v780 = vunpack.c.h.b16 %v271
    %v781 = vunpack.c.l.b16 %v272
    %v782 = vunpack.c.h.b16 %v272
    %v783 = vunpack.c.l.b16 %v273
    %v784 = vunpack.c.h.b16 %v273
    %v785 = vunpack.c.l.b16 %v274
    %v786 = vunpack.c.h.b16 %v274
    %v787 = vunpack.c.l.b16 %v275
    %v788 = vunpack.c.h.b16 %v275
    %v789 = vunpack.c.l.b16 %v276
    %v790 = vunpack.c.h.b16 %v276
    %v791 = vunpack.c.l.b16 %v277
    %v792 = vunpack.c.h.b16 %v277
    %v793 = vunpack.c.l.b16 %v278
    %v794 = vunpack.c.h.b16 %v278
    %v795 = vunpack.c.l.b16 %v279
    %v796 = vunpack.c.h.b16 %v279
    %v797 = vunpack.c.l.b16 %v280
    %v798 = vunpack.c.h.b16 %v280
    %v799 = vunpack.c.l.b16 %v281
    %v800 = vunpack.c.h.b16 %v281
    %v801 = vunpack.c.l.b16 %v282
    %v802 = vunpack.c.h.b16 %v282
    %v803 = vunpack.c.l.b16 %v283
    %v804 = vunpack.c.h.b16 %v283
    %v805 = vunpack.c.l.b16 %v284
    %v806 = vunpack.c.h.b16 %v284
    %v807 = vunpack.c.l.b16 %v285
    %v808 = vunpack.c.h.b16 %v285
    %v809 = vunpack.c.l.b16 %v286
    %v810 = vunpack.c.h.b16 %v286
    %v811 = vunpack.c.l.b16 %v287
    %v812 = vunpack.c.h.b16 %v287
    %v813 = vunpack.c.l.b16 %v288
    %v814 = vunpack.c.h.b16 %v288
    %v815 = vunpack.c.l.b16 %v289
    %v816 = vunpack.c.h.b16 %v289
    %v817 = vunpack.c.l.b16 %v290
    %v818 = vunpack.c.h.b16 %v290
    %v819 = vunpack.c.l.b16 %v291
    %v820 = vunpack.c.h.b16 %v291
    %v821 = vunpack.c.l.b16 %v292
    %v822 = vunpack.c.h.b16 %v292
    %v823 = vunpack.c.l.b16 %v293
    %v824 = vunpack.c.h.b16 %v293
    %v825 = vunpack.c.l.b16 %v294
    %v826 = vunpack.c.h.b16 %v294
    %v827 = vunpack.c.l.b16 %v295
    %v828 = vunpack.c.h.b16 %v295
    %v829 = vunpack.c.l.b16 %v296
    %v830 = vunpack.c.h.b16 %v296
    %v831 = vunpack.c.l.b16 %v297
    %v832 = vunpack.c.h.b16 %v297
    %v833 = vunpack.c.l.b16 %v298
    %v834 = vunpack.c.h.b16 %v298
    %v835 = vunpack.c.l.b16 %v299
    %v836 = vunpack.c.h.b16 %v299
    %v837 = vunpack.c.l.b16 %v300
    %v838 = vunpack.c.h.b16 %v300
    %v839 = vunpack.c.l.b16 %v301
    %v840 = vunpack.c.h.b16 %v301
    %v841 = vunpack.c.l.b16 %v302
    %v842 = vunpack.c.h.b16 %v302
    %v843 = vunpack.c.l.b16 %v303
    %v844 = vunpack.c.h.b16 %v303
    %v845 = vunpack.c.l.b16 %v304
    %v846 = vunpack.c.h.b16 %v304
    %v847 = vunpack.c.l.b16 %v305
    %v848 = vunpack.c.h.b16 %v305
    %v849 = vunpack.c.l.b16 %v306
    %v850 = vunpack.c.h.b16 %v306
    %v851 = vpack.c.b16 %v599, %v595
    %v852 = vpack.c.b16 %v600, %v596
    %v853 = vpack.c.b16 %v601, %v597
    %v854 = vpack.c.b16 %v602, %v598
    %v855 = vpack.c.b16 %v607, %v603
    %v856 = vpack.c.b16 %v608, %v604
    %v857 = vpack.c.b16 %v609, %v605
    %v858 = vpack.c.b16 %v610, %v606
    %v859 = vpack.c.b16 %v615, %v611
    %v860 = vpack.c.b16 %v616, %v612
    %v861 = vpack.c.b16 %v617, %v613
    %v862 = vpack.c.b16 %v618, %v614
    %v863 = vpack.c.b16 %v623, %v619
    %v864 = vpack.c.b16 %v624, %v620
    %v865 = vpack.c.b16 %v625, %v621
    %v866 = vpack.c.b16 %v626, %v622
    %v867 = vpack.c.b16 %v631, %v627
    %v868 = vpack.c.b16 %v632, %v628
    %v869 = vpack.c.b16 %v633, %v629
    %v870 = vpack.c.b16 %v634, %v630
    %v871 = vpack.c.b16 %v639, %v635
    %v872 = vpack.c.b16 %v640, %v636
    %v873 = vpack.c.b16 %v641, %v637
    %v874 = vpack.c.b16 %v642, %v638
    %v875 = vpack.c.b16 %v647, %v643
    %v876 = vpack.c.b16 %v648, %v644
    %v877 = vpack.c.b16 %v649, %v645
    %v878 = vpack.c.b16 %v650, %v646
    %v879 = vpack.c.b16 %v655, %v651
    %v880 = vpack.c.b16 %v656, %v652
    %v881 = vpack.c.b16 %v657, %v653
    %v882 = vpack.c.b16 %v658, %v654
    %v883 = vpack.c.b16 %v663, %v659
    %v884 = vpack.c.b16 %v664, %v660
    %v885 = vpack.c.b16 %v665, %v661
    %v886 = vpack.c.b16 %v666, %v662
    %v887 = vpack.c.b16 %v671, %v667
    %v888 = vpack.c.b16 %v672, %v668
    %v889 = vpack.c.b16 %v673, %v669
    %v890 = vpack.c.b16 %v674, %v670
    %v891 = vpack.c.b16 %v679, %v675
    %v892 = vpack.c.b16 %v680, %v676
    %v893 = vpack.c.b16 %v681, %v677
    %v894 = vpack.c.b16 %v682, %v678
    %v895 = vpack.c.b16 %v687, %v683
    %v896 = vpack.c.b16 %v688, %v684
    %v897 = vpack.c.b16 %v689, %v685
    %v898 = vpack.c.b16 %v690, %v686
    %v899 = vpack.c.b16 %v695, %v691
    %v900 = vpack.c.b16 %v696, %v692
    %v901 = vpack.c.b16 %v697, %v693
    %v902 = vpack.c.b16 %v698, %v694
    %v903 = vpack.c.b16 %v703, %v699
    %v904 = vpack.c.b16 %v704, %v700
    %v905 = vpack.c.b16 %v705, %v701
    %v906 = vpack.c.b16 %v706, %v702
    %v907 = vpack.c.b16 %v711, %v707
    %v908 = vpack.c.b16 %v712, %v708
    %v909 = vpack.c.b16 %v713, %v709
    %v910 = vpack.c.b16 %v714, %v710
    %v911 = vpack.c.b16 %v719, %v715
    %v912 = vpack.c.b16 %v720, %v716
    %v913 = vpack.c.b16 %v721, %v717
    %v914 = vpack.c.b16 %v722, %v718
    %v915 = vpack.c.b16 %v727, %v723
    %v916 = vpack.c.b16 %v728, %v724
    %v917 = vpack.c.b16 %v729, %v725
    %v918 = vpack.c.b16 %v730, %v726
    %v919 = vpack.c.b16 %v735, %v731
    %v920 = vpack.c.b16 %v736, %v732
    %v921 = vpack.c.b16 %v737, %v733
    %v922 = vpack.c.b16 %v738, %v734
    %v923 = vpack.c.b16 %v743, %v739
    %v924 = vpack.c.b16 %v744, %v740
    %v925 = vpack.c.b16 %v745, %v741
    %v926 = vpack.c.b16 %v746, %v742
    %v927 = vpack.c.b16 %v751, %v747
    %v928 = vpack.c.b16 %v752, %v748
    %v929 = vpack.c.b16 %v753, %v749
    %v930 = vpack.c.b16 %v754, %v750
    %v931 = vpack.c.b16 %v759, %v755
    %v932 = vpack.c.b16 %v760, %v756
    %v933 = vpack.c.b16 %v761, %v757
    %v934 = vpack.c.b16 %v762, %v758
    %v935 = vpack.c.b16 %v767, %v763
    %v936 = vpack.c.b16 %v768, %v764
    %v937 = vpack.c.b16 %v769, %v765
    %v938 = vpack.c.b16 %v770, %v766
    %v939 = vpack.c.b16 %v775, %v771
    %v940 = vpack.c.b16 %v776, %v772
    %v941 = vpack.c.b16 %v777, %v773
    %v942 = vpack.c.b16 %v778, %v774
    %v943 = vpack.c.b16 %v783, %v779
    %v944 = vpack.c.b16 %v784, %v780
    %v945 = vpack.c.b16 %v785, %v781
    %v946 = vpack.c.b16 %v786, %v782
    %v947 = vpack.c.b16 %v791, %v787
    %v948 = vpack.c.b16 %v792, %v788
    %v949 = vpack.c.b16 %v793, %v789
    %v950 = vpack.c.b16 %v794, %v790
    %v951 = vpack.c.b16 %v799, %v795
    %v952 = vpack.c.b16 %v800, %v796
    %v953 = vpack.c.b16 %v801, %v797
    %v954 = vpack.c.b16 %v802, %v798
    %v955 = vpack.c.b16 %v807, %v803
    %v956 = vpack.c.b16 %v808, %v804
    %v957 = vpack.c.b16 %v809, %v805
    %v958 = vpack.c.b16 %v810, %v806
    %v959 = vpack.c.b16 %v815, %v811
    %v960 = vpack.c.b16 %v816, %v812
    %v961 = vpack.c.b16 %v817, %v813
    %v962 = vpack.c.b16 %v818, %v814
    %v963 = vpack.c.b16 %v823, %v819
    %v964 = vpack.c.b16 %v824, %v820
    %v965 = vpack.c.b16 %v825, %v821
    %v966 = vpack.c.b16 %v826, %v822
    %v967 = vpack.c.b16 %v831, %v827
    %v968 = vpack.c.b16 %v832, %v828
    %v969 = vpack.c.b16 %v833, %v829
    %v970 = vpack.c.b16 %v834, %v830
    %v971 = vpack.c.b16 %v839, %v835
    %v972 = vpack.c.b16 %v840, %v836
    %v973 = vpack.c.b16 %v841, %v837
    %v974 = vpack.c.b16 %v842, %v838
    %v975 = vpack.c.b16 %v847, %v843
    %v976 = vpack.c.b16 %v848, %v844
    %v977 = vpack.c.b16 %v849, %v845
    %v978 = vpack.c.b16 %v850, %v846
    %1107 = vmatprep.subr.bf16.mxu0 %v852
    %1108 = vmatpush1.bf16.msra.mxu0 %v851
    %1109 = vmatprep.subr.bf16.mxu0 %v856
    %1110 = vmatpush1.bf16.msra.mxu0 %v855
    %1111 = vmatprep.subr.bf16.mxu0 %v860
    %1112 = vmatpush1.bf16.msra.mxu0 %v859
    %1113 = vmatprep.subr.bf16.mxu0 %v864
    %1114 = vmatpush1.bf16.msra.mxu0 %v863
    %1115 = vmatprep.subr.bf16.mxu0 %v868
    %1116 = vmatpush1.bf16.msra.mxu0 %v867
    %1117 = vmatprep.subr.bf16.mxu0 %v872
    %1118 = vmatpush1.bf16.msra.mxu0 %v871
    %1119 = vmatprep.subr.bf16.mxu0 %v876
    %1120 = vmatpush1.bf16.msra.mxu0 %v875
    %1121 = vmatprep.subr.bf16.mxu0 %v880
    %1122 = vmatpush1.bf16.msra.mxu0 %v879
    %1123 = vmatprep.subr.bf16.mxu0 %v884
    %1124 = vmatpush1.bf16.msra.mxu0 %v883
    %1125 = vmatprep.subr.bf16.mxu0 %v888
    %1126 = vmatpush1.bf16.msra.mxu0 %v887
    %1127 = vmatprep.subr.bf16.mxu0 %v892
    %1128 = vmatpush1.bf16.msra.mxu0 %v891
    %1129 = vmatprep.subr.bf16.mxu0 %v896
    %1130 = vmatpush1.bf16.msra.mxu0 %v895
    %1131 = vmatprep.subr.bf16.mxu0 %v900
    %1132 = vmatpush1.bf16.msra.mxu0 %v899
    %1133 = vmatprep.subr.bf16.mxu0 %v904
    %1134 = vmatpush1.bf16.msra.mxu0 %v903
    %1135 = vmatprep.subr.bf16.mxu0 %v908
    %1136 = vmatpush1.bf16.msra.mxu0 %v907
    %1137 = vmatprep.subr.bf16.mxu0 %v912
    %1138 = vmatpush1.bf16.msra.mxu0 %v911
    %1139 = vmatprep.mubr.bf16.mxu0 %v404
    %1140 = vmatmul.mubr.bf16.gmra.mrb[0].mxu0 %v403
    %v1141 = vpop.f32.mrb[0].mxu0
    %v1142 = vadd.f32 0.0, %v1141
    %v1143 = vpop.f32.mrb[0].mxu0
    %v1144 = vadd.f32 0.0, %v1143
    %v1145 = vpop.f32.mrb[0].mxu0
    %v1146 = vadd.f32 0.0, %v1145
    %v1147 = vpop.f32.mrb[0].mxu0
    %v1148 = vadd.f32 0.0, %v1147
    %1149 = vmatprep.mubr.bf16.mxu0 %v408
    %1150 = vmatmul.mubr.bf16.gmra.mrb[0].mxu0 %v407
    %v1151 = vpop.f32.mrb[0].mxu0
    %v1152 = vadd.f32 0.0, %v1151
    %v1153 = vpop.f32.mrb[0].mxu0
    %v1154 = vadd.f32 0.0, %v1153
    %v1155 = vpop.f32.mrb[0].mxu0
    %v1156 = vadd.f32 0.0, %v1155
    %v1157 = vpop.f32.mrb[0].mxu0
    %v1158 = vadd.f32 0.0, %v1157
    %1159 = vmatprep.mubr.bf16.mxu0 %v412
    %1160 = vmatmul.mubr.bf16.gmra.mrb[0].mxu0 %v411
    %v1161 = vpop.f32.mrb[0].mxu0
    %v1162 = vadd.f32 0.0, %v1161
    %v1163 = vpop.f32.mrb[0].mxu0
    %v1164 = vadd.f32 0.0, %v1163
    %v1165 = vpop.f32.mrb[0].mxu0
    %v1166 = vadd.f32 0.0, %v1165
    %v1167 = vpop.f32.mrb[0].mxu0
    %v1168 = vadd.f32 0.0, %v1167
    %1169 = vmatprep.mubr.bf16.mxu0 %v416
    %1170 = vmatmul.mubr.bf16.gmra.mrb[0].mxu0 %v415
    %v1171 = vpop.f32.mrb[0].mxu0
    %v1172 = vadd.f32 0.0, %v1171
    %v1173 = vpop.f32.mrb[0].mxu0
    %v1174 = vadd.f32 0.0, %v1173
    %v1175 = vpop.f32.mrb[0].mxu0
    %v1176 = vadd.f32 0.0, %v1175
    %v1177 = vpop.f32.mrb[0].mxu0
    %v1178 = vadd.f32 0.0, %v1177
    %1179 = vmatprep.mubr.bf16.mxu0 %v420
    %1180 = vmatmul.mubr.bf16.gmra.mrb[0].mxu0 %v419
    %v1181 = vpop.f32.mrb[0].mxu0
    %v1182 = vadd.f32 0.0, %v1181
    %v1183 = vpop.f32.mrb[0].mxu0
    %v1184 = vadd.f32 0.0, %v1183
    %v1185 = vpop.f32.mrb[0].mxu0
    %v1186 = vadd.f32 0.0, %v1185
    %v1187 = vpop.f32.mrb[0].mxu0
    %v1188 = vadd.f32 0.0, %v1187
    %1189 = vmatprep.mubr.bf16.mxu0 %v424
    %1190 = vmatmul.mubr.bf16.gmra.mrb[0].mxu0 %v423
    %v1191 = vpop.f32.mrb[0].mxu0
    %v1192 = vadd.f32 0.0, %v1191
    %v1193 = vpop.f32.mrb[0].mxu0
    %v1194 = vadd.f32 0.0, %v1193
    %v1195 = vpop.f32.mrb[0].mxu0
    %v1196 = vadd.f32 0.0, %v1195
    %v1197 = vpop.f32.mrb[0].mxu0
    %v1198 = vadd.f32 0.0, %v1197
    %1199 = vmatprep.mubr.bf16.mxu0 %v428
    %1200 = vmatmul.mubr.bf16.gmra.mrb[0].mxu0 %v427
    %v1201 = vpop.f32.mrb[0].mxu0
    %v1202 = vadd.f32 0.0, %v1201
    %v1203 = vpop.f32.mrb[0].mxu0
    %v1204 = vadd.f32 0.0, %v1203
    %v1205 = vpop.f32.mrb[0].mxu0
    %v1206 = vadd.f32 0.0, %v1205
    %v1207 = vpop.f32.mrb[0].mxu0
    %v1208 = vadd.f32 0.0, %v1207
    %1209 = vmatprep.mubr.bf16.mxu0 %v432
    %1210 = vmatmul.mubr.bf16.gmra.mrb[0].mxu0 %v431
    %v1211 = vpop.f32.mrb[0].mxu0
    %v1212 = vadd.f32 0.0, %v1211
    %v1213 = vpop.f32.mrb[0].mxu0
    %v1214 = vadd.f32 0.0, %v1213
    %v1215 = vpop.f32.mrb[0].mxu0
    %v1216 = vadd.f32 0.0, %v1215
    %v1217 = vpop.f32.mrb[0].mxu0
    %v1218 = vadd.f32 0.0, %v1217
    %1219 = vdwg.mxu0
    %1220 = vmatprep.subr.bf16.mxu0 %v916
    %1221 = vmatpush1.bf16.msra.mxu0 %v915
    %1222 = vmatprep.subr.bf16.mxu0 %v920
    %1223 = vmatpush1.bf16.msra.mxu0 %v919
    %1224 = vmatprep.subr.bf16.mxu0 %v924
    %1225 = vmatpush1.bf16.msra.mxu0 %v923
    %1226 = vmatprep.subr.bf16.mxu0 %v928
    %1227 = vmatpush1.bf16.msra.mxu0 %v927
    %1228 = vmatprep.subr.bf16.mxu0 %v932
    %1229 = vmatpush1.bf16.msra.mxu0 %v931
    %1230 = vmatprep.subr.bf16.mxu0 %v936
    %1231 = vmatpush1.bf16.msra.mxu0 %v935
    %1232 = vmatprep.subr.bf16.mxu0 %v940
    %1233 = vmatpush1.bf16.msra.mxu0 %v939
    %1234 = vmatprep.subr.bf16.mxu0 %v944
    %1235 = vmatpush1.bf16.msra.mxu0 %v943
    %1236 = vmatprep.subr.bf16.mxu0 %v948
    %1237 = vmatpush1.bf16.msra.mxu0 %v947
    %1238 = vmatprep.subr.bf16.mxu0 %v952
    %1239 = vmatpush1.bf16.msra.mxu0 %v951
    %1240 = vmatprep.subr.bf16.mxu0 %v956
    %1241 = vmatpush1.bf16.msra.mxu0 %v955
    %1242 = vmatprep.subr.bf16.mxu0 %v960
    %1243 = vmatpush1.bf16.msra.mxu0 %v959
    %1244 = vmatprep.subr.bf16.mxu0 %v964
    %1245 = vmatpush1.bf16.msra.mxu0 %v963
    %1246 = vmatprep.subr.bf16.mxu0 %v968
    %1247 = vmatpush1.bf16.msra.mxu0 %v967
    %1248 = vmatprep.subr.bf16.mxu0 %v972
    %1249 = vmatpush1.bf16.msra.mxu0 %v971
    %1250 = vmatprep.subr.bf16.mxu0 %v976
    %1251 = vmatpush1.bf16.msra.mxu0 %v975
    %1252 = vmatprep.mubr.bf16.mxu0 %v406
    %1253 = vmatmul.mubr.bf16.gmra.mrb[0].mxu0 %v405
    %v1254 = vpop.f32.mrb[0].mxu0
    %v1255 = vadd.f32 %v1142, %v1254
    %v1256 = vpop.f32.mrb[0].mxu0
    %v1257 = vadd.f32 %v1144, %v1256
    %v1258 = vpop.f32.mrb[0].mxu0
    %v1259 = vadd.f32 %v1146, %v1258
    %v1260 = vpop.f32.mrb[0].mxu0
    %v1261 = vadd.f32 %v1148, %v1260
    %1262 = vmatprep.mubr.bf16.mxu0 %v410
    %1263 = vmatmul.mubr.bf16.gmra.mrb[0].mxu0 %v409
    %v1264 = vpop.f32.mrb[0].mxu0
    %v1265 = vadd.f32 %v1152, %v1264
    %v1266 = vpop.f32.mrb[0].mxu0
    %v1267 = vadd.f32 %v1154, %v1266
    %v1268 = vpop.f32.mrb[0].mxu0
    %v1269 = vadd.f32 %v1156, %v1268
    %v1270 = vpop.f32.mrb[0].mxu0
    %v1271 = vadd.f32 %v1158, %v1270
    %1272 = vmatprep.mubr.bf16.mxu0 %v414
    %1273 = vmatmul.mubr.bf16.gmra.mrb[0].mxu0 %v413
    %v1274 = vpop.f32.mrb[0].mxu0
    %v1275 = vadd.f32 %v1162, %v1274
    %v1276 = vpop.f32.mrb[0].mxu0
    %v1277 = vadd.f32 %v1164, %v1276
    %v1278 = vpop.f32.mrb[0].mxu0
    %v1279 = vadd.f32 %v1166, %v1278
    %v1280 = vpop.f32.mrb[0].mxu0
    %v1281 = vadd.f32 %v1168, %v1280
    %1282 = vmatprep.mubr.bf16.mxu0 %v418
    %1283 = vmatmul.mubr.bf16.gmra.mrb[0].mxu0 %v417
    %v1284 = vpop.f32.mrb[0].mxu0
    %v1285 = vadd.f32 %v1172, %v1284
    %v1286 = vpop.f32.mrb[0].mxu0
    %v1287 = vadd.f32 %v1174, %v1286
    %v1288 = vpop.f32.mrb[0].mxu0
    %v1289 = vadd.f32 %v1176, %v1288
    %v1290 = vpop.f32.mrb[0].mxu0
    %v1291 = vadd.f32 %v1178, %v1290
    %1292 = vmatprep.mubr.bf16.mxu0 %v422
    %1293 = vmatmul.mubr.bf16.gmra.mrb[0].mxu0 %v421
    %v1294 = vpop.f32.mrb[0].mxu0
    %v1295 = vadd.f32 %v1182, %v1294
    %v1296 = vpop.f32.mrb[0].mxu0
    %v1297 = vadd.f32 %v1184, %v1296
    %v1298 = vpop.f32.mrb[0].mxu0
    %v1299 = vadd.f32 %v1186, %v1298
    %v1300 = vpop.f32.mrb[0].mxu0
    %v1301 = vadd.f32 %v1188, %v1300
    %1302 = vmatprep.mubr.bf16.mxu0 %v426
    %1303 = vmatmul.mubr.bf16.gmra.mrb[0].mxu0 %v425
    %v1304 = vpop.f32.mrb[0].mxu0
    %v1305 = vadd.f32 %v1192, %v1304
    %v1306 = vpop.f32.mrb[0].mxu0
    %v1307 = vadd.f32 %v1194, %v1306
    %v1308 = vpop.f32.mrb[0].mxu0
    %v1309 = vadd.f32 %v1196, %v1308
    %v1310 = vpop.f32.mrb[0].mxu0
    %v1311 = vadd.f32 %v1198, %v1310
    %1312 = vmatprep.mubr.bf16.mxu0 %v430
    %1313 = vmatmul.mubr.bf16.gmra.mrb[0].mxu0 %v429
    %v1314 = vpop.f32.mrb[0].mxu0
    %v1315 = vadd.f32 %v1202, %v1314
    %v1316 = vpop.f32.mrb[0].mxu0
    %v1317 = vadd.f32 %v1204, %v1316
    %v1318 = vpop.f32.mrb[0].mxu0
    %v1319 = vadd.f32 %v1206, %v1318
    %v1320 = vpop.f32.mrb[0].mxu0
    %v1321 = vadd.f32 %v1208, %v1320
    %1322 = vmatprep.mubr.bf16.mxu0 %v434
    %1323 = vmatmul.mubr.bf16.gmra.mrb[0].mxu0 %v433
    %v1324 = vpop.f32.mrb[0].mxu0
    %v1325 = vadd.f32 %v1212, %v1324
    %v1326 = vpop.f32.mrb[0].mxu0
    %v1327 = vadd.f32 %v1214, %v1326
    %v1328 = vpop.f32.mrb[0].mxu0
    %v1329 = vadd.f32 %v1216, %v1328
    %v1330 = vpop.f32.mrb[0].mxu0
    %v1331 = vadd.f32 %v1218, %v1330
    %1332 = vdwg.mxu0
    %1333 = vmatprep.subr.bf16.mxu0 %v854
    %1334 = vmatpush1.bf16.msra.mxu0 %v853
    %1335 = vmatprep.subr.bf16.mxu0 %v858
    %1336 = vmatpush1.bf16.msra.mxu0 %v857
    %1337 = vmatprep.subr.bf16.mxu0 %v862
    %1338 = vmatpush1.bf16.msra.mxu0 %v861
    %1339 = vmatprep.subr.bf16.mxu0 %v866
    %1340 = vmatpush1.bf16.msra.mxu0 %v865
    %1341 = vmatprep.subr.bf16.mxu0 %v870
    %1342 = vmatpush1.bf16.msra.mxu0 %v869
    %1343 = vmatprep.subr.bf16.mxu0 %v874
    %1344 = vmatpush1.bf16.msra.mxu0 %v873
    %1345 = vmatprep.subr.bf16.mxu0 %v878
    %1346 = vmatpush1.bf16.msra.mxu0 %v877
    %1347 = vmatprep.subr.bf16.mxu0 %v882
    %1348 = vmatpush1.bf16.msra.mxu0 %v881
    %1349 = vmatprep.subr.bf16.mxu0 %v886
    %1350 = vmatpush1.bf16.msra.mxu0 %v885
    %1351 = vmatprep.subr.bf16.mxu0 %v890
    %1352 = vmatpush1.bf16.msra.mxu0 %v889
    %1353 = vmatprep.subr.bf16.mxu0 %v894
    %1354 = vmatpush1.bf16.msra.mxu0 %v893
    %1355 = vmatprep.subr.bf16.mxu0 %v898
    %1356 = vmatpush1.bf16.msra.mxu0 %v897
    %1357 = vmatprep.subr.bf16.mxu0 %v902
    %1358 = vmatpush1.bf16.msra.mxu0 %v901
    %1359 = vmatprep.subr.bf16.mxu0 %v906
    %1360 = vmatpush1.bf16.msra.mxu0 %v905
    %1361 = vmatprep.subr.bf16.mxu0 %v910
    %1362 = vmatpush1.bf16.msra.mxu0 %v909
    %1363 = vmatprep.subr.bf16.mxu0 %v914
    %1364 = vmatpush1.bf16.msra.mxu0 %v913
    %1365 = vmatprep.mubr.bf16.mxu0 %v404
    %1366 = vmatmul.mubr.bf16.gmra.mrb[0].mxu0 %v403
    %v1367 = vpop.f32.mrb[0].mxu0
    %v1368 = vadd.f32 0.0, %v1367
    %v1369 = vpop.f32.mrb[0].mxu0
    %v1370 = vadd.f32 0.0, %v1369
    %v1371 = vpop.f32.mrb[0].mxu0
    %v1372 = vadd.f32 0.0, %v1371
    %v1373 = vpop.f32.mrb[0].mxu0
    %v1374 = vadd.f32 0.0, %v1373
    %1375 = vmatprep.mubr.bf16.mxu0 %v408
    %1376 = vmatmul.mubr.bf16.gmra.mrb[0].mxu0 %v407
    %v1377 = vpop.f32.mrb[0].mxu0
    %v1378 = vadd.f32 0.0, %v1377
    %v1379 = vpop.f32.mrb[0].mxu0
    %v1380 = vadd.f32 0.0, %v1379
    %v1381 = vpop.f32.mrb[0].mxu0
    %v1382 = vadd.f32 0.0, %v1381
    %v1383 = vpop.f32.mrb[0].mxu0
    %v1384 = vadd.f32 0.0, %v1383
    %1385 = vmatprep.mubr.bf16.mxu0 %v412
    %1386 = vmatmul.mubr.bf16.gmra.mrb[0].mxu0 %v411
    %v1387 = vpop.f32.mrb[0].mxu0
    %v1388 = vadd.f32 0.0, %v1387
    %v1389 = vpop.f32.mrb[0].mxu0
    %v1390 = vadd.f32 0.0, %v1389
    %v1391 = vpop.f32.mrb[0].mxu0
    %v1392 = vadd.f32 0.0, %v1391
    %v1393 = vpop.f32.mrb[0].mxu0
    %v1394 = vadd.f32 0.0, %v1393
    %1395 = vmatprep.mubr.bf16.mxu0 %v416
    %1396 = vmatmul.mubr.bf16.gmra.mrb[0].mxu0 %v415
    %v1397 = vpop.f32.mrb[0].mxu0
    %v1398 = vadd.f32 0.0, %v1397
    %v1399 = vpop.f32.mrb[0].mxu0
    %v1400 = vadd.f32 0.0, %v1399
    %v1401 = vpop.f32.mrb[0].mxu0
    %v1402 = vadd.f32 0.0, %v1401
    %v1403 = vpop.f32.mrb[0].mxu0
    %v1404 = vadd.f32 0.0, %v1403
    %1405 = vmatprep.mubr.bf16.mxu0 %v420
    %1406 = vmatmul.mubr.bf16.gmra.mrb[0].mxu0 %v419
    %v1407 = vpop.f32.mrb[0].mxu0
    %v1408 = vadd.f32 0.0, %v1407
    %v1409 = vpop.f32.mrb[0].mxu0
    %v1410 = vadd.f32 0.0, %v1409
    %v1411 = vpop.f32.mrb[0].mxu0
    %v1412 = vadd.f32 0.0, %v1411
    %v1413 = vpop.f32.mrb[0].mxu0
    %v1414 = vadd.f32 0.0, %v1413
    %1415 = vmatprep.mubr.bf16.mxu0 %v424
    %1416 = vmatmul.mubr.bf16.gmra.mrb[0].mxu0 %v423
    %v1417 = vpop.f32.mrb[0].mxu0
    %v1418 = vadd.f32 0.0, %v1417
    %v1419 = vpop.f32.mrb[0].mxu0
    %v1420 = vadd.f32 0.0, %v1419
    %v1421 = vpop.f32.mrb[0].mxu0
    %v1422 = vadd.f32 0.0, %v1421
    %v1423 = vpop.f32.mrb[0].mxu0
    %v1424 = vadd.f32 0.0, %v1423
    %1425 = vmatprep.mubr.bf16.mxu0 %v428
    %1426 = vmatmul.mubr.bf16.gmra.mrb[0].mxu0 %v427
    %v1427 = vpop.f32.mrb[0].mxu0
    %v1428 = vadd.f32 0.0, %v1427
    %v1429 = vpop.f32.mrb[0].mxu0
    %v1430 = vadd.f32 0.0, %v1429
    %v1431 = vpop.f32.mrb[0].mxu0
    %v1432 = vadd.f32 0.0, %v1431
    %v1433 = vpop.f32.mrb[0].mxu0
    %v1434 = vadd.f32 0.0, %v1433
    %1435 = vmatprep.mubr.bf16.mxu0 %v432
    %1436 = vmatmul.mubr.bf16.gmra.mrb[0].mxu0 %v431
    %v1437 = vpop.f32.mrb[0].mxu0
    %v1438 = vadd.f32 0.0, %v1437
    %v1439 = vpop.f32.mrb[0].mxu0
    %v1440 = vadd.f32 0.0, %v1439
    %v1441 = vpop.f32.mrb[0].mxu0
    %v1442 = vadd.f32 0.0, %v1441
    %v1443 = vpop.f32.mrb[0].mxu0
    %v1444 = vadd.f32 0.0, %v1443
    %1445 = vdwg.mxu0
    %1446 = vmatprep.subr.bf16.mxu0 %v918
    %1447 = vmatpush1.bf16.msra.mxu0 %v917
    %1448 = vmatprep.subr.bf16.mxu0 %v922
    %1449 = vmatpush1.bf16.msra.mxu0 %v921
    %1450 = vmatprep.subr.bf16.mxu0 %v926
    %1451 = vmatpush1.bf16.msra.mxu0 %v925
    %1452 = vmatprep.subr.bf16.mxu0 %v930
    %1453 = vmatpush1.bf16.msra.mxu0 %v929
    %1454 = vmatprep.subr.bf16.mxu0 %v934
    %1455 = vmatpush1.bf16.msra.mxu0 %v933
    %1456 = vmatprep.subr.bf16.mxu0 %v938
    %1457 = vmatpush1.bf16.msra.mxu0 %v937
    %1458 = vmatprep.subr.bf16.mxu0 %v942
    %1459 = vmatpush1.bf16.msra.mxu0 %v941
    %1460 = vmatprep.subr.bf16.mxu0 %v946
    %1461 = vmatpush1.bf16.msra.mxu0 %v945
    %1462 = vmatprep.subr.bf16.mxu0 %v950
    %1463 = vmatpush1.bf16.msra.mxu0 %v949
    %1464 = vmatprep.subr.bf16.mxu0 %v954
    %1465 = vmatpush1.bf16.msra.mxu0 %v953
    %1466 = vmatprep.subr.bf16.mxu0 %v958
    %1467 = vmatpush1.bf16.msra.mxu0 %v957
    %1468 = vmatprep.subr.bf16.mxu0 %v962
    %1469 = vmatpush1.bf16.msra.mxu0 %v961
    %1470 = vmatprep.subr.bf16.mxu0 %v966
    %1471 = vmatpush1.bf16.msra.mxu0 %v965
    %1472 = vmatprep.subr.bf16.mxu0 %v970
    %1473 = vmatpush1.bf16.msra.mxu0 %v969
    %1474 = vmatprep.subr.bf16.mxu0 %v974
    %1475 = vmatpush1.bf16.msra.mxu0 %v973
    %1476 = vmatprep.subr.bf16.mxu0 %v978
    %1477 = vmatpush1.bf16.msra.mxu0 %v977
    %1478 = vmatprep.mubr.bf16.mxu0 %v406
    %1479 = vmatmul.mubr.bf16.gmra.mrb[0].mxu0 %v405
    %v1480 = vpop.f32.mrb[0].mxu0
    %v1481 = vadd.f32 %v1368, %v1480
    %v1482 = vpop.f32.mrb[0].mxu0
    %v1483 = vadd.f32 %v1370, %v1482
    %v1484 = vpop.f32.mrb[0].mxu0
    %v1485 = vadd.f32 %v1372, %v1484
    %v1486 = vpop.f32.mrb[0].mxu0
    %v1487 = vadd.f32 %v1374, %v1486
    %1488 = vmatprep.mubr.bf16.mxu0 %v410
    %1489 = vmatmul.mubr.bf16.gmra.mrb[0].mxu0 %v409
    %v1490 = vpop.f32.mrb[0].mxu0
    %v1491 = vadd.f32 %v1378, %v1490
    %v1492 = vpop.f32.mrb[0].mxu0
    %v1493 = vadd.f32 %v1380, %v1492
    %v1494 = vpop.f32.mrb[0].mxu0
    %v1495 = vadd.f32 %v1382, %v1494
    %v1496 = vpop.f32.mrb[0].mxu0
    %v1497 = vadd.f32 %v1384, %v1496
    %1498 = vmatprep.mubr.bf16.mxu0 %v414
    %1499 = vmatmul.mubr.bf16.gmra.mrb[0].mxu0 %v413
    %v1500 = vpop.f32.mrb[0].mxu0
    %v1501 = vadd.f32 %v1388, %v1500
    %v1502 = vpop.f32.mrb[0].mxu0
    %v1503 = vadd.f32 %v1390, %v1502
    %v1504 = vpop.f32.mrb[0].mxu0
    %v1505 = vadd.f32 %v1392, %v1504
    %v1506 = vpop.f32.mrb[0].mxu0
    %v1507 = vadd.f32 %v1394, %v1506
    %1508 = vmatprep.mubr.bf16.mxu0 %v418
    %1509 = vmatmul.mubr.bf16.gmra.mrb[0].mxu0 %v417
    %v1510 = vpop.f32.mrb[0].mxu0
    %v1511 = vadd.f32 %v1398, %v1510
    %v1512 = vpop.f32.mrb[0].mxu0
    %v1513 = vadd.f32 %v1400, %v1512
    %v1514 = vpop.f32.mrb[0].mxu0
    %v1515 = vadd.f32 %v1402, %v1514
    %v1516 = vpop.f32.mrb[0].mxu0
    %v1517 = vadd.f32 %v1404, %v1516
    %1518 = vmatprep.mubr.bf16.mxu0 %v422
    %1519 = vmatmul.mubr.bf16.gmra.mrb[0].mxu0 %v421
    %v1520 = vpop.f32.mrb[0].mxu0
    %v1521 = vadd.f32 %v1408, %v1520
    %v1522 = vpop.f32.mrb[0].mxu0
    %v1523 = vadd.f32 %v1410, %v1522
    %v1524 = vpop.f32.mrb[0].mxu0
    %v1525 = vadd.f32 %v1412, %v1524
    %v1526 = vpop.f32.mrb[0].mxu0
    %v1527 = vadd.f32 %v1414, %v1526
    %1528 = vmatprep.mubr.bf16.mxu0 %v426
    %1529 = vmatmul.mubr.bf16.gmra.mrb[0].mxu0 %v425
    %v1530 = vpop.f32.mrb[0].mxu0
    %v1531 = vadd.f32 %v1418, %v1530
    %v1532 = vpop.f32.mrb[0].mxu0
    %v1533 = vadd.f32 %v1420, %v1532
    %v1534 = vpop.f32.mrb[0].mxu0
    %v1535 = vadd.f32 %v1422, %v1534
    %v1536 = vpop.f32.mrb[0].mxu0
    %v1537 = vadd.f32 %v1424, %v1536
    %1538 = vmatprep.mubr.bf16.mxu0 %v430
    %1539 = vmatmul.mubr.bf16.gmra.mrb[0].mxu0 %v429
    %v1540 = vpop.f32.mrb[0].mxu0
    %v1541 = vadd.f32 %v1428, %v1540
    %v1542 = vpop.f32.mrb[0].mxu0
    %v1543 = vadd.f32 %v1430, %v1542
    %v1544 = vpop.f32.mrb[0].mxu0
    %v1545 = vadd.f32 %v1432, %v1544
    %v1546 = vpop.f32.mrb[0].mxu0
    %v1547 = vadd.f32 %v1434, %v1546
    %1548 = vmatprep.mubr.bf16.mxu0 %v434
    %1549 = vmatmul.mubr.bf16.gmra.mrb[0].mxu0 %v433
    %v1550 = vpop.f32.mrb[0].mxu0
    %v1551 = vadd.f32 %v1438, %v1550
    %v1552 = vpop.f32.mrb[0].mxu0
    %v1553 = vadd.f32 %v1440, %v1552
    %v1554 = vpop.f32.mrb[0].mxu0
    %v1555 = vadd.f32 %v1442, %v1554
    %v1556 = vpop.f32.mrb[0].mxu0
    %v1557 = vadd.f32 %v1444, %v1556
    %1558 = vdwg.mxu0
    %v1559 = vadd.f32 %v83, %v1255
    %v1560 = vadd.f32 %v84, %v1257
    %v1561 = vadd.f32 %v85, %v1481
    %v1562 = vadd.f32 %v86, %v1483
    %v1563 = vadd.f32 %v87, %v1259
    %v1564 = vadd.f32 %v88, %v1261
    %v1565 = vadd.f32 %v89, %v1485
    %v1566 = vadd.f32 %v90, %v1487
    %v1567 = vadd.f32 %v91, %v1265
    %v1568 = vadd.f32 %v92, %v1267
    %v1569 = vadd.f32 %v93, %v1491
    %v1570 = vadd.f32 %v94, %v1493
    %v1571 = vadd.f32 %v95, %v1269
    %v1572 = vadd.f32 %v96, %v1271
    %v1573 = vadd.f32 %v97, %v1495
    %v1574 = vadd.f32 %v98, %v1497
    %v1575 = vadd.f32 %v99, %v1275
    %v1576 = vadd.f32 %v100, %v1277
    %v1577 = vadd.f32 %v101, %v1501
    %v1578 = vadd.f32 %v102, %v1503
    %v1579 = vadd.f32 %v103, %v1279
    %v1580 = vadd.f32 %v104, %v1281
    %v1581 = vadd.f32 %v105, %v1505
    %v1582 = vadd.f32 %v106, %v1507
    %v1583 = vadd.f32 %v107, %v1285
    %v1584 = vadd.f32 %v108, %v1287
    %v1585 = vadd.f32 %v109, %v1511
    %v1586 = vadd.f32 %v110, %v1513
    %v1587 = vadd.f32 %v111, %v1289
    %v1588 = vadd.f32 %v112, %v1291
    %v1589 = vadd.f32 %v113, %v1515
    %v1590 = vadd.f32 %v114, %v1517
    %v1591 = vadd.f32 %v115, %v1295
    %v1592 = vadd.f32 %v116, %v1297
    %v1593 = vadd.f32 %v117, %v1521
    %v1594 = vadd.f32 %v118, %v1523
    %v1595 = vadd.f32 %v119, %v1299
    %v1596 = vadd.f32 %v120, %v1301
    %v1597 = vadd.f32 %v121, %v1525
    %v1598 = vadd.f32 %v122, %v1527
    %v1599 = vadd.f32 %v123, %v1305
    %v1600 = vadd.f32 %v124, %v1307
    %v1601 = vadd.f32 %v125, %v1531
    %v1602 = vadd.f32 %v126, %v1533
    %v1603 = vadd.f32 %v127, %v1309
    %v1604 = vadd.f32 %v128, %v1311
    %v1605 = vadd.f32 %v129, %v1535
    %v1606 = vadd.f32 %v130, %v1537
    %v1607 = vadd.f32 %v131, %v1315
    %v1608 = vadd.f32 %v132, %v1317
    %v1609 = vadd.f32 %v133, %v1541
    %v1610 = vadd.f32 %v134, %v1543
    %v1611 = vadd.f32 %v135, %v1319
    %v1612 = vadd.f32 %v136, %v1321
    %v1613 = vadd.f32 %v137, %v1545
    %v1614 = vadd.f32 %v138, %v1547
    %v1615 = vadd.f32 %v139, %v1325
    %v1616 = vadd.f32 %v140, %v1327
    %v1617 = vadd.f32 %v141, %v1551
    %v1618 = vadd.f32 %v142, %v1553
    %v1619 = vadd.f32 %v143, %v1329
    %v1620 = vadd.f32 %v144, %v1331
    %v1621 = vadd.f32 %v145, %v1555
    %v1622 = vadd.f32 %v146, %v1557
    %1623 = vst [vmem:[#allocation2] sm:$0xff] %v1559
    %1624 = vst [vmem:[#allocation2 + $0x8] sm:$0xff] %v1560
    %1625 = vst [vmem:[#allocation2 + $0x10] sm:$0xff] %v1561
    %1626 = vst [vmem:[#allocation2 + $0x18] sm:$0xff] %v1562
    %1627 = vst [vmem:[#allocation2 + $0x20] sm:$0xff] %v1563
    %1628 = vst [vmem:[#allocation2 + $0x28] sm:$0xff] %v1564
    %1629 = vst [vmem:[#allocation2 + $0x30] sm:$0xff] %v1565
    %1630 = vst [vmem:[#allocation2 + $0x38] sm:$0xff] %v1566
    %1631 = vst [vmem:[#allocation2 + $0x40] sm:$0xff] %v1567
    %1632 = vst [vmem:[#allocation2 + $0x48] sm:$0xff] %v1568
    %1633 = vst [vmem:[#allocation2 + $0x50] sm:$0xff] %v1569
    %1634 = vst [vmem:[#allocation2 + $0x58] sm:$0xff] %v1570
    %1635 = vst [vmem:[#allocation2 + $0x60] sm:$0xff] %v1571
    %1636 = vst [vmem:[#allocation2 + $0x68] sm:$0xff] %v1572
    %1637 = vst [vmem:[#allocation2 + $0x70] sm:$0xff] %v1573
    %1638 = vst [vmem:[#allocation2 + $0x78] sm:$0xff] %v1574
    %1639 = vst [vmem:[#allocation2 + $0x80] sm:$0xff] %v1575
    %1640 = vst [vmem:[#allocation2 + $0x88] sm:$0xff] %v1576
    %1641 = vst [vmem:[#allocation2 + $0x90] sm:$0xff] %v1577
    %1642 = vst [vmem:[#allocation2 + $0x98] sm:$0xff] %v1578
    %1643 = vst [vmem:[#allocation2 + $0xa0] sm:$0xff] %v1579
    %1644 = vst [vmem:[#allocation2 + $0xa8] sm:$0xff] %v1580
    %1645 = vst [vmem:[#allocation2 + $0xb0] sm:$0xff] %v1581
    %1646 = vst [vmem:[#allocation2 + $0xb8] sm:$0xff] %v1582
    %1647 = vst [vmem:[#allocation2 + $0xc0] sm:$0xff] %v1583
    %1648 = vst [vmem:[#allocation2 + $0xc8] sm:$0xff] %v1584
    %1649 = vst [vmem:[#allocation2 + $0xd0] sm:$0xff] %v1585
    %1650 = vst [vmem:[#allocation2 + $0xd8] sm:$0xff] %v1586
    %1651 = vst [vmem:[#allocation2 + $0xe0] sm:$0xff] %v1587
    %1652 = vst [vmem:[#allocation2 + $0xe8] sm:$0xff] %v1588
    %1653 = vst [vmem:[#allocation2 + $0xf0] sm:$0xff] %v1589
    %1654 = vst [vmem:[#allocation2 + $0xf8] sm:$0xff] %v1590
    %1655 = vst [vmem:[#allocation2 + $0x100] sm:$0xff] %v1591
    %1656 = vst [vmem:[#allocation2 + $0x108] sm:$0xff] %v1592
    %1657 = vst [vmem:[#allocation2 + $0x110] sm:$0xff] %v1593
    %1658 = vst [vmem:[#allocation2 + $0x118] sm:$0xff] %v1594
    %1659 = vst [vmem:[#allocation2 + $0x120] sm:$0xff] %v1595
    %1660 = vst [vmem:[#allocation2 + $0x128] sm:$0xff] %v1596
    %1661 = vst [vmem:[#allocation2 + $0x130] sm:$0xff] %v1597
    %1662 = vst [vmem:[#allocation2 + $0x138] sm:$0xff] %v1598
    %1663 = vst [vmem:[#allocation2 + $0x140] sm:$0xff] %v1599
    %1664 = vst [vmem:[#allocation2 + $0x148] sm:$0xff] %v1600
    %1665 = vst [vmem:[#allocation2 + $0x150] sm:$0xff] %v1601
    %1666 = vst [vmem:[#allocation2 + $0x158] sm:$0xff] %v1602
    %1667 = vst [vmem:[#allocation2 + $0x160] sm:$0xff] %v1603
    %1668 = vst [vmem:[#allocation2 + $0x168] sm:$0xff] %v1604
    %1669 = vst [vmem:[#allocation2 + $0x170] sm:$0xff] %v1605
    %1670 = vst [vmem:[#allocation2 + $0x178] sm:$0xff] %v1606
    %1671 = vst [vmem:[#allocation2 + $0x180] sm:$0xff] %v1607
    %1672 = vst [vmem:[#allocation2 + $0x188] sm:$0xff] %v1608
    %1673 = vst [vmem:[#allocation2 + $0x190] sm:$0xff] %v1609
    %1674 = vst [vmem:[#allocation2 + $0x198] sm:$0xff] %v1610
    %1675 = vst [vmem:[#allocation2 + $0x1a0] sm:$0xff] %v1611
    %1676 = vst [vmem:[#allocation2 + $0x1a8] sm:$0xff] %v1612
    %1677 = vst [vmem:[#allocation2 + $0x1b0] sm:$0xff] %v1613
    %1678 = vst [vmem:[#allocation2 + $0x1b8] sm:$0xff] %v1614
    %1679 = vst [vmem:[#allocation2 + $0x1c0] sm:$0xff] %v1615
    %1680 = vst [vmem:[#allocation2 + $0x1c8] sm:$0xff] %v1616
    %1681 = vst [vmem:[#allocation2 + $0x1d0] sm:$0xff] %v1617
    %1682 = vst [vmem:[#allocation2 + $0x1d8] sm:$0xff] %v1618
    %1683 = vst [vmem:[#allocation2 + $0x1e0] sm:$0xff] %v1619
    %1684 = vst [vmem:[#allocation2 + $0x1e8] sm:$0xff] %v1620
    %1685 = vst [vmem:[#allocation2 + $0x1f0] sm:$0xff] %v1621
    %1686 = vst [vmem:[#allocation2 + $0x1f8] sm:$0xff] %v1622
    // Predicated region
    $region18: #{gqa_forward.5} parent=1 // pred_check
      %p1687 = pneg %p15
    $region19: #{gqa_forward.5} parent=1 // pred_check_branch
      %1689 = sbr.rel (%p1687) target = $region21
    $region20: #{gqa_forward.5} parent=1 // pred_region
      %v1690 = vld [vmem:[#allocation2] sm:$0xff]
      %v1691 = vld [vmem:[#allocation2 + $0x8] sm:$0xff]
      %v1692 = vld [vmem:[#allocation2 + $0x10] sm:$0xff]
      %v1693 = vld [vmem:[#allocation2 + $0x18] sm:$0xff]
      %v1694 = vld [vmem:[#allocation2 + $0x20] sm:$0xff]
      %v1695 = vld [vmem:[#allocation2 + $0x28] sm:$0xff]
      %v1696 = vld [vmem:[#allocation2 + $0x30] sm:$0xff]
      %v1697 = vld [vmem:[#allocation2 + $0x38] sm:$0xff]
      %v1698 = vld [vmem:[#allocation2 + $0x40] sm:$0xff]
      %v1699 = vld [vmem:[#allocation2 + $0x48] sm:$0xff]
      %v1700 = vld [vmem:[#allocation2 + $0x50] sm:$0xff]
      %v1701 = vld [vmem:[#allocation2 + $0x58] sm:$0xff]
      %v1702 = vld [vmem:[#allocation2 + $0x60] sm:$0xff]
      %v1703 = vld [vmem:[#allocation2 + $0x68] sm:$0xff]
      %v1704 = vld [vmem:[#allocation2 + $0x70] sm:$0xff]
      %v1705 = vld [vmem:[#allocation2 + $0x78] sm:$0xff]
      %v1706 = vld [vmem:[#allocation2 + $0x80] sm:$0xff]
      %v1707 = vld [vmem:[#allocation2 + $0x88] sm:$0xff]
      %v1708 = vld [vmem:[#allocation2 + $0x90] sm:$0xff]
      %v1709 = vld [vmem:[#allocation2 + $0x98] sm:$0xff]
      %v1710 = vld [vmem:[#allocation2 + $0xa0] sm:$0xff]
      %v1711 = vld [vmem:[#allocation2 + $0xa8] sm:$0xff]
      %v1712 = vld [vmem:[#allocation2 + $0xb0] sm:$0xff]
      %v1713 = vld [vmem:[#allocation2 + $0xb8] sm:$0xff]
      %v1714 = vld [vmem:[#allocation2 + $0xc0] sm:$0xff]
      %v1715 = vld [vmem:[#allocation2 + $0xc8] sm:$0xff]
      %v1716 = vld [vmem:[#allocation2 + $0xd0] sm:$0xff]
      %v1717 = vld [vmem:[#allocation2 + $0xd8] sm:$0xff]
      %v1718 = vld [vmem:[#allocation2 + $0xe0] sm:$0xff]
      %v1719 = vld [vmem:[#allocation2 + $0xe8] sm:$0xff]
      %v1720 = vld [vmem:[#allocation2 + $0xf0] sm:$0xff]
      %v1721 = vld [vmem:[#allocation2 + $0xf8] sm:$0xff]
      %v1722 = vld [vmem:[#allocation2 + $0x100] sm:$0xff]
      %v1723 = vld [vmem:[#allocation2 + $0x108] sm:$0xff]
      %v1724 = vld [vmem:[#allocation2 + $0x110] sm:$0xff]
      %v1725 = vld [vmem:[#allocation2 + $0x118] sm:$0xff]
      %v1726 = vld [vmem:[#allocation2 + $0x120] sm:$0xff]
      %v1727 = vld [vmem:[#allocation2 + $0x128] sm:$0xff]
      %v1728 = vld [vmem:[#allocation2 + $0x130] sm:$0xff]
      %v1729 = vld [vmem:[#allocation2 + $0x138] sm:$0xff]
      %v1730 = vld [vmem:[#allocation2 + $0x140] sm:$0xff]
      %v1731 = vld [vmem:[#allocation2 + $0x148] sm:$0xff]
      %v1732 = vld [vmem:[#allocation2 + $0x150] sm:$0xff]
      %v1733 = vld [vmem:[#allocation2 + $0x158] sm:$0xff]
      %v1734 = vld [vmem:[#allocation2 + $0x160] sm:$0xff]
      %v1735 = vld [vmem:[#allocation2 + $0x168] sm:$0xff]
      %v1736 = vld [vmem:[#allocation2 + $0x170] sm:$0xff]
      %v1737 = vld [vmem:[#allocation2 + $0x178] sm:$0xff]
      %v1738 = vld [vmem:[#allocation2 + $0x180] sm:$0xff]
      %v1739 = vld [vmem:[#allocation2 + $0x188] sm:$0xff]
      %v1740 = vld [vmem:[#allocation2 + $0x190] sm:$0xff]
      %v1741 = vld [vmem:[#allocation2 + $0x198] sm:$0xff]
      %v1742 = vld [vmem:[#allocation2 + $0x1a0] sm:$0xff]
      %v1743 = vld [vmem:[#allocation2 + $0x1a8] sm:$0xff]
      %v1744 = vld [vmem:[#allocation2 + $0x1b0] sm:$0xff]
      %v1745 = vld [vmem:[#allocation2 + $0x1b8] sm:$0xff]
      %v1746 = vld [vmem:[#allocation2 + $0x1c0] sm:$0xff]
      %v1747 = vld [vmem:[#allocation2 + $0x1c8] sm:$0xff]
      %v1748 = vld [vmem:[#allocation2 + $0x1d0] sm:$0xff]
      %v1749 = vld [vmem:[#allocation2 + $0x1d8] sm:$0xff]
      %v1750 = vld [vmem:[#allocation2 + $0x1e0] sm:$0xff]
      %v1751 = vld [vmem:[#allocation2 + $0x1e8] sm:$0xff]
      %v1752 = vld [vmem:[#allocation2 + $0x1f0] sm:$0xff]
      %v1753 = vld [vmem:[#allocation2 + $0x1f8] sm:$0xff]
      %v1754 = vld [vmem:[%s2] sm:$0xf]
      %v1756 = vlaneseq
      %v1757 = vshrl.u32 %v1756, 7
      %v1758 = vsub.s32 0, %v1757
      %v1759 = vrot.slane %v1754, %v1758
      %v1760 = vlaneseq
      %v1761 = vshrl.u32 %v1760, 7
      %v1762 = vsub.s32 1, %v1761
      %v1763 = vrot.slane %v1754, %v1762
      %v1764 = vlaneseq
      %v1765 = vshrl.u32 %v1764, 7
      %v1766 = vsub.s32 2, %v1765
      %v1767 = vrot.slane %v1754, %v1766
      %v1768 = vlaneseq
      %v1769 = vshrl.u32 %v1768, 7
      %v1770 = vsub.s32 3, %v1769
      %v1771 = vrot.slane %v1754, %v1770
      %v1776 = vadd.f32 %v1690, %v1759
      %v1777 = vadd.f32 %v1691, %v1763
      %v1778 = vadd.f32 %v1692, %v1767
      %v1779 = vadd.f32 %v1693, %v1771
      %v1780 = vadd.f32 %v1694, %v1759
      %v1781 = vadd.f32 %v1695, %v1763
      %v1782 = vadd.f32 %v1696, %v1767
      %v1783 = vadd.f32 %v1697, %v1771
      %v1784 = vadd.f32 %v1698, %v1759
      %v1785 = vadd.f32 %v1699, %v1763
      %v1786 = vadd.f32 %v1700, %v1767
      %v1787 = vadd.f32 %v1701, %v1771
      %v1788 = vadd.f32 %v1702, %v1759
      %v1789 = vadd.f32 %v1703, %v1763
      %v1790 = vadd.f32 %v1704, %v1767
      %v1791 = vadd.f32 %v1705, %v1771
      %v1792 = vadd.f32 %v1706, %v1759
      %v1793 = vadd.f32 %v1707, %v1763
      %v1794 = vadd.f32 %v1708, %v1767
      %v1795 = vadd.f32 %v1709, %v1771
      %v1796 = vadd.f32 %v1710, %v1759
      %v1797 = vadd.f32 %v1711, %v1763
      %v1798 = vadd.f32 %v1712, %v1767
      %v1799 = vadd.f32 %v1713, %v1771
      %v1800 = vadd.f32 %v1714, %v1759
      %v1801 = vadd.f32 %v1715, %v1763
      %v1802 = vadd.f32 %v1716, %v1767
      %v1803 = vadd.f32 %v1717, %v1771
      %v1804 = vadd.f32 %v1718, %v1759
      %v1805 = vadd.f32 %v1719, %v1763
      %v1806 = vadd.f32 %v1720, %v1767
      %v1807 = vadd.f32 %v1721, %v1771
      %v1808 = vadd.f32 %v1722, %v1759
      %v1809 = vadd.f32 %v1723, %v1763
      %v1810 = vadd.f32 %v1724, %v1767
      %v1811 = vadd.f32 %v1725, %v1771
      %v1812 = vadd.f32 %v1726, %v1759
      %v1813 = vadd.f32 %v1727, %v1763
      %v1814 = vadd.f32 %v1728, %v1767
      %v1815 = vadd.f32 %v1729, %v1771
      %v1816 = vadd.f32 %v1730, %v1759
      %v1817 = vadd.f32 %v1731, %v1763
      %v1818 = vadd.f32 %v1732, %v1767
      %v1819 = vadd.f32 %v1733, %v1771
      %v1820 = vadd.f32 %v1734, %v1759
      %v1821 = vadd.f32 %v1735, %v1763
      %v1822 = vadd.f32 %v1736, %v1767
      %v1823 = vadd.f32 %v1737, %v1771
      %v1824 = vadd.f32 %v1738, %v1759
      %v1825 = vadd.f32 %v1739, %v1763
      %v1826 = vadd.f32 %v1740, %v1767
      %v1827 = vadd.f32 %v1741, %v1771
      %v1828 = vadd.f32 %v1742, %v1759
      %v1829 = vadd.f32 %v1743, %v1763
      %v1830 = vadd.f32 %v1744, %v1767
      %v1831 = vadd.f32 %v1745, %v1771
      %v1832 = vadd.f32 %v1746, %v1759
      %v1833 = vadd.f32 %v1747, %v1763
      %v1834 = vadd.f32 %v1748, %v1767
      %v1835 = vadd.f32 %v1749, %v1771
      %v1836 = vadd.f32 %v1750, %v1759
      %v1837 = vadd.f32 %v1751, %v1763
      %v1838 = vadd.f32 %v1752, %v1767
      %v1839 = vadd.f32 %v1753, %v1771
      %1840 = vst [vmem:[#allocation3] sm:$0xff] %v1776
      %1841 = vst [vmem:[#allocation3 + $0x8] sm:$0xff] %v1777
      %1842 = vst [vmem:[#allocation3 + $0x10] sm:$0xff] %v1778
      %1843 = vst [vmem:[#allocation3 + $0x18] sm:$0xff] %v1779
      %1844 = vst [vmem:[#allocation3 + $0x20] sm:$0xff] %v1780
      %1845 = vst [vmem:[#allocation3 + $0x28] sm:$0xff] %v1781
      %1846 = vst [vmem:[#allocation3 + $0x30] sm:$0xff] %v1782
      %1847 = vst [vmem:[#allocation3 + $0x38] sm:$0xff] %v1783
      %1848 = vst [vmem:[#allocation3 + $0x40] sm:$0xff] %v1784
      %1849 = vst [vmem:[#allocation3 + $0x48] sm:$0xff] %v1785
      %1850 = vst [vmem:[#allocation3 + $0x50] sm:$0xff] %v1786
      %1851 = vst [vmem:[#allocation3 + $0x58] sm:$0xff] %v1787
      %1852 = vst [vmem:[#allocation3 + $0x60] sm:$0xff] %v1788
      %1853 = vst [vmem:[#allocation3 + $0x68] sm:$0xff] %v1789
      %1854 = vst [vmem:[#allocation3 + $0x70] sm:$0xff] %v1790
      %1855 = vst [vmem:[#allocation3 + $0x78] sm:$0xff] %v1791
      %1856 = vst [vmem:[#allocation3 + $0x80] sm:$0xff] %v1792
      %1857 = vst [vmem:[#allocation3 + $0x88] sm:$0xff] %v1793
      %1858 = vst [vmem:[#allocation3 + $0x90] sm:$0xff] %v1794
      %1859 = vst [vmem:[#allocation3 + $0x98] sm:$0xff] %v1795
      %1860 = vst [vmem:[#allocation3 + $0xa0] sm:$0xff] %v1796
      %1861 = vst [vmem:[#allocation3 + $0xa8] sm:$0xff] %v1797
      %1862 = vst [vmem:[#allocation3 + $0xb0] sm:$0xff] %v1798
      %1863 = vst [vmem:[#allocation3 + $0xb8] sm:$0xff] %v1799
      %1864 = vst [vmem:[#allocation3 + $0xc0] sm:$0xff] %v1800
      %1865 = vst [vmem:[#allocation3 + $0xc8] sm:$0xff] %v1801
      %1866 = vst [vmem:[#allocation3 + $0xd0] sm:$0xff] %v1802
      %1867 = vst [vmem:[#allocation3 + $0xd8] sm:$0xff] %v1803
      %1868 = vst [vmem:[#allocation3 + $0xe0] sm:$0xff] %v1804
      %1869 = vst [vmem:[#allocation3 + $0xe8] sm:$0xff] %v1805
      %1870 = vst [vmem:[#allocation3 + $0xf0] sm:$0xff] %v1806
      %1871 = vst [vmem:[#allocation3 + $0xf8] sm:$0xff] %v1807
      %1872 = vst [vmem:[#allocation3 + $0x100] sm:$0xff] %v1808
      %1873 = vst [vmem:[#allocation3 + $0x108] sm:$0xff] %v1809
      %1874 = vst [vmem:[#allocation3 + $0x110] sm:$0xff] %v1810
      %1875 = vst [vmem:[#allocation3 + $0x118] sm:$0xff] %v1811
      %1876 = vst [vmem:[#allocation3 + $0x120] sm:$0xff] %v1812
      %1877 = vst [vmem:[#allocation3 + $0x128] sm:$0xff] %v1813
      %1878 = vst [vmem:[#allocation3 + $0x130] sm:$0xff] %v1814
      %1879 = vst [vmem:[#allocation3 + $0x138] sm:$0xff] %v1815
      %1880 = vst [vmem:[#allocation3 + $0x140] sm:$0xff] %v1816
      %1881 = vst [vmem:[#allocation3 + $0x148] sm:$0xff] %v1817
      %1882 = vst [vmem:[#allocation3 + $0x150] sm:$0xff] %v1818
      %1883 = vst [vmem:[#allocation3 + $0x158] sm:$0xff] %v1819
      %1884 = vst [vmem:[#allocation3 + $0x160] sm:$0xff] %v1820
      %1885 = vst [vmem:[#allocation3 + $0x168] sm:$0xff] %v1821
      %1886 = vst [vmem:[#allocation3 + $0x170] sm:$0xff] %v1822
      %1887 = vst [vmem:[#allocation3 + $0x178] sm:$0xff] %v1823
      %1888 = vst [vmem:[#allocation3 + $0x180] sm:$0xff] %v1824
      %1889 = vst [vmem:[#allocation3 + $0x188] sm:$0xff] %v1825
      %1890 = vst [vmem:[#allocation3 + $0x190] sm:$0xff] %v1826
      %1891 = vst [vmem:[#allocation3 + $0x198] sm:$0xff] %v1827
      %1892 = vst [vmem:[#allocation3 + $0x1a0] sm:$0xff] %v1828
      %1893 = vst [vmem:[#allocation3 + $0x1a8] sm:$0xff] %v1829
      %1894 = vst [vmem:[#allocation3 + $0x1b0] sm:$0xff] %v1830
      %1895 = vst [vmem:[#allocation3 + $0x1b8] sm:$0xff] %v1831
      %1896 = vst [vmem:[#allocation3 + $0x1c0] sm:$0xff] %v1832
      %1897 = vst [vmem:[#allocation3 + $0x1c8] sm:$0xff] %v1833
      %1898 = vst [vmem:[#allocation3 + $0x1d0] sm:$0xff] %v1834
      %1899 = vst [vmem:[#allocation3 + $0x1d8] sm:$0xff] %v1835
      %1900 = vst [vmem:[#allocation3 + $0x1e0] sm:$0xff] %v1836
      %1901 = vst [vmem:[#allocation3 + $0x1e8] sm:$0xff] %v1837
      %1902 = vst [vmem:[#allocation3 + $0x1f0] sm:$0xff] %v1838
      %1903 = vst [vmem:[#allocation3 + $0x1f8] sm:$0xff] %v1839
    $region21: #{gqa_forward.5} parent=1 // pred_fallthru
      _
    // Predicated region
    $region22: #{gqa_forward.5} parent=1 // pred_check
      _
    $region23: #{gqa_forward.5} parent=1 // pred_check_branch
      %1905 = sbr.rel (0) target = $region25
    $region24: #{gqa_forward.5} parent=1 // pred_region
      %s1907 = ssub.s32 8192, 8192
      %1908 = vsyncadd [#allocation4], %s1907
      %s1909 = sshll.u32 [#allocation3], 4
      %s1910 = int_to_ptr.vmem [resolvable:$true] %s1909
      %1915 = dma.vmem_to_hbm [thread:$0]  %s1910, 8192, %s3, [#allocation4], 512, 512, 32
    $region25: #{gqa_forward.5} parent=1 // pred_fallthru
      _
    // Predicated region
    $region26: #{gqa_forward.5} parent=1 // pred_check
      _
    $region27: #{gqa_forward.5} parent=1 // pred_check_branch
      %1917 = sbr.rel (0) target = $region29
    $region28: #{gqa_forward.5} parent=1 // pred_region
      %1918 = dma.done [#allocation4], 8192
    $region29: #{gqa_forward.5} parent=1 // pred_fallthru
      _
    %1919 = vsyncpa [#allocation4], 1

// kernel: gqa_forward.3
$region0: #{gqa_forward.3}
  #allocation0 [shape = 'u32[]', space=smem, size = 0x4, offset = 0x4, fixed_abs, tag = 'smem constant byte address 0x4 - core index']
  #allocation1 [shape = 'u32[144,128]{1,0:T(1,128)}', space=vmem, size = 0x12000, scoped, tag = 'internal scratch']
  #allocation2 [shape = 'f32[128,512]{1,0:T(8,128)}', space=vmem, size = 0x40000, scoped, tag = 'scratch operand']
  %s0 = inlined_call_operand.vmem [shape: bf16[128,512], index: 0, kind: input, shape index: {}]
  %s1 = inlined_call_operand.hbm [shape: bf16[512,1024], index: 1, kind: input, shape index: {}]
  %s2 = inlined_call_operand.vmem [shape: f32[1,1024], index: 2, kind: input, shape index: {}]
  %s3 = inlined_call_operand.vmem [shape: bf16[128,1024], index: 3, kind: output, shape index: {}]
  %s4 = sld [smem:[#allocation0]]
  $region76: #{gqa_forward.3} parent=0
    _
  %s6 = ssub.s32 1, %s4
  %s7 = scalar_select 0, %s6, %s4
  $region1: #{gqa_forward.3} parent=0
    #allocation3 [shape = 'u8[1048576]{0}', space=vmem, size = 0x100000, scoped, tag = 'input window, operand 1']
    #allocation4 [shape = 's32[2]{0}', space=sflag, size = 0x8, scoped, tag = 'scoped memory for gqa_forward.3']
    #allocation5 [shape = 'u8[262144]{0}', space=vmem, size = 0x40000, scoped, tag = 'output window, operand 0']
    %8 = vsyncpa [#allocation4], 0
    %s9 = scalar_lea.sflag [#allocation4], 1
    %10 = vsyncpa %s9, 0
    loop: start=0, step=1, limit=4
    $region2: #{gqa_forward.3} parent=1 // loop_pre_header
      _
    $region3: #{gqa_forward.3} parent=1 // loop_header
      %s12 = sphi 0, %s16
      %p13 = scmp.ge.s32.totalorder %s12, 4
      %s19 = sphi 0, %s38
      %s20 = sphi 0, %s34
      %s21 = sphi 0, %s30
      %s22 = sphi 0, %s19
      %s23 = sphi 0, %s20
      %s24 = sphi 0, %s21
      %s25 = sphi 0, %s22
      %s26 = sphi 0, %s23
      %s27 = sphi 0, %s24
      %s43 = sphi 0, %s45
      %s46 = sphi 0, %s43
      %s47 = sphi 0, %s46
      %s63 = sphi 0, %s47
      %s71 = sphi 0, %s73
      %s74 = sphi 0, %s71
      %s75 = sphi 0, %s74
      %s91 = sphi 0, %s75
      %s97 = sphi 0, %s99
      %s100 = sphi 0, %s97
      %s101 = sphi 0, %s100
      %s117 = sphi 0, %s101
      %s125 = sphi 0, %s127
      %s128 = sphi 0, %s125
      %s129 = sphi 0, %s128
      %s145 = sphi 0, %s129
    $region4: #{gqa_forward.3} parent=1 // loop_header_branch
      %15 = sbr.rel (%p13) target = $region8
    $region5: #{gqa_forward.3} parent=1 // loop_body
      %s17 = ssub.s32 %s12, 1
      %s18 = ssub.s32 %s12, 2
      %s28 = sadd.s32 1, %s21
      %p29 = scmp.ge.s32.totalorder %s28, 1
      %s30 = scalar_select %p29, 0, %s28
      %s31 = sadd.s32 1, %s20
      %s32 = scalar_select %p29, %s31, %s20
      %p33 = scmp.ge.s32.totalorder %s32, 2
      %s34 = scalar_select %p33, 0, %s32
      %s35 = sadd.s32 1, %s19
      %s36 = scalar_select %p33, %s35, %s19
      %p37 = scmp.ge.s32.totalorder %s36, 1
      %s38 = scalar_select %p37, 0, %s36
      %s39 = ssub.s32 %s19, %s38
      %s40 = ssub.s32 %s21, %s30
      %s41 = sor.u32 %s39, %s40
      %p42 = scmp.eq.s32.totalorder %s41, 0
      %s44 = sadd.s32 %s43, 1
      %s45 = scalar_select %p42, %s43, %s44
      %p48 = pneg %p42
      %p49 = scmp.eq.s32.totalorder %s12, 1
      %p50 = por %p48, %p49
      %p51 = scmp.ne.s32.totalorder %s43, %s46
      %p52 = scmp.eq.s32.totalorder %s12, 0
      %p53 = por %p51, %p52
      %p54 = scmp.ne.s32.totalorder %s43, %s46
      %p55 = scmp.eq.s32.totalorder %s17, 1
      %p56 = por %p54, %p55
      %p57 = scmp.ne.s32.totalorder %s46, %s47
      %p58 = scmp.eq.s32.totalorder %s17, 0
      %p59 = por %p57, %p58
      %p60 = scmp.ne.s32.totalorder %s46, %s47
      %p61 = scmp.eq.s32.totalorder %s18, 1
      %p62 = por %p60, %p61
      %p64 = scmp.ne.s32.totalorder %s47, %s63
      %p65 = scmp.eq.s32.totalorder %s18, 0
      %p66 = por %p64, %p65
      %s67 = ssub.s32 %s21, %s30
      %s68 = ssub.s32 %s20, %s34
      %s69 = sor.u32 %s67, %s68
      %p70 = scmp.eq.s32.totalorder %s69, 0
      %s72 = sadd.s32 %s71, 1
      %s73 = scalar_select %p70, %s71, %s72
      %p76 = pneg %p70
      %p77 = scmp.eq.s32.totalorder %s12, 1
      %p78 = por %p76, %p77
      %p79 = scmp.ne.s32.totalorder %s71, %s74
      %p80 = scmp.eq.s32.totalorder %s12, 0
      %p81 = por %p79, %p80
      %p82 = scmp.ne.s32.totalorder %s71, %s74
      %p83 = scmp.eq.s32.totalorder %s17, 1
      %p84 = por %p82, %p83
      %p85 = scmp.ne.s32.totalorder %s74, %s75
      %p86 = scmp.eq.s32.totalorder %s17, 0
      %p87 = por %p85, %p86
      %p88 = scmp.ne.s32.totalorder %s74, %s75
      %p89 = scmp.eq.s32.totalorder %s18, 1
      %p90 = por %p88, %p89
      %p92 = scmp.ne.s32.totalorder %s75, %s91
      %p93 = scmp.eq.s32.totalorder %s18, 0
      %p94 = por %p92, %p93
      %s95 = ssub.s32 %s20, %s34
      %p96 = scmp.eq.s32.totalorder %s95, 0
      %s98 = sadd.s32 %s97, 1
      %s99 = scalar_select %p96, %s97, %s98
      %p102 = pneg %p96
      %p103 = scmp.eq.s32.totalorder %s12, 1
      %p104 = por %p102, %p103
      %p105 = scmp.ne.s32.totalorder %s97, %s100
      %p106 = scmp.eq.s32.totalorder %s12, 0
      %p107 = por %p105, %p106
      %p108 = scmp.ne.s32.totalorder %s97, %s100
      %p109 = scmp.eq.s32.totalorder %s17, 1
      %p110 = por %p108, %p109
      %p111 = scmp.ne.s32.totalorder %s100, %s101
      %p112 = scmp.eq.s32.totalorder %s17, 0
      %p113 = por %p111, %p112
      %p114 = scmp.ne.s32.totalorder %s100, %s101
      %p115 = scmp.eq.s32.totalorder %s18, 1
      %p116 = por %p114, %p115
      %p118 = scmp.ne.s32.totalorder %s101, %s117
      %p119 = scmp.eq.s32.totalorder %s18, 0
      %p120 = por %p118, %p119
      %s121 = ssub.s32 %s19, %s38
      %s122 = ssub.s32 %s20, %s34
      %s123 = sor.u32 %s121, %s122
      %p124 = scmp.eq.s32.totalorder %s123, 0
      %s126 = sadd.s32 %s125, 1
      %s127 = scalar_select %p124, %s125, %s126
      %p130 = pneg %p124
      %p131 = scmp.eq.s32.totalorder %s12, 1
      %p132 = por %p130, %p131
      %p133 = scmp.ne.s32.totalorder %s125, %s128
      %p134 = scmp.eq.s32.totalorder %s12, 0
      %p135 = por %p133, %p134
      %p136 = scmp.ne.s32.totalorder %s125, %s128
      %p137 = scmp.eq.s32.totalorder %s17, 1
      %p138 = por %p136, %p137
      %p139 = scmp.ne.s32.totalorder %s128, %s129
      %p140 = scmp.eq.s32.totalorder %s17, 0
      %p141 = por %p139, %p140
      %p142 = scmp.ne.s32.totalorder %s128, %s129
      %p143 = scmp.eq.s32.totalorder %s18, 1
      %p144 = por %p142, %p143
      %p146 = scmp.ne.s32.totalorder %s129, %s145
      %p147 = scmp.eq.s32.totalorder %s18, 0
      %p148 = por %p146, %p147
      %p149 = scmp.le.s32.totalorder 1, %s12
      %p150 = scmp.lt.s32.totalorder %s12, 3
      %p151 = pnand %p149, %p150
      %p152 = pneg %p151
      // Predicated region
      $region9: #{gqa_forward.3} parent=5 // pred_check
        _
      $region10: #{gqa_forward.3} parent=5 // pred_check_branch
        %154 = sbr.rel (%p151) target = $region12
      $region11: #{gqa_forward.3} parent=5 // pred_region
        %s155 = ssub.s32 %s12, 1
        // Predicated region
        $region13: #{gqa_forward.3} parent=11 // pred_check
          %p156 = pneg %p59
        $region14: #{gqa_forward.3} parent=11 // pred_check_branch
          %158 = sbr.rel (%p156) target = $region16
        $region15: #{gqa_forward.3} parent=11 // pred_region
          %s159 = smul.u32 16, %s22
          %s160 = smul.u32 4, %s24
          %p161 = scmp.lt.s32.totalorder %s159, 15
          %s162 = scalar_select %p161, %s159, 15
          %p163 = scmp.lt.s32.totalorder %s160, 3
          %s164 = scalar_select %p163, %s160, 3
          %s165 = smul.addr %s162, 4
          %s166 = sadd.s32 %s164, %s165
          %s167 = smul.addr %s166, 4
          %s168 = scalar_lea.vmem %s0, %s167
          %s169 = smul.u32 16, %s22
          %s170 = smul.u32 4, %s24
        $region16: #{gqa_forward.3} parent=11 // pred_fallthru
          _
      $region12: #{gqa_forward.3} parent=5 // pred_fallthru
        _
      %p171 = scmp.lt.s32.totalorder %s12, 2
      // Predicated region
      $region17: #{gqa_forward.3} parent=5 // pred_check
        %p172 = pneg %p171
      $region18: #{gqa_forward.3} parent=5 // pred_check_branch
        %174 = sbr.rel (%p172) target = $region20
      $region19: #{gqa_forward.3} parent=5 // pred_region
        // Predicated region
        $region21: #{gqa_forward.3} parent=19 // pred_check
          %p175 = pneg %p81
        $region22: #{gqa_forward.3} parent=19 // pred_check_branch
          %177 = sbr.rel (%p175) target = $region24
        $region23: #{gqa_forward.3} parent=19 // pred_region
          %s178 = sand.u32 %s71, 1
          %s179 = scalar_lea.sflag [#allocation4], %s178
          %s180 = sand.u32 %s71, 1
          %s181 = smul.addr %s180, 1024
          %s182 = scalar_lea.vmem [#allocation3], %s181
          %s183 = smul.u32 64, %s21
          %s184 = smul.u32 4, %s20
          %s186 = ssub.s32 16384, 16384
          %187 = vsyncadd %s179, %s186
          %s188 = smul.addr %s183, 8
          %s189 = sadd.s32 %s184, %s188
          %s190 = smul.addr %s189, 64
          %s191 = scalar_lea.hbm %s1, %s190
          %s192 = sshll.u32 %s182, 4
          %s193 = int_to_ptr.vmem [resolvable:$true] %s192
          %198 = dma.hbm_to_vmem [thread:$0]  %s191, 16384, %s193, %s179, 512, 256, 16
        $region24: #{gqa_forward.3} parent=19 // pred_fallthru
          _
        // Predicated region
        $region25: #{gqa_forward.3} parent=19 // pred_check
          %p199 = pneg %p107
        $region26: #{gqa_forward.3} parent=19 // pred_check_branch
          %201 = sbr.rel (%p199) target = $region28
        $region27: #{gqa_forward.3} parent=19 // pred_region
          %s202 = smul.u32 4, %s20
          %p203 = scmp.lt.s32.totalorder %s202, 7
          %s204 = scalar_select %p203, %s202, 7
          %s205 = scalar_lea.vmem %s2, %s204
          %s206 = smul.u32 4, %s20
        $region28: #{gqa_forward.3} parent=19 // pred_fallthru
          _
      $region20: #{gqa_forward.3} parent=5 // pred_fallthru
        _
      %p207 = scmp.le.s32.totalorder 1, %s12
      %p208 = scmp.lt.s32.totalorder %s12, 3
      %p209 = pnand %p207, %p208
      %p210 = pneg %p209
      // Predicated region
      $region29: #{gqa_forward.3} parent=5 // pred_check
        _
      $region30: #{gqa_forward.3} parent=5 // pred_check_branch
        %212 = sbr.rel (%p209) target = $region32
      $region31: #{gqa_forward.3} parent=5 // pred_region
        %s213 = ssub.s32 %s12, 1
        %s214 = sand.u32 %s74, 1
        %s215 = scalar_lea.sflag [#allocation4], %s214
        %s216 = sand.u32 %s74, 1
        %s217 = smul.addr %s216, 1024
        %s218 = scalar_lea.vmem [#allocation3], %s217
        // Predicated region
        $region33: #{gqa_forward.3} parent=31 // pred_check
          %p219 = pneg %p87
        $region34: #{gqa_forward.3} parent=31 // pred_check_branch
          %221 = sbr.rel (%p219) target = $region36
        $region35: #{gqa_forward.3} parent=31 // pred_region
          %222 = dma.done %s215, 16384
        $region36: #{gqa_forward.3} parent=31 // pred_fallthru
          _
        %s223 = smul.u32 16, %s22
        %s224 = smul.u32 4, %s24
        %p225 = scmp.lt.s32.totalorder %s223, 15
        %s226 = scalar_select %p225, %s223, 15
        %p227 = scmp.lt.s32.totalorder %s224, 3
        %s228 = scalar_select %p227, %s224, 3
        %s229 = smul.addr %s226, 4
        %s230 = sadd.s32 %s228, %s229
        %s231 = smul.addr %s230, 4
        %s232 = scalar_lea.vmem %s0, %s231
        %p233 = pneg %p59
        %p234 = pneg %p56
        %s235 = sand.u32 %s74, 1
        %s236 = scalar_lea.sflag [#allocation4], %s235
        %s237 = sand.u32 %s74, 1
        %s238 = smul.addr %s237, 1024
        %s239 = scalar_lea.vmem [#allocation3], %s238
        %p240 = pneg %p87
        %p241 = pneg %p84
        %s242 = smul.u32 4, %s23
        %p243 = scmp.lt.s32.totalorder %s242, 7
        %s244 = scalar_select %p243, %s242, 7
        %s245 = scalar_lea.vmem %s2, %s244
        %p246 = pneg %p113
        %p247 = pneg %p110
        %p248 = pneg %p141
        %p249 = pneg %p138
        %s250 = sand.u32 %s128, 1
        %s251 = sand.u32 %s128, 1
        %s252 = smul.addr %s251, 256
        %s253 = scalar_lea.vmem [#allocation5], %s252
        %s254 = smul.u32 16, %s22
        %s255 = smul.u32 4, %s24
        %p256 = scmp.lt.s32.totalorder %s254, 15
        %s257 = scalar_select %p256, %s254, 15
        %p258 = scmp.lt.s32.totalorder %s255, 3
        %s259 = scalar_select %p258, %s255, 3
        %s260 = smul.addr %s257, 4
        %s261 = sadd.s32 %s259, %s260
        %s262 = smul.addr %s261, 4
        %s263 = scalar_lea.vmem %s0, %s262
        %s264 = smul.u32 16, %s22
        %s265 = smul.u32 4, %s24
        %s266 = smul.u32 64, %s24
        %s267 = smul.u32 4, %s23
        %s268 = smul.u32 4, %s23
        %p269 = scmp.lt.s32.totalorder %s268, 7
        %s270 = scalar_select %p269, %s268, 7
        %s271 = scalar_lea.vmem %s2, %s270
        %s272 = smul.u32 4, %s23
        %s273 = smul.u32 16, %s22
        %s274 = smul.u32 4, %s23
        %p275 = scmp.eq.s32.totalorder %s24, 0
        // Predicated region
        $region37: #{gqa_forward.3} parent=31 // pred_check
          %p276 = pneg %p275
        $region38: #{gqa_forward.3} parent=31 // pred_check_branch
          %278 = sbr.rel (%p276) target = $region40
        $region39: #{gqa_forward.3} parent=31 // pred_region
          %279 = vst [vmem:[#allocation2] sm:$0xff] 0.0
          %280 = vst [vmem:[#allocation2 + $0x8] sm:$0xff] 0.0
          %281 = vst [vmem:[#allocation2 + $0x10] sm:$0xff] 0.0
          %282 = vst [vmem:[#allocation2 + $0x18] sm:$0xff] 0.0
          %283 = vst [vmem:[#allocation2 + $0x20] sm:$0xff] 0.0
          %284 = vst [vmem:[#allocation2 + $0x28] sm:$0xff] 0.0
          %285 = vst [vmem:[#allocation2 + $0x30] sm:$0xff] 0.0
          %286 = vst [vmem:[#allocation2 + $0x38] sm:$0xff] 0.0
          %287 = vst [vmem:[#allocation2 + $0x40] sm:$0xff] 0.0
          %288 = vst [vmem:[#allocation2 + $0x48] sm:$0xff] 0.0
          %289 = vst [vmem:[#allocation2 + $0x50] sm:$0xff] 0.0
          %290 = vst [vmem:[#allocation2 + $0x58] sm:$0xff] 0.0
          %291 = vst [vmem:[#allocation2 + $0x60] sm:$0xff] 0.0
          %292 = vst [vmem:[#allocation2 + $0x68] sm:$0xff] 0.0
          %293 = vst [vmem:[#allocation2 + $0x70] sm:$0xff] 0.0
          %294 = vst [vmem:[#allocation2 + $0x78] sm:$0xff] 0.0
          %295 = vst [vmem:[#allocation2 + $0x80] sm:$0xff] 0.0
          %296 = vst [vmem:[#allocation2 + $0x88] sm:$0xff] 0.0
          %297 = vst [vmem:[#allocation2 + $0x90] sm:$0xff] 0.0
          %298 = vst [vmem:[#allocation2 + $0x98] sm:$0xff] 0.0
          %299 = vst [vmem:[#allocation2 + $0xa0] sm:$0xff] 0.0
          %300 = vst [vmem:[#allocation2 + $0xa8] sm:$0xff] 0.0
          %301 = vst [vmem:[#allocation2 + $0xb0] sm:$0xff] 0.0
          %302 = vst [vmem:[#allocation2 + $0xb8] sm:$0xff] 0.0
          %303 = vst [vmem:[#allocation2 + $0xc0] sm:$0xff] 0.0
          %304 = vst [vmem:[#allocation2 + $0xc8] sm:$0xff] 0.0
          %305 = vst [vmem:[#allocation2 + $0xd0] sm:$0xff] 0.0
          %306 = vst [vmem:[#allocation2 + $0xd8] sm:$0xff] 0.0
          %307 = vst [vmem:[#allocation2 + $0xe0] sm:$0xff] 0.0
          %308 = vst [vmem:[#allocation2 + $0xe8] sm:$0xff] 0.0
          %309 = vst [vmem:[#allocation2 + $0xf0] sm:$0xff] 0.0
          %310 = vst [vmem:[#allocation2 + $0xf8] sm:$0xff] 0.0
          %311 = vst [vmem:[#allocation2 + $0x100] sm:$0xff] 0.0
          %312 = vst [vmem:[#allocation2 + $0x108] sm:$0xff] 0.0
          %313 = vst [vmem:[#allocation2 + $0x110] sm:$0xff] 0.0
          %314 = vst [vmem:[#allocation2 + $0x118] sm:$0xff] 0.0
          %315 = vst [vmem:[#allocation2 + $0x120] sm:$0xff] 0.0
          %316 = vst [vmem:[#allocation2 + $0x128] sm:$0xff] 0.0
          %317 = vst [vmem:[#allocation2 + $0x130] sm:$0xff] 0.0
          %318 = vst [vmem:[#allocation2 + $0x138] sm:$0xff] 0.0
          %319 = vst [vmem:[#allocation2 + $0x140] sm:$0xff] 0.0
          %320 = vst [vmem:[#allocation2 + $0x148] sm:$0xff] 0.0
          %321 = vst [vmem:[#allocation2 + $0x150] sm:$0xff] 0.0
          %322 = vst [vmem:[#allocation2 + $0x158] sm:$0xff] 0.0
          %323 = vst [vmem:[#allocation2 + $0x160] sm:$0xff] 0.0
          %324 = vst [vmem:[#allocation2 + $0x168] sm:$0xff] 0.0
          %325 = vst [vmem:[#allocation2 + $0x170] sm:$0xff] 0.0
          %326 = vst [vmem:[#allocation2 + $0x178] sm:$0xff] 0.0
          %327 = vst [vmem:[#allocation2 + $0x180] sm:$0xff] 0.0
          %328 = vst [vmem:[#allocation2 + $0x188] sm:$0xff] 0.0
          %329 = vst [vmem:[#allocation2 + $0x190] sm:$0xff] 0.0
          %330 = vst [vmem:[#allocation2 + $0x198] sm:$0xff] 0.0
          %331 = vst [vmem:[#allocation2 + $0x1a0] sm:$0xff] 0.0
          %332 = vst [vmem:[#allocation2 + $0x1a8] sm:$0xff] 0.0
          %333 = vst [vmem:[#allocation2 + $0x1b0] sm:$0xff] 0.0
          %334 = vst [vmem:[#allocation2 + $0x1b8] sm:$0xff] 0.0
          %335 = vst [vmem:[#allocation2 + $0x1c0] sm:$0xff] 0.0
          %336 = vst [vmem:[#allocation2 + $0x1c8] sm:$0xff] 0.0
          %337 = vst [vmem:[#allocation2 + $0x1d0] sm:$0xff] 0.0
          %338 = vst [vmem:[#allocation2 + $0x1d8] sm:$0xff] 0.0
          %339 = vst [vmem:[#allocation2 + $0x1e0] sm:$0xff] 0.0
          %340 = vst [vmem:[#allocation2 + $0x1e8] sm:$0xff] 0.0
          %341 = vst [vmem:[#allocation2 + $0x1f0] sm:$0xff] 0.0
          %342 = vst [vmem:[#allocation2 + $0x1f8] sm:$0xff] 0.0
        $region40: #{gqa_forward.3} parent=31 // pred_fallthru
          _
        %v343 = vld [vmem:[#allocation2] sm:$0xff]
        %v344 = vld [vmem:[#allocation2 + $0x8] sm:$0xff]
        %v345 = vld [vmem:[#allocation2 + $0x10] sm:$0xff]
        %v346 = vld [vmem:[#allocation2 + $0x18] sm:$0xff]
        %v347 = vld [vmem:[#allocation2 + $0x20] sm:$0xff]
        %v348 = vld [vmem:[#allocation2 + $0x28] sm:$0xff]
        %v349 = vld [vmem:[#allocation2 + $0x30] sm:$0xff]
        %v350 = vld [vmem:[#allocation2 + $0x38] sm:$0xff]
        %v351 = vld [vmem:[#allocation2 + $0x40] sm:$0xff]
        %v352 = vld [vmem:[#allocation2 + $0x48] sm:$0xff]
        %v353 = vld [vmem:[#allocation2 + $0x50] sm:$0xff]
        %v354 = vld [vmem:[#allocation2 + $0x58] sm:$0xff]
        %v355 = vld [vmem:[#allocation2 + $0x60] sm:$0xff]
        %v356 = vld [vmem:[#allocation2 + $0x68] sm:$0xff]
        %v357 = vld [vmem:[#allocation2 + $0x70] sm:$0xff]
        %v358 = vld [vmem:[#allocation2 + $0x78] sm:$0xff]
        %v359 = vld [vmem:[#allocation2 + $0x80] sm:$0xff]
        %v360 = vld [vmem:[#allocation2 + $0x88] sm:$0xff]
        %v361 = vld [vmem:[#allocation2 + $0x90] sm:$0xff]
        %v362 = vld [vmem:[#allocation2 + $0x98] sm:$0xff]
        %v363 = vld [vmem:[#allocation2 + $0xa0] sm:$0xff]
        %v364 = vld [vmem:[#allocation2 + $0xa8] sm:$0xff]
        %v365 = vld [vmem:[#allocation2 + $0xb0] sm:$0xff]
        %v366 = vld [vmem:[#allocation2 + $0xb8] sm:$0xff]
        %v367 = vld [vmem:[#allocation2 + $0xc0] sm:$0xff]
        %v368 = vld [vmem:[#allocation2 + $0xc8] sm:$0xff]
        %v369 = vld [vmem:[#allocation2 + $0xd0] sm:$0xff]
        %v370 = vld [vmem:[#allocation2 + $0xd8] sm:$0xff]
        %v371 = vld [vmem:[#allocation2 + $0xe0] sm:$0xff]
        %v372 = vld [vmem:[#allocation2 + $0xe8] sm:$0xff]
        %v373 = vld [vmem:[#allocation2 + $0xf0] sm:$0xff]
        %v374 = vld [vmem:[#allocation2 + $0xf8] sm:$0xff]
        %v375 = vld [vmem:[#allocation2 + $0x100] sm:$0xff]
        %v376 = vld [vmem:[#allocation2 + $0x108] sm:$0xff]
        %v377 = vld [vmem:[#allocation2 + $0x110] sm:$0xff]
        %v378 = vld [vmem:[#allocation2 + $0x118] sm:$0xff]
        %v379 = vld [vmem:[#allocation2 + $0x120] sm:$0xff]
        %v380 = vld [vmem:[#allocation2 + $0x128] sm:$0xff]
        %v381 = vld [vmem:[#allocation2 + $0x130] sm:$0xff]
        %v382 = vld [vmem:[#allocation2 + $0x138] sm:$0xff]
        %v383 = vld [vmem:[#allocation2 + $0x140] sm:$0xff]
        %v384 = vld [vmem:[#allocation2 + $0x148] sm:$0xff]
        %v385 = vld [vmem:[#allocation2 + $0x150] sm:$0xff]
        %v386 = vld [vmem:[#allocation2 + $0x158] sm:$0xff]
        %v387 = vld [vmem:[#allocation2 + $0x160] sm:$0xff]
        %v388 = vld [vmem:[#allocation2 + $0x168] sm:$0xff]
        %v389 = vld [vmem:[#allocation2 + $0x170] sm:$0xff]
        %v390 = vld [vmem:[#allocation2 + $0x178] sm:$0xff]
        %v391 = vld [vmem:[#allocation2 + $0x180] sm:$0xff]
        %v392 = vld [vmem:[#allocation2 + $0x188] sm:$0xff]
        %v393 = vld [vmem:[#allocation2 + $0x190] sm:$0xff]
        %v394 = vld [vmem:[#allocation2 + $0x198] sm:$0xff]
        %v395 = vld [vmem:[#allocation2 + $0x1a0] sm:$0xff]
        %v396 = vld [vmem:[#allocation2 + $0x1a8] sm:$0xff]
        %v397 = vld [vmem:[#allocation2 + $0x1b0] sm:$0xff]
        %v398 = vld [vmem:[#allocation2 + $0x1b8] sm:$0xff]
        %v399 = vld [vmem:[#allocation2 + $0x1c0] sm:$0xff]
        %v400 = vld [vmem:[#allocation2 + $0x1c8] sm:$0xff]
        %v401 = vld [vmem:[#allocation2 + $0x1d0] sm:$0xff]
        %v402 = vld [vmem:[#allocation2 + $0x1d8] sm:$0xff]
        %v403 = vld [vmem:[#allocation2 + $0x1e0] sm:$0xff]
        %v404 = vld [vmem:[#allocation2 + $0x1e8] sm:$0xff]
        %v405 = vld [vmem:[#allocation2 + $0x1f0] sm:$0xff]
        %v406 = vld [vmem:[#allocation2 + $0x1f8] sm:$0xff]
        %v407 = vld [vmem:[%s263] sm:$0xff]
        %v408 = vld [vmem:[%s263 + $0x8] sm:$0xff]
        %v409 = vld [vmem:[%s263 + $0x10] sm:$0xff]
        %v410 = vld [vmem:[%s263 + $0x18] sm:$0xff]
        %v411 = vld [vmem:[%s263 + $0x20] sm:$0xff]
        %v412 = vld [vmem:[%s263 + $0x28] sm:$0xff]
        %v413 = vld [vmem:[%s263 + $0x30] sm:$0xff]
        %v414 = vld [vmem:[%s263 + $0x38] sm:$0xff]
        %v415 = vld [vmem:[%s263 + $0x40] sm:$0xff]
        %v416 = vld [vmem:[%s263 + $0x48] sm:$0xff]
        %v417 = vld [vmem:[%s263 + $0x50] sm:$0xff]
        %v418 = vld [vmem:[%s263 + $0x58] sm:$0xff]
        %v419 = vld [vmem:[%s263 + $0x60] sm:$0xff]
        %v420 = vld [vmem:[%s263 + $0x68] sm:$0xff]
        %v421 = vld [vmem:[%s263 + $0x70] sm:$0xff]
        %v422 = vld [vmem:[%s263 + $0x78] sm:$0xff]
        %v423 = vld [vmem:[%s263 + $0x80] sm:$0xff]
        %v424 = vld [vmem:[%s263 + $0x88] sm:$0xff]
        %v425 = vld [vmem:[%s263 + $0x90] sm:$0xff]
        %v426 = vld [vmem:[%s263 + $0x98] sm:$0xff]
        %v427 = vld [vmem:[%s263 + $0xa0] sm:$0xff]
        %v428 = vld [vmem:[%s263 + $0xa8] sm:$0xff]
        %v429 = vld [vmem:[%s263 + $0xb0] sm:$0xff]
        %v430 = vld [vmem:[%s263 + $0xb8] sm:$0xff]
        %v431 = vld [vmem:[%s263 + $0xc0] sm:$0xff]
        %v432 = vld [vmem:[%s263 + $0xc8] sm:$0xff]
        %v433 = vld [vmem:[%s263 + $0xd0] sm:$0xff]
        %v434 = vld [vmem:[%s263 + $0xd8] sm:$0xff]
        %v435 = vld [vmem:[%s263 + $0xe0] sm:$0xff]
        %v436 = vld [vmem:[%s263 + $0xe8] sm:$0xff]
        %v437 = vld [vmem:[%s263 + $0xf0] sm:$0xff]
        %v438 = vld [vmem:[%s263 + $0xf8] sm:$0xff]
        %v439 = vld [vmem:[%s218] sm:$0xff]
        %v440 = vld [vmem:[%s218 + $0x8] sm:$0xff]
        %v441 = vld [vmem:[%s218 + $0x10] sm:$0xff]
        %v442 = vld [vmem:[%s218 + $0x18] sm:$0xff]
        %v443 = vld [vmem:[%s218 + $0x20] sm:$0xff]
        %v444 = vld [vmem:[%s218 + $0x28] sm:$0xff]
        %v445 = vld [vmem:[%s218 + $0x30] sm:$0xff]
        %v446 = vld [vmem:[%s218 + $0x38] sm:$0xff]
        %v447 = vld [vmem:[%s218 + $0x40] sm:$0xff]
        %v448 = vld [vmem:[%s218 + $0x48] sm:$0xff]
        %v449 = vld [vmem:[%s218 + $0x50] sm:$0xff]
        %v450 = vld [vmem:[%s218 + $0x58] sm:$0xff]
        %v451 = vld [vmem:[%s218 + $0x60] sm:$0xff]
        %v452 = vld [vmem:[%s218 + $0x68] sm:$0xff]
        %v453 = vld [vmem:[%s218 + $0x70] sm:$0xff]
        %v454 = vld [vmem:[%s218 + $0x78] sm:$0xff]
        %v455 = vld [vmem:[%s218 + $0x80] sm:$0xff]
        %v456 = vld [vmem:[%s218 + $0x88] sm:$0xff]
        %v457 = vld [vmem:[%s218 + $0x90] sm:$0xff]
        %v458 = vld [vmem:[%s218 + $0x98] sm:$0xff]
        %v459 = vld [vmem:[%s218 + $0xa0] sm:$0xff]
        %v460 = vld [vmem:[%s218 + $0xa8] sm:$0xff]
        %v461 = vld [vmem:[%s218 + $0xb0] sm:$0xff]
        %v462 = vld [vmem:[%s218 + $0xb8] sm:$0xff]
        %v463 = vld [vmem:[%s218 + $0xc0] sm:$0xff]
        %v464 = vld [vmem:[%s218 + $0xc8] sm:$0xff]
        %v465 = vld [vmem:[%s218 + $0xd0] sm:$0xff]
        %v466 = vld [vmem:[%s218 + $0xd8] sm:$0xff]
        %v467 = vld [vmem:[%s218 + $0xe0] sm:$0xff]
        %v468 = vld [vmem:[%s218 + $0xe8] sm:$0xff]
        %v469 = vld [vmem:[%s218 + $0xf0] sm:$0xff]
        %v470 = vld [vmem:[%s218 + $0xf8] sm:$0xff]
        %v471 = vld [vmem:[%s218 + $0x100] sm:$0xff]
        %v472 = vld [vmem:[%s218 + $0x108] sm:$0xff]
        %v473 = vld [vmem:[%s218 + $0x110] sm:$0xff]
        %v474 = vld [vmem:[%s218 + $0x118] sm:$0xff]
        %v475 = vld [vmem:[%s218 + $0x120] sm:$0xff]
        %v476 = vld [vmem:[%s218 + $0x128] sm:$0xff]
        %v477 = vld [vmem:[%s218 + $0x130] sm:$0xff]
        %v478 = vld [vmem:[%s218 + $0x138] sm:$0xff]
        %v479 = vld [vmem:[%s218 + $0x140] sm:$0xff]
        %v480 = vld [vmem:[%s218 + $0x148] sm:$0xff]
        %v481 = vld [vmem:[%s218 + $0x150] sm:$0xff]
        %v482 = vld [vmem:[%s218 + $0x158] sm:$0xff]
        %v483 = vld [vmem:[%s218 + $0x160] sm:$0xff]
        %v484 = vld [vmem:[%s218 + $0x168] sm:$0xff]
        %v485 = vld [vmem:[%s218 + $0x170] sm:$0xff]
        %v486 = vld [vmem:[%s218 + $0x178] sm:$0xff]
        %v487 = vld [vmem:[%s218 + $0x180] sm:$0xff]
        %v488 = vld [vmem:[%s218 + $0x188] sm:$0xff]
        %v489 = vld [vmem:[%s218 + $0x190] sm:$0xff]
        %v490 = vld [vmem:[%s218 + $0x198] sm:$0xff]
        %v491 = vld [vmem:[%s218 + $0x1a0] sm:$0xff]
        %v492 = vld [vmem:[%s218 + $0x1a8] sm:$0xff]
        %v493 = vld [vmem:[%s218 + $0x1b0] sm:$0xff]
        %v494 = vld [vmem:[%s218 + $0x1b8] sm:$0xff]
        %v495 = vld [vmem:[%s218 + $0x1c0] sm:$0xff]
        %v496 = vld [vmem:[%s218 + $0x1c8] sm:$0xff]
        %v497 = vld [vmem:[%s218 + $0x1d0] sm:$0xff]
        %v498 = vld [vmem:[%s218 + $0x1d8] sm:$0xff]
        %v499 = vld [vmem:[%s218 + $0x1e0] sm:$0xff]
        %v500 = vld [vmem:[%s218 + $0x1e8] sm:$0xff]
        %v501 = vld [vmem:[%s218 + $0x1f0] sm:$0xff]
        %v502 = vld [vmem:[%s218 + $0x1f8] sm:$0xff]
        %v503 = vld [vmem:[%s218 + $0x200] sm:$0xff]
        %v504 = vld [vmem:[%s218 + $0x208] sm:$0xff]
        %v505 = vld [vmem:[%s218 + $0x210] sm:$0xff]
        %v506 = vld [vmem:[%s218 + $0x218] sm:$0xff]
        %v507 = vld [vmem:[%s218 + $0x220] sm:$0xff]
        %v508 = vld [vmem:[%s218 + $0x228] sm:$0xff]
        %v509 = vld [vmem:[%s218 + $0x230] sm:$0xff]
        %v510 = vld [vmem:[%s218 + $0x238] sm:$0xff]
        %v511 = vld [vmem:[%s218 + $0x240] sm:$0xff]
        %v512 = vld [vmem:[%s218 + $0x248] sm:$0xff]
        %v513 = vld [vmem:[%s218 + $0x250] sm:$0xff]
        %v514 = vld [vmem:[%s218 + $0x258] sm:$0xff]
        %v515 = vld [vmem:[%s218 + $0x260] sm:$0xff]
        %v516 = vld [vmem:[%s218 + $0x268] sm:$0xff]
        %v517 = vld [vmem:[%s218 + $0x270] sm:$0xff]
        %v518 = vld [vmem:[%s218 + $0x278] sm:$0xff]
        %v519 = vld [vmem:[%s218 + $0x280] sm:$0xff]
        %v520 = vld [vmem:[%s218 + $0x288] sm:$0xff]
        %v521 = vld [vmem:[%s218 + $0x290] sm:$0xff]
        %v522 = vld [vmem:[%s218 + $0x298] sm:$0xff]
        %v523 = vld [vmem:[%s218 + $0x2a0] sm:$0xff]
        %v524 = vld [vmem:[%s218 + $0x2a8] sm:$0xff]
        %v525 = vld [vmem:[%s218 + $0x2b0] sm:$0xff]
        %v526 = vld [vmem:[%s218 + $0x2b8] sm:$0xff]
        %v527 = vld [vmem:[%s218 + $0x2c0] sm:$0xff]
        %v528 = vld [vmem:[%s218 + $0x2c8] sm:$0xff]
        %v529 = vld [vmem:[%s218 + $0x2d0] sm:$0xff]
        %v530 = vld [vmem:[%s218 + $0x2d8] sm:$0xff]
        %v531 = vld [vmem:[%s218 + $0x2e0] sm:$0xff]
        %v532 = vld [vmem:[%s218 + $0x2e8] sm:$0xff]
        %v533 = vld [vmem:[%s218 + $0x2f0] sm:$0xff]
        %v534 = vld [vmem:[%s218 + $0x2f8] sm:$0xff]
        %v535 = vld [vmem:[%s218 + $0x300] sm:$0xff]
        %v536 = vld [vmem:[%s218 + $0x308] sm:$0xff]
        %v537 = vld [vmem:[%s218 + $0x310] sm:$0xff]
        %v538 = vld [vmem:[%s218 + $0x318] sm:$0xff]
        %v539 = vld [vmem:[%s218 + $0x320] sm:$0xff]
        %v540 = vld [vmem:[%s218 + $0x328] sm:$0xff]
        %v541 = vld [vmem:[%s218 + $0x330] sm:$0xff]
        %v542 = vld [vmem:[%s218 + $0x338] sm:$0xff]
        %v543 = vld [vmem:[%s218 + $0x340] sm:$0xff]
        %v544 = vld [vmem:[%s218 + $0x348] sm:$0xff]
        %v545 = vld [vmem:[%s218 + $0x350] sm:$0xff]
        %v546 = vld [vmem:[%s218 + $0x358] sm:$0xff]
        %v547 = vld [vmem:[%s218 + $0x360] sm:$0xff]
        %v548 = vld [vmem:[%s218 + $0x368] sm:$0xff]
        %v549 = vld [vmem:[%s218 + $0x370] sm:$0xff]
        %v550 = vld [vmem:[%s218 + $0x378] sm:$0xff]
        %v551 = vld [vmem:[%s218 + $0x380] sm:$0xff]
        %v552 = vld [vmem:[%s218 + $0x388] sm:$0xff]
        %v553 = vld [vmem:[%s218 + $0x390] sm:$0xff]
        %v554 = vld [vmem:[%s218 + $0x398] sm:$0xff]
        %v555 = vld [vmem:[%s218 + $0x3a0] sm:$0xff]
        %v556 = vld [vmem:[%s218 + $0x3a8] sm:$0xff]
        %v557 = vld [vmem:[%s218 + $0x3b0] sm:$0xff]
        %v558 = vld [vmem:[%s218 + $0x3b8] sm:$0xff]
        %v559 = vld [vmem:[%s218 + $0x3c0] sm:$0xff]
        %v560 = vld [vmem:[%s218 + $0x3c8] sm:$0xff]
        %v561 = vld [vmem:[%s218 + $0x3d0] sm:$0xff]
        %v562 = vld [vmem:[%s218 + $0x3d8] sm:$0xff]
        %v563 = vld [vmem:[%s218 + $0x3e0] sm:$0xff]
        %v564 = vld [vmem:[%s218 + $0x3e8] sm:$0xff]
        %v565 = vld [vmem:[%s218 + $0x3f0] sm:$0xff]
        %v566 = vld [vmem:[%s218 + $0x3f8] sm:$0xff]
        %v599 = vunpack.c.l.b16 %v407
        %v600 = vunpack.c.h.b16 %v407
        %v601 = vunpack.c.l.b16 %v408
        %v602 = vunpack.c.h.b16 %v408
        %v603 = vunpack.c.l.b16 %v409
        %v604 = vunpack.c.h.b16 %v409
        %v605 = vunpack.c.l.b16 %v410
        %v606 = vunpack.c.h.b16 %v410
        %v607 = vunpack.c.l.b16 %v411
        %v608 = vunpack.c.h.b16 %v411
        %v609 = vunpack.c.l.b16 %v412
        %v610 = vunpack.c.h.b16 %v412
        %v611 = vunpack.c.l.b16 %v413
        %v612 = vunpack.c.h.b16 %v413
        %v613 = vunpack.c.l.b16 %v414
        %v614 = vunpack.c.h.b16 %v414
        %v615 = vunpack.c.l.b16 %v415
        %v616 = vunpack.c.h.b16 %v415
        %v617 = vunpack.c.l.b16 %v416
        %v618 = vunpack.c.h.b16 %v416
        %v619 = vunpack.c.l.b16 %v417
        %v620 = vunpack.c.h.b16 %v417
        %v621 = vunpack.c.l.b16 %v418
        %v622 = vunpack.c.h.b16 %v418
        %v623 = vunpack.c.l.b16 %v419
        %v624 = vunpack.c.h.b16 %v419
        %v625 = vunpack.c.l.b16 %v420
        %v626 = vunpack.c.h.b16 %v420
        %v627 = vunpack.c.l.b16 %v421
        %v628 = vunpack.c.h.b16 %v421
        %v629 = vunpack.c.l.b16 %v422
        %v630 = vunpack.c.h.b16 %v422
        %v631 = vunpack.c.l.b16 %v423
        %v632 = vunpack.c.h.b16 %v423
        %v633 = vunpack.c.l.b16 %v424
        %v634 = vunpack.c.h.b16 %v424
        %v635 = vunpack.c.l.b16 %v425
        %v636 = vunpack.c.h.b16 %v425
        %v637 = vunpack.c.l.b16 %v426
        %v638 = vunpack.c.h.b16 %v426
        %v639 = vunpack.c.l.b16 %v427
        %v640 = vunpack.c.h.b16 %v427
        %v641 = vunpack.c.l.b16 %v428
        %v642 = vunpack.c.h.b16 %v428
        %v643 = vunpack.c.l.b16 %v429
        %v644 = vunpack.c.h.b16 %v429
        %v645 = vunpack.c.l.b16 %v430
        %v646 = vunpack.c.h.b16 %v430
        %v647 = vunpack.c.l.b16 %v431
        %v648 = vunpack.c.h.b16 %v431
        %v649 = vunpack.c.l.b16 %v432
        %v650 = vunpack.c.h.b16 %v432
        %v651 = vunpack.c.l.b16 %v433
        %v652 = vunpack.c.h.b16 %v433
        %v653 = vunpack.c.l.b16 %v434
        %v654 = vunpack.c.h.b16 %v434
        %v655 = vunpack.c.l.b16 %v435
        %v656 = vunpack.c.h.b16 %v435
        %v657 = vunpack.c.l.b16 %v436
        %v658 = vunpack.c.h.b16 %v436
        %v659 = vunpack.c.l.b16 %v437
        %v660 = vunpack.c.h.b16 %v437
        %v661 = vunpack.c.l.b16 %v438
        %v662 = vunpack.c.h.b16 %v438
        %v663 = vpack.c.b16 %v603, %v599
        %v664 = vpack.c.b16 %v604, %v600
        %v665 = vpack.c.b16 %v605, %v601
        %v666 = vpack.c.b16 %v606, %v602
        %v667 = vpack.c.b16 %v611, %v607
        %v668 = vpack.c.b16 %v612, %v608
        %v669 = vpack.c.b16 %v613, %v609
        %v670 = vpack.c.b16 %v614, %v610
        %v671 = vpack.c.b16 %v619, %v615
        %v672 = vpack.c.b16 %v620, %v616
        %v673 = vpack.c.b16 %v621, %v617
        %v674 = vpack.c.b16 %v622, %v618
        %v675 = vpack.c.b16 %v627, %v623
        %v676 = vpack.c.b16 %v628, %v624
        %v677 = vpack.c.b16 %v629, %v625
        %v678 = vpack.c.b16 %v630, %v626
        %v679 = vpack.c.b16 %v635, %v631
        %v680 = vpack.c.b16 %v636, %v632
        %v681 = vpack.c.b16 %v637, %v633
        %v682 = vpack.c.b16 %v638, %v634
        %v683 = vpack.c.b16 %v643, %v639
        %v684 = vpack.c.b16 %v644, %v640
        %v685 = vpack.c.b16 %v645, %v641
        %v686 = vpack.c.b16 %v646, %v642
        %v687 = vpack.c.b16 %v651, %v647
        %v688 = vpack.c.b16 %v652, %v648
        %v689 = vpack.c.b16 %v653, %v649
        %v690 = vpack.c.b16 %v654, %v650
        %v691 = vpack.c.b16 %v659, %v655
        %v692 = vpack.c.b16 %v660, %v656
        %v693 = vpack.c.b16 %v661, %v657
        %v694 = vpack.c.b16 %v662, %v658
        %v855 = vunpack.c.l.b16 %v439
        %v856 = vunpack.c.h.b16 %v439
        %v857 = vunpack.c.l.b16 %v440
        %v858 = vunpack.c.h.b16 %v440
        %v859 = vunpack.c.l.b16 %v441
        %v860 = vunpack.c.h.b16 %v441
        %v861 = vunpack.c.l.b16 %v442
        %v862 = vunpack.c.h.b16 %v442
        %v863 = vunpack.c.l.b16 %v443
        %v864 = vunpack.c.h.b16 %v443
        %v865 = vunpack.c.l.b16 %v444
        %v866 = vunpack.c.h.b16 %v444
        %v867 = vunpack.c.l.b16 %v445
        %v868 = vunpack.c.h.b16 %v445
        %v869 = vunpack.c.l.b16 %v446
        %v870 = vunpack.c.h.b16 %v446
        %v871 = vunpack.c.l.b16 %v447
        %v872 = vunpack.c.h.b16 %v447
        %v873 = vunpack.c.l.b16 %v448
        %v874 = vunpack.c.h.b16 %v448
        %v875 = vunpack.c.l.b16 %v449
        %v876 = vunpack.c.h.b16 %v449
        %v877 = vunpack.c.l.b16 %v450
        %v878 = vunpack.c.h.b16 %v450
        %v879 = vunpack.c.l.b16 %v451
        %v880 = vunpack.c.h.b16 %v451
        %v881 = vunpack.c.l.b16 %v452
        %v882 = vunpack.c.h.b16 %v452
        %v883 = vunpack.c.l.b16 %v453
        %v884 = vunpack.c.h.b16 %v453
        %v885 = vunpack.c.l.b16 %v454
        %v886 = vunpack.c.h.b16 %v454
        %v887 = vunpack.c.l.b16 %v455
        %v888 = vunpack.c.h.b16 %v455
        %v889 = vunpack.c.l.b16 %v456
        %v890 = vunpack.c.h.b16 %v456
        %v891 = vunpack.c.l.b16 %v457
        %v892 = vunpack.c.h.b16 %v457
        %v893 = vunpack.c.l.b16 %v458
        %v894 = vunpack.c.h.b16 %v458
        %v895 = vunpack.c.l.b16 %v459
        %v896 = vunpack.c.h.b16 %v459
        %v897 = vunpack.c.l.b16 %v460
        %v898 = vunpack.c.h.b16 %v460
        %v899 = vunpack.c.l.b16 %v461
        %v900 = vunpack.c.h.b16 %v461
        %v901 = vunpack.c.l.b16 %v462
        %v902 = vunpack.c.h.b16 %v462
        %v903 = vunpack.c.l.b16 %v463
        %v904 = vunpack.c.h.b16 %v463
        %v905 = vunpack.c.l.b16 %v464
        %v906 = vunpack.c.h.b16 %v464
        %v907 = vunpack.c.l.b16 %v465
        %v908 = vunpack.c.h.b16 %v465
        %v909 = vunpack.c.l.b16 %v466
        %v910 = vunpack.c.h.b16 %v466
        %v911 = vunpack.c.l.b16 %v467
        %v912 = vunpack.c.h.b16 %v467
        %v913 = vunpack.c.l.b16 %v468
        %v914 = vunpack.c.h.b16 %v468
        %v915 = vunpack.c.l.b16 %v469
        %v916 = vunpack.c.h.b16 %v469
        %v917 = vunpack.c.l.b16 %v470
        %v918 = vunpack.c.h.b16 %v470
        %v919 = vunpack.c.l.b16 %v471
        %v920 = vunpack.c.h.b16 %v471
        %v921 = vunpack.c.l.b16 %v472
        %v922 = vunpack.c.h.b16 %v472
        %v923 = vunpack.c.l.b16 %v473
        %v924 = vunpack.c.h.b16 %v473
        %v925 = vunpack.c.l.b16 %v474
        %v926 = vunpack.c.h.b16 %v474
        %v927 = vunpack.c.l.b16 %v475
        %v928 = vunpack.c.h.b16 %v475
        %v929 = vunpack.c.l.b16 %v476
        %v930 = vunpack.c.h.b16 %v476
        %v931 = vunpack.c.l.b16 %v477
        %v932 = vunpack.c.h.b16 %v477
        %v933 = vunpack.c.l.b16 %v478
        %v934 = vunpack.c.h.b16 %v478
        %v935 = vunpack.c.l.b16 %v479
        %v936 = vunpack.c.h.b16 %v479
        %v937 = vunpack.c.l.b16 %v480
        %v938 = vunpack.c.h.b16 %v480
        %v939 = vunpack.c.l.b16 %v481
        %v940 = vunpack.c.h.b16 %v481
        %v941 = vunpack.c.l.b16 %v482
        %v942 = vunpack.c.h.b16 %v482
        %v943 = vunpack.c.l.b16 %v483
        %v944 = vunpack.c.h.b16 %v483
        %v945 = vunpack.c.l.b16 %v484
        %v946 = vunpack.c.h.b16 %v484
        %v947 = vunpack.c.l.b16 %v485
        %v948 = vunpack.c.h.b16 %v485
        %v949 = vunpack.c.l.b16 %v486
        %v950 = vunpack.c.h.b16 %v486
        %v951 = vunpack.c.l.b16 %v487
        %v952 = vunpack.c.h.b16 %v487
        %v953 = vunpack.c.l.b16 %v488
        %v954 = vunpack.c.h.b16 %v488
        %v955 = vunpack.c.l.b16 %v489
        %v956 = vunpack.c.h.b16 %v489
        %v957 = vunpack.c.l.b16 %v490
        %v958 = vunpack.c.h.b16 %v490
        %v959 = vunpack.c.l.b16 %v491
        %v960 = vunpack.c.h.b16 %v491
        %v961 = vunpack.c.l.b16 %v492
        %v962 = vunpack.c.h.b16 %v492
        %v963 = vunpack.c.l.b16 %v493
        %v964 = vunpack.c.h.b16 %v493
        %v965 = vunpack.c.l.b16 %v494
        %v966 = vunpack.c.h.b16 %v494
        %v967 = vunpack.c.l.b16 %v495
        %v968 = vunpack.c.h.b16 %v495
        %v969 = vunpack.c.l.b16 %v496
        %v970 = vunpack.c.h.b16 %v496
        %v971 = vunpack.c.l.b16 %v497
        %v972 = vunpack.c.h.b16 %v497
        %v973 = vunpack.c.l.b16 %v498
        %v974 = vunpack.c.h.b16 %v498
        %v975 = vunpack.c.l.b16 %v499
        %v976 = vunpack.c.h.b16 %v499
        %v977 = vunpack.c.l.b16 %v500
        %v978 = vunpack.c.h.b16 %v500
        %v979 = vunpack.c.l.b16 %v501
        %v980 = vunpack.c.h.b16 %v501
        %v981 = vunpack.c.l.b16 %v502
        %v982 = vunpack.c.h.b16 %v502
        %v983 = vunpack.c.l.b16 %v503
        %v984 = vunpack.c.h.b16 %v503
        %v985 = vunpack.c.l.b16 %v504
        %v986 = vunpack.c.h.b16 %v504
        %v987 = vunpack.c.l.b16 %v505
        %v988 = vunpack.c.h.b16 %v505
        %v989 = vunpack.c.l.b16 %v506
        %v990 = vunpack.c.h.b16 %v506
        %v991 = vunpack.c.l.b16 %v507
        %v992 = vunpack.c.h.b16 %v507
        %v993 = vunpack.c.l.b16 %v508
        %v994 = vunpack.c.h.b16 %v508
        %v995 = vunpack.c.l.b16 %v509
        %v996 = vunpack.c.h.b16 %v509
        %v997 = vunpack.c.l.b16 %v510
        %v998 = vunpack.c.h.b16 %v510
        %v999 = vunpack.c.l.b16 %v511
        %v1000 = vunpack.c.h.b16 %v511
        %v1001 = vunpack.c.l.b16 %v512
        %v1002 = vunpack.c.h.b16 %v512
        %v1003 = vunpack.c.l.b16 %v513
        %v1004 = vunpack.c.h.b16 %v513
        %v1005 = vunpack.c.l.b16 %v514
        %v1006 = vunpack.c.h.b16 %v514
        %v1007 = vunpack.c.l.b16 %v515
        %v1008 = vunpack.c.h.b16 %v515
        %v1009 = vunpack.c.l.b16 %v516
        %v1010 = vunpack.c.h.b16 %v516
        %v1011 = vunpack.c.l.b16 %v517
        %v1012 = vunpack.c.h.b16 %v517
        %v1013 = vunpack.c.l.b16 %v518
        %v1014 = vunpack.c.h.b16 %v518
        %v1015 = vunpack.c.l.b16 %v519
        %v1016 = vunpack.c.h.b16 %v519
        %v1017 = vunpack.c.l.b16 %v520
        %v1018 = vunpack.c.h.b16 %v520
        %v1019 = vunpack.c.l.b16 %v521
        %v1020 = vunpack.c.h.b16 %v521
        %v1021 = vunpack.c.l.b16 %v522
        %v1022 = vunpack.c.h.b16 %v522
        %v1023 = vunpack.c.l.b16 %v523
        %v1024 = vunpack.c.h.b16 %v523
        %v1025 = vunpack.c.l.b16 %v524
        %v1026 = vunpack.c.h.b16 %v524
        %v1027 = vunpack.c.l.b16 %v525
        %v1028 = vunpack.c.h.b16 %v525
        %v1029 = vunpack.c.l.b16 %v526
        %v1030 = vunpack.c.h.b16 %v526
        %v1031 = vunpack.c.l.b16 %v527
        %v1032 = vunpack.c.h.b16 %v527
        %v1033 = vunpack.c.l.b16 %v528
        %v1034 = vunpack.c.h.b16 %v528
        %v1035 = vunpack.c.l.b16 %v529
        %v1036 = vunpack.c.h.b16 %v529
        %v1037 = vunpack.c.l.b16 %v530
        %v1038 = vunpack.c.h.b16 %v530
        %v1039 = vunpack.c.l.b16 %v531
        %v1040 = vunpack.c.h.b16 %v531
        %v1041 = vunpack.c.l.b16 %v532
        %v1042 = vunpack.c.h.b16 %v532
        %v1043 = vunpack.c.l.b16 %v533
        %v1044 = vunpack.c.h.b16 %v533
        %v1045 = vunpack.c.l.b16 %v534
        %v1046 = vunpack.c.h.b16 %v534
        %v1047 = vunpack.c.l.b16 %v535
        %v1048 = vunpack.c.h.b16 %v535
        %v1049 = vunpack.c.l.b16 %v536
        %v1050 = vunpack.c.h.b16 %v536
        %v1051 = vunpack.c.l.b16 %v537
        %v1052 = vunpack.c.h.b16 %v537
        %v1053 = vunpack.c.l.b16 %v538
        %v1054 = vunpack.c.h.b16 %v538
        %v1055 = vunpack.c.l.b16 %v539
        %v1056 = vunpack.c.h.b16 %v539
        %v1057 = vunpack.c.l.b16 %v540
        %v1058 = vunpack.c.h.b16 %v540
        %v1059 = vunpack.c.l.b16 %v541
        %v1060 = vunpack.c.h.b16 %v541
        %v1061 = vunpack.c.l.b16 %v542
        %v1062 = vunpack.c.h.b16 %v542
        %v1063 = vunpack.c.l.b16 %v543
        %v1064 = vunpack.c.h.b16 %v543
        %v1065 = vunpack.c.l.b16 %v544
        %v1066 = vunpack.c.h.b16 %v544
        %v1067 = vunpack.c.l.b16 %v545
        %v1068 = vunpack.c.h.b16 %v545
        %v1069 = vunpack.c.l.b16 %v546
        %v1070 = vunpack.c.h.b16 %v546
        %v1071 = vunpack.c.l.b16 %v547
        %v1072 = vunpack.c.h.b16 %v547
        %v1073 = vunpack.c.l.b16 %v548
        %v1074 = vunpack.c.h.b16 %v548
        %v1075 = vunpack.c.l.b16 %v549
        %v1076 = vunpack.c.h.b16 %v549
        %v1077 = vunpack.c.l.b16 %v550
        %v1078 = vunpack.c.h.b16 %v550
        %v1079 = vunpack.c.l.b16 %v551
        %v1080 = vunpack.c.h.b16 %v551
        %v1081 = vunpack.c.l.b16 %v552
        %v1082 = vunpack.c.h.b16 %v552
        %v1083 = vunpack.c.l.b16 %v553
        %v1084 = vunpack.c.h.b16 %v553
        %v1085 = vunpack.c.l.b16 %v554
        %v1086 = vunpack.c.h.b16 %v554
        %v1087 = vunpack.c.l.b16 %v555
        %v1088 = vunpack.c.h.b16 %v555
        %v1089 = vunpack.c.l.b16 %v556
        %v1090 = vunpack.c.h.b16 %v556
        %v1091 = vunpack.c.l.b16 %v557
        %v1092 = vunpack.c.h.b16 %v557
        %v1093 = vunpack.c.l.b16 %v558
        %v1094 = vunpack.c.h.b16 %v558
        %v1095 = vunpack.c.l.b16 %v559
        %v1096 = vunpack.c.h.b16 %v559
        %v1097 = vunpack.c.l.b16 %v560
        %v1098 = vunpack.c.h.b16 %v560
        %v1099 = vunpack.c.l.b16 %v561
        %v1100 = vunpack.c.h.b16 %v561
        %v1101 = vunpack.c.l.b16 %v562
        %v1102 = vunpack.c.h.b16 %v562
        %v1103 = vunpack.c.l.b16 %v563
        %v1104 = vunpack.c.h.b16 %v563
        %v1105 = vunpack.c.l.b16 %v564
        %v1106 = vunpack.c.h.b16 %v564
        %v1107 = vunpack.c.l.b16 %v565
        %v1108 = vunpack.c.h.b16 %v565
        %v1109 = vunpack.c.l.b16 %v566
        %v1110 = vunpack.c.h.b16 %v566
        %v1111 = vpack.c.b16 %v859, %v855
        %v1112 = vpack.c.b16 %v860, %v856
        %v1113 = vpack.c.b16 %v861, %v857
        %v1114 = vpack.c.b16 %v862, %v858
        %v1115 = vpack.c.b16 %v867, %v863
        %v1116 = vpack.c.b16 %v868, %v864
        %v1117 = vpack.c.b16 %v869, %v865
        %v1118 = vpack.c.b16 %v870, %v866
        %v1119 = vpack.c.b16 %v875, %v871
        %v1120 = vpack.c.b16 %v876, %v872
        %v1121 = vpack.c.b16 %v877, %v873
        %v1122 = vpack.c.b16 %v878, %v874
        %v1123 = vpack.c.b16 %v883, %v879
        %v1124 = vpack.c.b16 %v884, %v880
        %v1125 = vpack.c.b16 %v885, %v881
        %v1126 = vpack.c.b16 %v886, %v882
        %v1127 = vpack.c.b16 %v891, %v887
        %v1128 = vpack.c.b16 %v892, %v888
        %v1129 = vpack.c.b16 %v893, %v889
        %v1130 = vpack.c.b16 %v894, %v890
        %v1131 = vpack.c.b16 %v899, %v895
        %v1132 = vpack.c.b16 %v900, %v896
        %v1133 = vpack.c.b16 %v901, %v897
        %v1134 = vpack.c.b16 %v902, %v898
        %v1135 = vpack.c.b16 %v907, %v903
        %v1136 = vpack.c.b16 %v908, %v904
        %v1137 = vpack.c.b16 %v909, %v905
        %v1138 = vpack.c.b16 %v910, %v906
        %v1139 = vpack.c.b16 %v915, %v911
        %v1140 = vpack.c.b16 %v916, %v912
        %v1141 = vpack.c.b16 %v917, %v913
        %v1142 = vpack.c.b16 %v918, %v914
        %v1143 = vpack.c.b16 %v923, %v919
        %v1144 = vpack.c.b16 %v924, %v920
        %v1145 = vpack.c.b16 %v925, %v921
        %v1146 = vpack.c.b16 %v926, %v922
        %v1147 = vpack.c.b16 %v931, %v927
        %v1148 = vpack.c.b16 %v932, %v928
        %v1149 = vpack.c.b16 %v933, %v929
        %v1150 = vpack.c.b16 %v934, %v930
        %v1151 = vpack.c.b16 %v939, %v935
        %v1152 = vpack.c.b16 %v940, %v936
        %v1153 = vpack.c.b16 %v941, %v937
        %v1154 = vpack.c.b16 %v942, %v938
        %v1155 = vpack.c.b16 %v947, %v943
        %v1156 = vpack.c.b16 %v948, %v944
        %v1157 = vpack.c.b16 %v949, %v945
        %v1158 = vpack.c.b16 %v950, %v946
        %v1159 = vpack.c.b16 %v955, %v951
        %v1160 = vpack.c.b16 %v956, %v952
        %v1161 = vpack.c.b16 %v957, %v953
        %v1162 = vpack.c.b16 %v958, %v954
        %v1163 = vpack.c.b16 %v963, %v959
        %v1164 = vpack.c.b16 %v964, %v960
        %v1165 = vpack.c.b16 %v965, %v961
        %v1166 = vpack.c.b16 %v966, %v962
        %v1167 = vpack.c.b16 %v971, %v967
        %v1168 = vpack.c.b16 %v972, %v968
        %v1169 = vpack.c.b16 %v973, %v969
        %v1170 = vpack.c.b16 %v974, %v970
        %v1171 = vpack.c.b16 %v979, %v975
        %v1172 = vpack.c.b16 %v980, %v976
        %v1173 = vpack.c.b16 %v981, %v977
        %v1174 = vpack.c.b16 %v982, %v978
        %v1175 = vpack.c.b16 %v987, %v983
        %v1176 = vpack.c.b16 %v988, %v984
        %v1177 = vpack.c.b16 %v989, %v985
        %v1178 = vpack.c.b16 %v990, %v986
        %v1179 = vpack.c.b16 %v995, %v991
        %v1180 = vpack.c.b16 %v996, %v992
        %v1181 = vpack.c.b16 %v997, %v993
        %v1182 = vpack.c.b16 %v998, %v994
        %v1183 = vpack.c.b16 %v1003, %v999
        %v1184 = vpack.c.b16 %v1004, %v1000
        %v1185 = vpack.c.b16 %v1005, %v1001
        %v1186 = vpack.c.b16 %v1006, %v1002
        %v1187 = vpack.c.b16 %v1011, %v1007
        %v1188 = vpack.c.b16 %v1012, %v1008
        %v1189 = vpack.c.b16 %v1013, %v1009
        %v1190 = vpack.c.b16 %v1014, %v1010
        %v1191 = vpack.c.b16 %v1019, %v1015
        %v1192 = vpack.c.b16 %v1020, %v1016
        %v1193 = vpack.c.b16 %v1021, %v1017
        %v1194 = vpack.c.b16 %v1022, %v1018
        %v1195 = vpack.c.b16 %v1027, %v1023
        %v1196 = vpack.c.b16 %v1028, %v1024
        %v1197 = vpack.c.b16 %v1029, %v1025
        %v1198 = vpack.c.b16 %v1030, %v1026
        %v1199 = vpack.c.b16 %v1035, %v1031
        %v1200 = vpack.c.b16 %v1036, %v1032
        %v1201 = vpack.c.b16 %v1037, %v1033
        %v1202 = vpack.c.b16 %v1038, %v1034
        %v1203 = vpack.c.b16 %v1043, %v1039
        %v1204 = vpack.c.b16 %v1044, %v1040
        %v1205 = vpack.c.b16 %v1045, %v1041
        %v1206 = vpack.c.b16 %v1046, %v1042
        %v1207 = vpack.c.b16 %v1051, %v1047
        %v1208 = vpack.c.b16 %v1052, %v1048
        %v1209 = vpack.c.b16 %v1053, %v1049
        %v1210 = vpack.c.b16 %v1054, %v1050
        %v1211 = vpack.c.b16 %v1059, %v1055
        %v1212 = vpack.c.b16 %v1060, %v1056
        %v1213 = vpack.c.b16 %v1061, %v1057
        %v1214 = vpack.c.b16 %v1062, %v1058
        %v1215 = vpack.c.b16 %v1067, %v1063
        %v1216 = vpack.c.b16 %v1068, %v1064
        %v1217 = vpack.c.b16 %v1069, %v1065
        %v1218 = vpack.c.b16 %v1070, %v1066
        %v1219 = vpack.c.b16 %v1075, %v1071
        %v1220 = vpack.c.b16 %v1076, %v1072
        %v1221 = vpack.c.b16 %v1077, %v1073
        %v1222 = vpack.c.b16 %v1078, %v1074
        %v1223 = vpack.c.b16 %v1083, %v1079
        %v1224 = vpack.c.b16 %v1084, %v1080
        %v1225 = vpack.c.b16 %v1085, %v1081
        %v1226 = vpack.c.b16 %v1086, %v1082
        %v1227 = vpack.c.b16 %v1091, %v1087
        %v1228 = vpack.c.b16 %v1092, %v1088
        %v1229 = vpack.c.b16 %v1093, %v1089
        %v1230 = vpack.c.b16 %v1094, %v1090
        %v1231 = vpack.c.b16 %v1099, %v1095
        %v1232 = vpack.c.b16 %v1100, %v1096
        %v1233 = vpack.c.b16 %v1101, %v1097
        %v1234 = vpack.c.b16 %v1102, %v1098
        %v1235 = vpack.c.b16 %v1107, %v1103
        %v1236 = vpack.c.b16 %v1108, %v1104
        %v1237 = vpack.c.b16 %v1109, %v1105
        %v1238 = vpack.c.b16 %v1110, %v1106
        %1367 = vmatprep.subr.bf16.mxu0 %v1112
        %1368 = vmatpush1.bf16.msra.mxu0 %v1111
        %1369 = vmatprep.subr.bf16.mxu0 %v1116
        %1370 = vmatpush1.bf16.msra.mxu0 %v1115
        %1371 = vmatprep.subr.bf16.mxu0 %v1120
        %1372 = vmatpush1.bf16.msra.mxu0 %v1119
        %1373 = vmatprep.subr.bf16.mxu0 %v1124
        %1374 = vmatpush1.bf16.msra.mxu0 %v1123
        %1375 = vmatprep.subr.bf16.mxu0 %v1128
        %1376 = vmatpush1.bf16.msra.mxu0 %v1127
        %1377 = vmatprep.subr.bf16.mxu0 %v1132
        %1378 = vmatpush1.bf16.msra.mxu0 %v1131
        %1379 = vmatprep.subr.bf16.mxu0 %v1136
        %1380 = vmatpush1.bf16.msra.mxu0 %v1135
        %1381 = vmatprep.subr.bf16.mxu0 %v1140
        %1382 = vmatpush1.bf16.msra.mxu0 %v1139
        %1383 = vmatprep.subr.bf16.mxu0 %v1144
        %1384 = vmatpush1.bf16.msra.mxu0 %v1143
        %1385 = vmatprep.subr.bf16.mxu0 %v1148
        %1386 = vmatpush1.bf16.msra.mxu0 %v1147
        %1387 = vmatprep.subr.bf16.mxu0 %v1152
        %1388 = vmatpush1.bf16.msra.mxu0 %v1151
        %1389 = vmatprep.subr.bf16.mxu0 %v1156
        %1390 = vmatpush1.bf16.msra.mxu0 %v1155
        %1391 = vmatprep.subr.bf16.mxu0 %v1160
        %1392 = vmatpush1.bf16.msra.mxu0 %v1159
        %1393 = vmatprep.subr.bf16.mxu0 %v1164
        %1394 = vmatpush1.bf16.msra.mxu0 %v1163
        %1395 = vmatprep.subr.bf16.mxu0 %v1168
        %1396 = vmatpush1.bf16.msra.mxu0 %v1167
        %1397 = vmatprep.subr.bf16.mxu0 %v1172
        %1398 = vmatpush1.bf16.msra.mxu0 %v1171
        %1399 = vmatprep.mubr.bf16.mxu0 %v664
        %1400 = vmatmul.mubr.bf16.gmra.mrb[0].mxu0 %v663
        %v1401 = vpop.f32.mrb[0].mxu0
        %v1402 = vadd.f32 0.0, %v1401
        %v1403 = vpop.f32.mrb[0].mxu0
        %v1404 = vadd.f32 0.0, %v1403
        %v1405 = vpop.f32.mrb[0].mxu0
        %v1406 = vadd.f32 0.0, %v1405
        %v1407 = vpop.f32.mrb[0].mxu0
        %v1408 = vadd.f32 0.0, %v1407
        %1409 = vmatprep.mubr.bf16.mxu0 %v668
        %1410 = vmatmul.mubr.bf16.gmra.mrb[0].mxu0 %v667
        %v1411 = vpop.f32.mrb[0].mxu0
        %v1412 = vadd.f32 0.0, %v1411
        %v1413 = vpop.f32.mrb[0].mxu0
        %v1414 = vadd.f32 0.0, %v1413
        %v1415 = vpop.f32.mrb[0].mxu0
        %v1416 = vadd.f32 0.0, %v1415
        %v1417 = vpop.f32.mrb[0].mxu0
        %v1418 = vadd.f32 0.0, %v1417
        %1419 = vmatprep.mubr.bf16.mxu0 %v672
        %1420 = vmatmul.mubr.bf16.gmra.mrb[0].mxu0 %v671
        %v1421 = vpop.f32.mrb[0].mxu0
        %v1422 = vadd.f32 0.0, %v1421
        %v1423 = vpop.f32.mrb[0].mxu0
        %v1424 = vadd.f32 0.0, %v1423
        %v1425 = vpop.f32.mrb[0].mxu0
        %v1426 = vadd.f32 0.0, %v1425
        %v1427 = vpop.f32.mrb[0].mxu0
        %v1428 = vadd.f32 0.0, %v1427
        %1429 = vmatprep.mubr.bf16.mxu0 %v676
        %1430 = vmatmul.mubr.bf16.gmra.mrb[0].mxu0 %v675
        %v1431 = vpop.f32.mrb[0].mxu0
        %v1432 = vadd.f32 0.0, %v1431
        %v1433 = vpop.f32.mrb[0].mxu0
        %v1434 = vadd.f32 0.0, %v1433
        %v1435 = vpop.f32.mrb[0].mxu0
        %v1436 = vadd.f32 0.0, %v1435
        %v1437 = vpop.f32.mrb[0].mxu0
        %v1438 = vadd.f32 0.0, %v1437
        %1439 = vmatprep.mubr.bf16.mxu0 %v680
        %1440 = vmatmul.mubr.bf16.gmra.mrb[0].mxu0 %v679
        %v1441 = vpop.f32.mrb[0].mxu0
        %v1442 = vadd.f32 0.0, %v1441
        %v1443 = vpop.f32.mrb[0].mxu0
        %v1444 = vadd.f32 0.0, %v1443
        %v1445 = vpop.f32.mrb[0].mxu0
        %v1446 = vadd.f32 0.0, %v1445
        %v1447 = vpop.f32.mrb[0].mxu0
        %v1448 = vadd.f32 0.0, %v1447
        %1449 = vmatprep.mubr.bf16.mxu0 %v684
        %1450 = vmatmul.mubr.bf16.gmra.mrb[0].mxu0 %v683
        %v1451 = vpop.f32.mrb[0].mxu0
        %v1452 = vadd.f32 0.0, %v1451
        %v1453 = vpop.f32.mrb[0].mxu0
        %v1454 = vadd.f32 0.0, %v1453
        %v1455 = vpop.f32.mrb[0].mxu0
        %v1456 = vadd.f32 0.0, %v1455
        %v1457 = vpop.f32.mrb[0].mxu0
        %v1458 = vadd.f32 0.0, %v1457
        %1459 = vmatprep.mubr.bf16.mxu0 %v688
        %1460 = vmatmul.mubr.bf16.gmra.mrb[0].mxu0 %v687
        %v1461 = vpop.f32.mrb[0].mxu0
        %v1462 = vadd.f32 0.0, %v1461
        %v1463 = vpop.f32.mrb[0].mxu0
        %v1464 = vadd.f32 0.0, %v1463
        %v1465 = vpop.f32.mrb[0].mxu0
        %v1466 = vadd.f32 0.0, %v1465
        %v1467 = vpop.f32.mrb[0].mxu0
        %v1468 = vadd.f32 0.0, %v1467
        %1469 = vmatprep.mubr.bf16.mxu0 %v692
        %1470 = vmatmul.mubr.bf16.gmra.mrb[0].mxu0 %v691
        %v1471 = vpop.f32.mrb[0].mxu0
        %v1472 = vadd.f32 0.0, %v1471
        %v1473 = vpop.f32.mrb[0].mxu0
        %v1474 = vadd.f32 0.0, %v1473
        %v1475 = vpop.f32.mrb[0].mxu0
        %v1476 = vadd.f32 0.0, %v1475
        %v1477 = vpop.f32.mrb[0].mxu0
        %v1478 = vadd.f32 0.0, %v1477
        %1479 = vdwg.mxu0
        %1480 = vmatprep.subr.bf16.mxu0 %v1176
        %1481 = vmatpush1.bf16.msra.mxu0 %v1175
        %1482 = vmatprep.subr.bf16.mxu0 %v1180
        %1483 = vmatpush1.bf16.msra.mxu0 %v1179
        %1484 = vmatprep.subr.bf16.mxu0 %v1184
        %1485 = vmatpush1.bf16.msra.mxu0 %v1183
        %1486 = vmatprep.subr.bf16.mxu0 %v1188
        %1487 = vmatpush1.bf16.msra.mxu0 %v1187
        %1488 = vmatprep.subr.bf16.mxu0 %v1192
        %1489 = vmatpush1.bf16.msra.mxu0 %v1191
        %1490 = vmatprep.subr.bf16.mxu0 %v1196
        %1491 = vmatpush1.bf16.msra.mxu0 %v1195
        %1492 = vmatprep.subr.bf16.mxu0 %v1200
        %1493 = vmatpush1.bf16.msra.mxu0 %v1199
        %1494 = vmatprep.subr.bf16.mxu0 %v1204
        %1495 = vmatpush1.bf16.msra.mxu0 %v1203
        %1496 = vmatprep.subr.bf16.mxu0 %v1208
        %1497 = vmatpush1.bf16.msra.mxu0 %v1207
        %1498 = vmatprep.subr.bf16.mxu0 %v1212
        %1499 = vmatpush1.bf16.msra.mxu0 %v1211
        %1500 = vmatprep.subr.bf16.mxu0 %v1216
        %1501 = vmatpush1.bf16.msra.mxu0 %v1215
        %1502 = vmatprep.subr.bf16.mxu0 %v1220
        %1503 = vmatpush1.bf16.msra.mxu0 %v1219
        %1504 = vmatprep.subr.bf16.mxu0 %v1224
        %1505 = vmatpush1.bf16.msra.mxu0 %v1223
        %1506 = vmatprep.subr.bf16.mxu0 %v1228
        %1507 = vmatpush1.bf16.msra.mxu0 %v1227
        %1508 = vmatprep.subr.bf16.mxu0 %v1232
        %1509 = vmatpush1.bf16.msra.mxu0 %v1231
        %1510 = vmatprep.subr.bf16.mxu0 %v1236
        %1511 = vmatpush1.bf16.msra.mxu0 %v1235
        %1512 = vmatprep.mubr.bf16.mxu0 %v666
        %1513 = vmatmul.mubr.bf16.gmra.mrb[0].mxu0 %v665
        %v1514 = vpop.f32.mrb[0].mxu0
        %v1515 = vadd.f32 %v1402, %v1514
        %v1516 = vpop.f32.mrb[0].mxu0
        %v1517 = vadd.f32 %v1404, %v1516
        %v1518 = vpop.f32.mrb[0].mxu0
        %v1519 = vadd.f32 %v1406, %v1518
        %v1520 = vpop.f32.mrb[0].mxu0
        %v1521 = vadd.f32 %v1408, %v1520
        %1522 = vmatprep.mubr.bf16.mxu0 %v670
        %1523 = vmatmul.mubr.bf16.gmra.mrb[0].mxu0 %v669
        %v1524 = vpop.f32.mrb[0].mxu0
        %v1525 = vadd.f32 %v1412, %v1524
        %v1526 = vpop.f32.mrb[0].mxu0
        %v1527 = vadd.f32 %v1414, %v1526
        %v1528 = vpop.f32.mrb[0].mxu0
        %v1529 = vadd.f32 %v1416, %v1528
        %v1530 = vpop.f32.mrb[0].mxu0
        %v1531 = vadd.f32 %v1418, %v1530
        %1532 = vmatprep.mubr.bf16.mxu0 %v674
        %1533 = vmatmul.mubr.bf16.gmra.mrb[0].mxu0 %v673
        %v1534 = vpop.f32.mrb[0].mxu0
        %v1535 = vadd.f32 %v1422, %v1534
        %v1536 = vpop.f32.mrb[0].mxu0
        %v1537 = vadd.f32 %v1424, %v1536
        %v1538 = vpop.f32.mrb[0].mxu0
        %v1539 = vadd.f32 %v1426, %v1538
        %v1540 = vpop.f32.mrb[0].mxu0
        %v1541 = vadd.f32 %v1428, %v1540
        %1542 = vmatprep.mubr.bf16.mxu0 %v678
        %1543 = vmatmul.mubr.bf16.gmra.mrb[0].mxu0 %v677
        %v1544 = vpop.f32.mrb[0].mxu0
        %v1545 = vadd.f32 %v1432, %v1544
        %v1546 = vpop.f32.mrb[0].mxu0
        %v1547 = vadd.f32 %v1434, %v1546
        %v1548 = vpop.f32.mrb[0].mxu0
        %v1549 = vadd.f32 %v1436, %v1548
        %v1550 = vpop.f32.mrb[0].mxu0
        %v1551 = vadd.f32 %v1438, %v1550
        %1552 = vmatprep.mubr.bf16.mxu0 %v682
        %1553 = vmatmul.mubr.bf16.gmra.mrb[0].mxu0 %v681
        %v1554 = vpop.f32.mrb[0].mxu0
        %v1555 = vadd.f32 %v1442, %v1554
        %v1556 = vpop.f32.mrb[0].mxu0
        %v1557 = vadd.f32 %v1444, %v1556
        %v1558 = vpop.f32.mrb[0].mxu0
        %v1559 = vadd.f32 %v1446, %v1558
        %v1560 = vpop.f32.mrb[0].mxu0
        %v1561 = vadd.f32 %v1448, %v1560
        %1562 = vmatprep.mubr.bf16.mxu0 %v686
        %1563 = vmatmul.mubr.bf16.gmra.mrb[0].mxu0 %v685
        %v1564 = vpop.f32.mrb[0].mxu0
        %v1565 = vadd.f32 %v1452, %v1564
        %v1566 = vpop.f32.mrb[0].mxu0
        %v1567 = vadd.f32 %v1454, %v1566
        %v1568 = vpop.f32.mrb[0].mxu0
        %v1569 = vadd.f32 %v1456, %v1568
        %v1570 = vpop.f32.mrb[0].mxu0
        %v1571 = vadd.f32 %v1458, %v1570
        %1572 = vmatprep.mubr.bf16.mxu0 %v690
        %1573 = vmatmul.mubr.bf16.gmra.mrb[0].mxu0 %v689
        %v1574 = vpop.f32.mrb[0].mxu0
        %v1575 = vadd.f32 %v1462, %v1574
        %v1576 = vpop.f32.mrb[0].mxu0
        %v1577 = vadd.f32 %v1464, %v1576
        %v1578 = vpop.f32.mrb[0].mxu0
        %v1579 = vadd.f32 %v1466, %v1578
        %v1580 = vpop.f32.mrb[0].mxu0
        %v1581 = vadd.f32 %v1468, %v1580
        %1582 = vmatprep.mubr.bf16.mxu0 %v694
        %1583 = vmatmul.mubr.bf16.gmra.mrb[0].mxu0 %v693
        %v1584 = vpop.f32.mrb[0].mxu0
        %v1585 = vadd.f32 %v1472, %v1584
        %v1586 = vpop.f32.mrb[0].mxu0
        %v1587 = vadd.f32 %v1474, %v1586
        %v1588 = vpop.f32.mrb[0].mxu0
        %v1589 = vadd.f32 %v1476, %v1588
        %v1590 = vpop.f32.mrb[0].mxu0
        %v1591 = vadd.f32 %v1478, %v1590
        %1592 = vdwg.mxu0
        %1593 = vmatprep.subr.bf16.mxu0 %v1114
        %1594 = vmatpush1.bf16.msra.mxu0 %v1113
        %1595 = vmatprep.subr.bf16.mxu0 %v1118
        %1596 = vmatpush1.bf16.msra.mxu0 %v1117
        %1597 = vmatprep.subr.bf16.mxu0 %v1122
        %1598 = vmatpush1.bf16.msra.mxu0 %v1121
        %1599 = vmatprep.subr.bf16.mxu0 %v1126
        %1600 = vmatpush1.bf16.msra.mxu0 %v1125
        %1601 = vmatprep.subr.bf16.mxu0 %v1130
        %1602 = vmatpush1.bf16.msra.mxu0 %v1129
        %1603 = vmatprep.subr.bf16.mxu0 %v1134
        %1604 = vmatpush1.bf16.msra.mxu0 %v1133
        %1605 = vmatprep.subr.bf16.mxu0 %v1138
        %1606 = vmatpush1.bf16.msra.mxu0 %v1137
        %1607 = vmatprep.subr.bf16.mxu0 %v1142
        %1608 = vmatpush1.bf16.msra.mxu0 %v1141
        %1609 = vmatprep.subr.bf16.mxu0 %v1146
        %1610 = vmatpush1.bf16.msra.mxu0 %v1145
        %1611 = vmatprep.subr.bf16.mxu0 %v1150
        %1612 = vmatpush1.bf16.msra.mxu0 %v1149
        %1613 = vmatprep.subr.bf16.mxu0 %v1154
        %1614 = vmatpush1.bf16.msra.mxu0 %v1153
        %1615 = vmatprep.subr.bf16.mxu0 %v1158
        %1616 = vmatpush1.bf16.msra.mxu0 %v1157
        %1617 = vmatprep.subr.bf16.mxu0 %v1162
        %1618 = vmatpush1.bf16.msra.mxu0 %v1161
        %1619 = vmatprep.subr.bf16.mxu0 %v1166
        %1620 = vmatpush1.bf16.msra.mxu0 %v1165
        %1621 = vmatprep.subr.bf16.mxu0 %v1170
        %1622 = vmatpush1.bf16.msra.mxu0 %v1169
        %1623 = vmatprep.subr.bf16.mxu0 %v1174
        %1624 = vmatpush1.bf16.msra.mxu0 %v1173
        %1625 = vmatprep.mubr.bf16.mxu0 %v664
        %1626 = vmatmul.mubr.bf16.gmra.mrb[0].mxu0 %v663
        %v1627 = vpop.f32.mrb[0].mxu0
        %v1628 = vadd.f32 0.0, %v1627
        %v1629 = vpop.f32.mrb[0].mxu0
        %v1630 = vadd.f32 0.0, %v1629
        %v1631 = vpop.f32.mrb[0].mxu0
        %v1632 = vadd.f32 0.0, %v1631
        %v1633 = vpop.f32.mrb[0].mxu0
        %v1634 = vadd.f32 0.0, %v1633
        %1635 = vmatprep.mubr.bf16.mxu0 %v668
        %1636 = vmatmul.mubr.bf16.gmra.mrb[0].mxu0 %v667
        %v1637 = vpop.f32.mrb[0].mxu0
        %v1638 = vadd.f32 0.0, %v1637
        %v1639 = vpop.f32.mrb[0].mxu0
        %v1640 = vadd.f32 0.0, %v1639
        %v1641 = vpop.f32.mrb[0].mxu0
        %v1642 = vadd.f32 0.0, %v1641
        %v1643 = vpop.f32.mrb[0].mxu0
        %v1644 = vadd.f32 0.0, %v1643
        %1645 = vmatprep.mubr.bf16.mxu0 %v672
        %1646 = vmatmul.mubr.bf16.gmra.mrb[0].mxu0 %v671
        %v1647 = vpop.f32.mrb[0].mxu0
        %v1648 = vadd.f32 0.0, %v1647
        %v1649 = vpop.f32.mrb[0].mxu0
        %v1650 = vadd.f32 0.0, %v1649
        %v1651 = vpop.f32.mrb[0].mxu0
        %v1652 = vadd.f32 0.0, %v1651
        %v1653 = vpop.f32.mrb[0].mxu0
        %v1654 = vadd.f32 0.0, %v1653
        %1655 = vmatprep.mubr.bf16.mxu0 %v676
        %1656 = vmatmul.mubr.bf16.gmra.mrb[0].mxu0 %v675
        %v1657 = vpop.f32.mrb[0].mxu0
        %v1658 = vadd.f32 0.0, %v1657
        %v1659 = vpop.f32.mrb[0].mxu0
        %v1660 = vadd.f32 0.0, %v1659
        %v1661 = vpop.f32.mrb[0].mxu0
        %v1662 = vadd.f32 0.0, %v1661
        %v1663 = vpop.f32.mrb[0].mxu0
        %v1664 = vadd.f32 0.0, %v1663
        %1665 = vmatprep.mubr.bf16.mxu0 %v680
        %1666 = vmatmul.mubr.bf16.gmra.mrb[0].mxu0 %v679
        %v1667 = vpop.f32.mrb[0].mxu0
        %v1668 = vadd.f32 0.0, %v1667
        %v1669 = vpop.f32.mrb[0].mxu0
        %v1670 = vadd.f32 0.0, %v1669
        %v1671 = vpop.f32.mrb[0].mxu0
        %v1672 = vadd.f32 0.0, %v1671
        %v1673 = vpop.f32.mrb[0].mxu0
        %v1674 = vadd.f32 0.0, %v1673
        %1675 = vmatprep.mubr.bf16.mxu0 %v684
        %1676 = vmatmul.mubr.bf16.gmra.mrb[0].mxu0 %v683
        %v1677 = vpop.f32.mrb[0].mxu0
        %v1678 = vadd.f32 0.0, %v1677
        %v1679 = vpop.f32.mrb[0].mxu0
        %v1680 = vadd.f32 0.0, %v1679
        %v1681 = vpop.f32.mrb[0].mxu0
        %v1682 = vadd.f32 0.0, %v1681
        %v1683 = vpop.f32.mrb[0].mxu0
        %v1684 = vadd.f32 0.0, %v1683
        %1685 = vmatprep.mubr.bf16.mxu0 %v688
        %1686 = vmatmul.mubr.bf16.gmra.mrb[0].mxu0 %v687
        %v1687 = vpop.f32.mrb[0].mxu0
        %v1688 = vadd.f32 0.0, %v1687
        %v1689 = vpop.f32.mrb[0].mxu0
        %v1690 = vadd.f32 0.0, %v1689
        %v1691 = vpop.f32.mrb[0].mxu0
        %v1692 = vadd.f32 0.0, %v1691
        %v1693 = vpop.f32.mrb[0].mxu0
        %v1694 = vadd.f32 0.0, %v1693
        %1695 = vmatprep.mubr.bf16.mxu0 %v692
        %1696 = vmatmul.mubr.bf16.gmra.mrb[0].mxu0 %v691
        %v1697 = vpop.f32.mrb[0].mxu0
        %v1698 = vadd.f32 0.0, %v1697
        %v1699 = vpop.f32.mrb[0].mxu0
        %v1700 = vadd.f32 0.0, %v1699
        %v1701 = vpop.f32.mrb[0].mxu0
        %v1702 = vadd.f32 0.0, %v1701
        %v1703 = vpop.f32.mrb[0].mxu0
        %v1704 = vadd.f32 0.0, %v1703
        %1705 = vdwg.mxu0
        %1706 = vmatprep.subr.bf16.mxu0 %v1178
        %1707 = vmatpush1.bf16.msra.mxu0 %v1177
        %1708 = vmatprep.subr.bf16.mxu0 %v1182
        %1709 = vmatpush1.bf16.msra.mxu0 %v1181
        %1710 = vmatprep.subr.bf16.mxu0 %v1186
        %1711 = vmatpush1.bf16.msra.mxu0 %v1185
        %1712 = vmatprep.subr.bf16.mxu0 %v1190
        %1713 = vmatpush1.bf16.msra.mxu0 %v1189
        %1714 = vmatprep.subr.bf16.mxu0 %v1194
        %1715 = vmatpush1.bf16.msra.mxu0 %v1193
        %1716 = vmatprep.subr.bf16.mxu0 %v1198
        %1717 = vmatpush1.bf16.msra.mxu0 %v1197
        %1718 = vmatprep.subr.bf16.mxu0 %v1202
        %1719 = vmatpush1.bf16.msra.mxu0 %v1201
        %1720 = vmatprep.subr.bf16.mxu0 %v1206
        %1721 = vmatpush1.bf16.msra.mxu0 %v1205
        %1722 = vmatprep.subr.bf16.mxu0 %v1210
        %1723 = vmatpush1.bf16.msra.mxu0 %v1209
        %1724 = vmatprep.subr.bf16.mxu0 %v1214
        %1725 = vmatpush1.bf16.msra.mxu0 %v1213
        %1726 = vmatprep.subr.bf16.mxu0 %v1218
        %1727 = vmatpush1.bf16.msra.mxu0 %v1217
        %1728 = vmatprep.subr.bf16.mxu0 %v1222
        %1729 = vmatpush1.bf16.msra.mxu0 %v1221
        %1730 = vmatprep.subr.bf16.mxu0 %v1226
        %1731 = vmatpush1.bf16.msra.mxu0 %v1225
        %1732 = vmatprep.subr.bf16.mxu0 %v1230
        %1733 = vmatpush1.bf16.msra.mxu0 %v1229
        %1734 = vmatprep.subr.bf16.mxu0 %v1234
        %1735 = vmatpush1.bf16.msra.mxu0 %v1233
        %1736 = vmatprep.subr.bf16.mxu0 %v1238
        %1737 = vmatpush1.bf16.msra.mxu0 %v1237
        %1738 = vmatprep.mubr.bf16.mxu0 %v666
        %1739 = vmatmul.mubr.bf16.gmra.mrb[0].mxu0 %v665
        %v1740 = vpop.f32.mrb[0].mxu0
        %v1741 = vadd.f32 %v1628, %v1740
        %v1742 = vpop.f32.mrb[0].mxu0
        %v1743 = vadd.f32 %v1630, %v1742
        %v1744 = vpop.f32.mrb[0].mxu0
        %v1745 = vadd.f32 %v1632, %v1744
        %v1746 = vpop.f32.mrb[0].mxu0
        %v1747 = vadd.f32 %v1634, %v1746
        %1748 = vmatprep.mubr.bf16.mxu0 %v670
        %1749 = vmatmul.mubr.bf16.gmra.mrb[0].mxu0 %v669
        %v1750 = vpop.f32.mrb[0].mxu0
        %v1751 = vadd.f32 %v1638, %v1750
        %v1752 = vpop.f32.mrb[0].mxu0
        %v1753 = vadd.f32 %v1640, %v1752
        %v1754 = vpop.f32.mrb[0].mxu0
        %v1755 = vadd.f32 %v1642, %v1754
        %v1756 = vpop.f32.mrb[0].mxu0
        %v1757 = vadd.f32 %v1644, %v1756
        %1758 = vmatprep.mubr.bf16.mxu0 %v674
        %1759 = vmatmul.mubr.bf16.gmra.mrb[0].mxu0 %v673
        %v1760 = vpop.f32.mrb[0].mxu0
        %v1761 = vadd.f32 %v1648, %v1760
        %v1762 = vpop.f32.mrb[0].mxu0
        %v1763 = vadd.f32 %v1650, %v1762
        %v1764 = vpop.f32.mrb[0].mxu0
        %v1765 = vadd.f32 %v1652, %v1764
        %v1766 = vpop.f32.mrb[0].mxu0
        %v1767 = vadd.f32 %v1654, %v1766
        %1768 = vmatprep.mubr.bf16.mxu0 %v678
        %1769 = vmatmul.mubr.bf16.gmra.mrb[0].mxu0 %v677
        %v1770 = vpop.f32.mrb[0].mxu0
        %v1771 = vadd.f32 %v1658, %v1770
        %v1772 = vpop.f32.mrb[0].mxu0
        %v1773 = vadd.f32 %v1660, %v1772
        %v1774 = vpop.f32.mrb[0].mxu0
        %v1775 = vadd.f32 %v1662, %v1774
        %v1776 = vpop.f32.mrb[0].mxu0
        %v1777 = vadd.f32 %v1664, %v1776
        %1778 = vmatprep.mubr.bf16.mxu0 %v682
        %1779 = vmatmul.mubr.bf16.gmra.mrb[0].mxu0 %v681
        %v1780 = vpop.f32.mrb[0].mxu0
        %v1781 = vadd.f32 %v1668, %v1780
        %v1782 = vpop.f32.mrb[0].mxu0
        %v1783 = vadd.f32 %v1670, %v1782
        %v1784 = vpop.f32.mrb[0].mxu0
        %v1785 = vadd.f32 %v1672, %v1784
        %v1786 = vpop.f32.mrb[0].mxu0
        %v1787 = vadd.f32 %v1674, %v1786
        %1788 = vmatprep.mubr.bf16.mxu0 %v686
        %1789 = vmatmul.mubr.bf16.gmra.mrb[0].mxu0 %v685
        %v1790 = vpop.f32.mrb[0].mxu0
        %v1791 = vadd.f32 %v1678, %v1790
        %v1792 = vpop.f32.mrb[0].mxu0
        %v1793 = vadd.f32 %v1680, %v1792
        %v1794 = vpop.f32.mrb[0].mxu0
        %v1795 = vadd.f32 %v1682, %v1794
        %v1796 = vpop.f32.mrb[0].mxu0
        %v1797 = vadd.f32 %v1684, %v1796
        %1798 = vmatprep.mubr.bf16.mxu0 %v690
        %1799 = vmatmul.mubr.bf16.gmra.mrb[0].mxu0 %v689
        %v1800 = vpop.f32.mrb[0].mxu0
        %v1801 = vadd.f32 %v1688, %v1800
        %v1802 = vpop.f32.mrb[0].mxu0
        %v1803 = vadd.f32 %v1690, %v1802
        %v1804 = vpop.f32.mrb[0].mxu0
        %v1805 = vadd.f32 %v1692, %v1804
        %v1806 = vpop.f32.mrb[0].mxu0
        %v1807 = vadd.f32 %v1694, %v1806
        %1808 = vmatprep.mubr.bf16.mxu0 %v694
        %1809 = vmatmul.mubr.bf16.gmra.mrb[0].mxu0 %v693
        %v1810 = vpop.f32.mrb[0].mxu0
        %v1811 = vadd.f32 %v1698, %v1810
        %v1812 = vpop.f32.mrb[0].mxu0
        %v1813 = vadd.f32 %v1700, %v1812
        %v1814 = vpop.f32.mrb[0].mxu0
        %v1815 = vadd.f32 %v1702, %v1814
        %v1816 = vpop.f32.mrb[0].mxu0
        %v1817 = vadd.f32 %v1704, %v1816
        %1818 = vdwg.mxu0
        %v1819 = vadd.f32 %v343, %v1515
        %v1820 = vadd.f32 %v344, %v1517
        %v1821 = vadd.f32 %v345, %v1741
        %v1822 = vadd.f32 %v346, %v1743
        %v1823 = vadd.f32 %v347, %v1519
        %v1824 = vadd.f32 %v348, %v1521
        %v1825 = vadd.f32 %v349, %v1745
        %v1826 = vadd.f32 %v350, %v1747
        %v1827 = vadd.f32 %v351, %v1525
        %v1828 = vadd.f32 %v352, %v1527
        %v1829 = vadd.f32 %v353, %v1751
        %v1830 = vadd.f32 %v354, %v1753
        %v1831 = vadd.f32 %v355, %v1529
        %v1832 = vadd.f32 %v356, %v1531
        %v1833 = vadd.f32 %v357, %v1755
        %v1834 = vadd.f32 %v358, %v1757
        %v1835 = vadd.f32 %v359, %v1535
        %v1836 = vadd.f32 %v360, %v1537
        %v1837 = vadd.f32 %v361, %v1761
        %v1838 = vadd.f32 %v362, %v1763
        %v1839 = vadd.f32 %v363, %v1539
        %v1840 = vadd.f32 %v364, %v1541
        %v1841 = vadd.f32 %v365, %v1765
        %v1842 = vadd.f32 %v366, %v1767
        %v1843 = vadd.f32 %v367, %v1545
        %v1844 = vadd.f32 %v368, %v1547
        %v1845 = vadd.f32 %v369, %v1771
        %v1846 = vadd.f32 %v370, %v1773
        %v1847 = vadd.f32 %v371, %v1549
        %v1848 = vadd.f32 %v372, %v1551
        %v1849 = vadd.f32 %v373, %v1775
        %v1850 = vadd.f32 %v374, %v1777
        %v1851 = vadd.f32 %v375, %v1555
        %v1852 = vadd.f32 %v376, %v1557
        %v1853 = vadd.f32 %v377, %v1781
        %v1854 = vadd.f32 %v378, %v1783
        %v1855 = vadd.f32 %v379, %v1559
        %v1856 = vadd.f32 %v380, %v1561
        %v1857 = vadd.f32 %v381, %v1785
        %v1858 = vadd.f32 %v382, %v1787
        %v1859 = vadd.f32 %v383, %v1565
        %v1860 = vadd.f32 %v384, %v1567
        %v1861 = vadd.f32 %v385, %v1791
        %v1862 = vadd.f32 %v386, %v1793
        %v1863 = vadd.f32 %v387, %v1569
        %v1864 = vadd.f32 %v388, %v1571
        %v1865 = vadd.f32 %v389, %v1795
        %v1866 = vadd.f32 %v390, %v1797
        %v1867 = vadd.f32 %v391, %v1575
        %v1868 = vadd.f32 %v392, %v1577
        %v1869 = vadd.f32 %v393, %v1801
        %v1870 = vadd.f32 %v394, %v1803
        %v1871 = vadd.f32 %v395, %v1579
        %v1872 = vadd.f32 %v396, %v1581
        %v1873 = vadd.f32 %v397, %v1805
        %v1874 = vadd.f32 %v398, %v1807
        %v1875 = vadd.f32 %v399, %v1585
        %v1876 = vadd.f32 %v400, %v1587
        %v1877 = vadd.f32 %v401, %v1811
        %v1878 = vadd.f32 %v402, %v1813
        %v1879 = vadd.f32 %v403, %v1589
        %v1880 = vadd.f32 %v404, %v1591
        %v1881 = vadd.f32 %v405, %v1815
        %v1882 = vadd.f32 %v406, %v1817
        %1883 = vst [vmem:[#allocation2] sm:$0xff] %v1819
        %1884 = vst [vmem:[#allocation2 + $0x8] sm:$0xff] %v1820
        %1885 = vst [vmem:[#allocation2 + $0x10] sm:$0xff] %v1821
        %1886 = vst [vmem:[#allocation2 + $0x18] sm:$0xff] %v1822
        %1887 = vst [vmem:[#allocation2 + $0x20] sm:$0xff] %v1823
        %1888 = vst [vmem:[#allocation2 + $0x28] sm:$0xff] %v1824
        %1889 = vst [vmem:[#allocation2 + $0x30] sm:$0xff] %v1825
        %1890 = vst [vmem:[#allocation2 + $0x38] sm:$0xff] %v1826
        %1891 = vst [vmem:[#allocation2 + $0x40] sm:$0xff] %v1827
        %1892 = vst [vmem:[#allocation2 + $0x48] sm:$0xff] %v1828
        %1893 = vst [vmem:[#allocation2 + $0x50] sm:$0xff] %v1829
        %1894 = vst [vmem:[#allocation2 + $0x58] sm:$0xff] %v1830
        %1895 = vst [vmem:[#allocation2 + $0x60] sm:$0xff] %v1831
        %1896 = vst [vmem:[#allocation2 + $0x68] sm:$0xff] %v1832
        %1897 = vst [vmem:[#allocation2 + $0x70] sm:$0xff] %v1833
        %1898 = vst [vmem:[#allocation2 + $0x78] sm:$0xff] %v1834
        %1899 = vst [vmem:[#allocation2 + $0x80] sm:$0xff] %v1835
        %1900 = vst [vmem:[#allocation2 + $0x88] sm:$0xff] %v1836
        %1901 = vst [vmem:[#allocation2 + $0x90] sm:$0xff] %v1837
        %1902 = vst [vmem:[#allocation2 + $0x98] sm:$0xff] %v1838
        %1903 = vst [vmem:[#allocation2 + $0xa0] sm:$0xff] %v1839
        %1904 = vst [vmem:[#allocation2 + $0xa8] sm:$0xff] %v1840
        %1905 = vst [vmem:[#allocation2 + $0xb0] sm:$0xff] %v1841
        %1906 = vst [vmem:[#allocation2 + $0xb8] sm:$0xff] %v1842
        %1907 = vst [vmem:[#allocation2 + $0xc0] sm:$0xff] %v1843
        %1908 = vst [vmem:[#allocation2 + $0xc8] sm:$0xff] %v1844
        %1909 = vst [vmem:[#allocation2 + $0xd0] sm:$0xff] %v1845
        %1910 = vst [vmem:[#allocation2 + $0xd8] sm:$0xff] %v1846
        %1911 = vst [vmem:[#allocation2 + $0xe0] sm:$0xff] %v1847
        %1912 = vst [vmem:[#allocation2 + $0xe8] sm:$0xff] %v1848
        %1913 = vst [vmem:[#allocation2 + $0xf0] sm:$0xff] %v1849
        %1914 = vst [vmem:[#allocation2 + $0xf8] sm:$0xff] %v1850
        %1915 = vst [vmem:[#allocation2 + $0x100] sm:$0xff] %v1851
        %1916 = vst [vmem:[#allocation2 + $0x108] sm:$0xff] %v1852
        %1917 = vst [vmem:[#allocation2 + $0x110] sm:$0xff] %v1853
        %1918 = vst [vmem:[#allocation2 + $0x118] sm:$0xff] %v1854
        %1919 = vst [vmem:[#allocation2 + $0x120] sm:$0xff] %v1855
        %1920 = vst [vmem:[#allocation2 + $0x128] sm:$0xff] %v1856
        %1921 = vst [vmem:[#allocation2 + $0x130] sm:$0xff] %v1857
        %1922 = vst [vmem:[#allocation2 + $0x138] sm:$0xff] %v1858
        %1923 = vst [vmem:[#allocation2 + $0x140] sm:$0xff] %v1859
        %1924 = vst [vmem:[#allocation2 + $0x148] sm:$0xff] %v1860
        %1925 = vst [vmem:[#allocation2 + $0x150] sm:$0xff] %v1861
        %1926 = vst [vmem:[#allocation2 + $0x158] sm:$0xff] %v1862
        %1927 = vst [vmem:[#allocation2 + $0x160] sm:$0xff] %v1863
        %1928 = vst [vmem:[#allocation2 + $0x168] sm:$0xff] %v1864
        %1929 = vst [vmem:[#allocation2 + $0x170] sm:$0xff] %v1865
        %1930 = vst [vmem:[#allocation2 + $0x178] sm:$0xff] %v1866
        %1931 = vst [vmem:[#allocation2 + $0x180] sm:$0xff] %v1867
        %1932 = vst [vmem:[#allocation2 + $0x188] sm:$0xff] %v1868
        %1933 = vst [vmem:[#allocation2 + $0x190] sm:$0xff] %v1869
        %1934 = vst [vmem:[#allocation2 + $0x198] sm:$0xff] %v1870
        %1935 = vst [vmem:[#allocation2 + $0x1a0] sm:$0xff] %v1871
        %1936 = vst [vmem:[#allocation2 + $0x1a8] sm:$0xff] %v1872
        %1937 = vst [vmem:[#allocation2 + $0x1b0] sm:$0xff] %v1873
        %1938 = vst [vmem:[#allocation2 + $0x1b8] sm:$0xff] %v1874
        %1939 = vst [vmem:[#allocation2 + $0x1c0] sm:$0xff] %v1875
        %1940 = vst [vmem:[#allocation2 + $0x1c8] sm:$0xff] %v1876
        %1941 = vst [vmem:[#allocation2 + $0x1d0] sm:$0xff] %v1877
        %1942 = vst [vmem:[#allocation2 + $0x1d8] sm:$0xff] %v1878
        %1943 = vst [vmem:[#allocation2 + $0x1e0] sm:$0xff] %v1879
        %1944 = vst [vmem:[#allocation2 + $0x1e8] sm:$0xff] %v1880
        %1945 = vst [vmem:[#allocation2 + $0x1f0] sm:$0xff] %v1881
        %1946 = vst [vmem:[#allocation2 + $0x1f8] sm:$0xff] %v1882
        // Predicated region
        $region41: #{gqa_forward.3} parent=31 // pred_check
          %p1947 = pneg %p275
        $region42: #{gqa_forward.3} parent=31 // pred_check_branch
          %1949 = sbr.rel (%p1947) target = $region44
        $region43: #{gqa_forward.3} parent=31 // pred_region
          %v1950 = vld [vmem:[#allocation2] sm:$0xff]
          %v1951 = vld [vmem:[#allocation2 + $0x8] sm:$0xff]
          %v1952 = vld [vmem:[#allocation2 + $0x10] sm:$0xff]
          %v1953 = vld [vmem:[#allocation2 + $0x18] sm:$0xff]
          %v1954 = vld [vmem:[#allocation2 + $0x20] sm:$0xff]
          %v1955 = vld [vmem:[#allocation2 + $0x28] sm:$0xff]
          %v1956 = vld [vmem:[#allocation2 + $0x30] sm:$0xff]
          %v1957 = vld [vmem:[#allocation2 + $0x38] sm:$0xff]
          %v1958 = vld [vmem:[#allocation2 + $0x40] sm:$0xff]
          %v1959 = vld [vmem:[#allocation2 + $0x48] sm:$0xff]
          %v1960 = vld [vmem:[#allocation2 + $0x50] sm:$0xff]
          %v1961 = vld [vmem:[#allocation2 + $0x58] sm:$0xff]
          %v1962 = vld [vmem:[#allocation2 + $0x60] sm:$0xff]
          %v1963 = vld [vmem:[#allocation2 + $0x68] sm:$0xff]
          %v1964 = vld [vmem:[#allocation2 + $0x70] sm:$0xff]
          %v1965 = vld [vmem:[#allocation2 + $0x78] sm:$0xff]
          %v1966 = vld [vmem:[#allocation2 + $0x80] sm:$0xff]
          %v1967 = vld [vmem:[#allocation2 + $0x88] sm:$0xff]
          %v1968 = vld [vmem:[#allocation2 + $0x90] sm:$0xff]
          %v1969 = vld [vmem:[#allocation2 + $0x98] sm:$0xff]
          %v1970 = vld [vmem:[#allocation2 + $0xa0] sm:$0xff]
          %v1971 = vld [vmem:[#allocation2 + $0xa8] sm:$0xff]
          %v1972 = vld [vmem:[#allocation2 + $0xb0] sm:$0xff]
          %v1973 = vld [vmem:[#allocation2 + $0xb8] sm:$0xff]
          %v1974 = vld [vmem:[#allocation2 + $0xc0] sm:$0xff]
          %v1975 = vld [vmem:[#allocation2 + $0xc8] sm:$0xff]
          %v1976 = vld [vmem:[#allocation2 + $0xd0] sm:$0xff]
          %v1977 = vld [vmem:[#allocation2 + $0xd8] sm:$0xff]
          %v1978 = vld [vmem:[#allocation2 + $0xe0] sm:$0xff]
          %v1979 = vld [vmem:[#allocation2 + $0xe8] sm:$0xff]
          %v1980 = vld [vmem:[#allocation2 + $0xf0] sm:$0xff]
          %v1981 = vld [vmem:[#allocation2 + $0xf8] sm:$0xff]
          %v1982 = vld [vmem:[#allocation2 + $0x100] sm:$0xff]
          %v1983 = vld [vmem:[#allocation2 + $0x108] sm:$0xff]
          %v1984 = vld [vmem:[#allocation2 + $0x110] sm:$0xff]
          %v1985 = vld [vmem:[#allocation2 + $0x118] sm:$0xff]
          %v1986 = vld [vmem:[#allocation2 + $0x120] sm:$0xff]
          %v1987 = vld [vmem:[#allocation2 + $0x128] sm:$0xff]
          %v1988 = vld [vmem:[#allocation2 + $0x130] sm:$0xff]
          %v1989 = vld [vmem:[#allocation2 + $0x138] sm:$0xff]
          %v1990 = vld [vmem:[#allocation2 + $0x140] sm:$0xff]
          %v1991 = vld [vmem:[#allocation2 + $0x148] sm:$0xff]
          %v1992 = vld [vmem:[#allocation2 + $0x150] sm:$0xff]
          %v1993 = vld [vmem:[#allocation2 + $0x158] sm:$0xff]
          %v1994 = vld [vmem:[#allocation2 + $0x160] sm:$0xff]
          %v1995 = vld [vmem:[#allocation2 + $0x168] sm:$0xff]
          %v1996 = vld [vmem:[#allocation2 + $0x170] sm:$0xff]
          %v1997 = vld [vmem:[#allocation2 + $0x178] sm:$0xff]
          %v1998 = vld [vmem:[#allocation2 + $0x180] sm:$0xff]
          %v1999 = vld [vmem:[#allocation2 + $0x188] sm:$0xff]
          %v2000 = vld [vmem:[#allocation2 + $0x190] sm:$0xff]
          %v2001 = vld [vmem:[#allocation2 + $0x198] sm:$0xff]
          %v2002 = vld [vmem:[#allocation2 + $0x1a0] sm:$0xff]
          %v2003 = vld [vmem:[#allocation2 + $0x1a8] sm:$0xff]
          %v2004 = vld [vmem:[#allocation2 + $0x1b0] sm:$0xff]
          %v2005 = vld [vmem:[#allocation2 + $0x1b8] sm:$0xff]
          %v2006 = vld [vmem:[#allocation2 + $0x1c0] sm:$0xff]
          %v2007 = vld [vmem:[#allocation2 + $0x1c8] sm:$0xff]
          %v2008 = vld [vmem:[#allocation2 + $0x1d0] sm:$0xff]
          %v2009 = vld [vmem:[#allocation2 + $0x1d8] sm:$0xff]
          %v2010 = vld [vmem:[#allocation2 + $0x1e0] sm:$0xff]
          %v2011 = vld [vmem:[#allocation2 + $0x1e8] sm:$0xff]
          %v2012 = vld [vmem:[#allocation2 + $0x1f0] sm:$0xff]
          %v2013 = vld [vmem:[#allocation2 + $0x1f8] sm:$0xff]
          %v2014 = vld [vmem:[%s271] sm:$0xf]
          %v2016 = vlaneseq
          %v2017 = vshrl.u32 %v2016, 7
          %v2018 = vsub.s32 0, %v2017
          %v2019 = vrot.slane %v2014, %v2018
          %v2020 = vlaneseq
          %v2021 = vshrl.u32 %v2020, 7
          %v2022 = vsub.s32 1, %v2021
          %v2023 = vrot.slane %v2014, %v2022
          %v2024 = vlaneseq
          %v2025 = vshrl.u32 %v2024, 7
          %v2026 = vsub.s32 2, %v2025
          %v2027 = vrot.slane %v2014, %v2026
          %v2028 = vlaneseq
          %v2029 = vshrl.u32 %v2028, 7
          %v2030 = vsub.s32 3, %v2029
          %v2031 = vrot.slane %v2014, %v2030
          %v2036 = vadd.f32 %v1950, %v2019
          %v2037 = vadd.f32 %v1951, %v2023
          %v2038 = vadd.f32 %v1952, %v2027
          %v2039 = vadd.f32 %v1953, %v2031
          %v2040 = vadd.f32 %v1954, %v2019
          %v2041 = vadd.f32 %v1955, %v2023
          %v2042 = vadd.f32 %v1956, %v2027
          %v2043 = vadd.f32 %v1957, %v2031
          %v2044 = vadd.f32 %v1958, %v2019
          %v2045 = vadd.f32 %v1959, %v2023
          %v2046 = vadd.f32 %v1960, %v2027
          %v2047 = vadd.f32 %v1961, %v2031
          %v2048 = vadd.f32 %v1962, %v2019
          %v2049 = vadd.f32 %v1963, %v2023
          %v2050 = vadd.f32 %v1964, %v2027
          %v2051 = vadd.f32 %v1965, %v2031
          %v2052 = vadd.f32 %v1966, %v2019
          %v2053 = vadd.f32 %v1967, %v2023
          %v2054 = vadd.f32 %v1968, %v2027
          %v2055 = vadd.f32 %v1969, %v2031
          %v2056 = vadd.f32 %v1970, %v2019
          %v2057 = vadd.f32 %v1971, %v2023
          %v2058 = vadd.f32 %v1972, %v2027
          %v2059 = vadd.f32 %v1973, %v2031
          %v2060 = vadd.f32 %v1974, %v2019
          %v2061 = vadd.f32 %v1975, %v2023
          %v2062 = vadd.f32 %v1976, %v2027
          %v2063 = vadd.f32 %v1977, %v2031
          %v2064 = vadd.f32 %v1978, %v2019
          %v2065 = vadd.f32 %v1979, %v2023
          %v2066 = vadd.f32 %v1980, %v2027
          %v2067 = vadd.f32 %v1981, %v2031
          %v2068 = vadd.f32 %v1982, %v2019
          %v2069 = vadd.f32 %v1983, %v2023
          %v2070 = vadd.f32 %v1984, %v2027
          %v2071 = vadd.f32 %v1985, %v2031
          %v2072 = vadd.f32 %v1986, %v2019
          %v2073 = vadd.f32 %v1987, %v2023
          %v2074 = vadd.f32 %v1988, %v2027
          %v2075 = vadd.f32 %v1989, %v2031
          %v2076 = vadd.f32 %v1990, %v2019
          %v2077 = vadd.f32 %v1991, %v2023
          %v2078 = vadd.f32 %v1992, %v2027
          %v2079 = vadd.f32 %v1993, %v2031
          %v2080 = vadd.f32 %v1994, %v2019
          %v2081 = vadd.f32 %v1995, %v2023
          %v2082 = vadd.f32 %v1996, %v2027
          %v2083 = vadd.f32 %v1997, %v2031
          %v2084 = vadd.f32 %v1998, %v2019
          %v2085 = vadd.f32 %v1999, %v2023
          %v2086 = vadd.f32 %v2000, %v2027
          %v2087 = vadd.f32 %v2001, %v2031
          %v2088 = vadd.f32 %v2002, %v2019
          %v2089 = vadd.f32 %v2003, %v2023
          %v2090 = vadd.f32 %v2004, %v2027
          %v2091 = vadd.f32 %v2005, %v2031
          %v2092 = vadd.f32 %v2006, %v2019
          %v2093 = vadd.f32 %v2007, %v2023
          %v2094 = vadd.f32 %v2008, %v2027
          %v2095 = vadd.f32 %v2009, %v2031
          %v2096 = vadd.f32 %v2010, %v2019
          %v2097 = vadd.f32 %v2011, %v2023
          %v2098 = vadd.f32 %v2012, %v2027
          %v2099 = vadd.f32 %v2013, %v2031
          %v2100 = vpack.c.bf16 %v2040, %v2036
          %v2101 = vpack.c.bf16 %v2041, %v2037
          %v2102 = vpack.c.bf16 %v2042, %v2038
          %v2103 = vpack.c.bf16 %v2043, %v2039
          %v2104 = vpack.c.bf16 %v2048, %v2044
          %v2105 = vpack.c.bf16 %v2049, %v2045
          %v2106 = vpack.c.bf16 %v2050, %v2046
          %v2107 = vpack.c.bf16 %v2051, %v2047
          %v2108 = vpack.c.bf16 %v2056, %v2052
          %v2109 = vpack.c.bf16 %v2057, %v2053
          %v2110 = vpack.c.bf16 %v2058, %v2054
          %v2111 = vpack.c.bf16 %v2059, %v2055
          %v2112 = vpack.c.bf16 %v2064, %v2060
          %v2113 = vpack.c.bf16 %v2065, %v2061
          %v2114 = vpack.c.bf16 %v2066, %v2062
          %v2115 = vpack.c.bf16 %v2067, %v2063
          %v2116 = vpack.c.bf16 %v2072, %v2068
          %v2117 = vpack.c.bf16 %v2073, %v2069
          %v2118 = vpack.c.bf16 %v2074, %v2070
          %v2119 = vpack.c.bf16 %v2075, %v2071
          %v2120 = vpack.c.bf16 %v2080, %v2076
          %v2121 = vpack.c.bf16 %v2081, %v2077
          %v2122 = vpack.c.bf16 %v2082, %v2078
          %v2123 = vpack.c.bf16 %v2083, %v2079
          %v2124 = vpack.c.bf16 %v2088, %v2084
          %v2125 = vpack.c.bf16 %v2089, %v2085
          %v2126 = vpack.c.bf16 %v2090, %v2086
          %v2127 = vpack.c.bf16 %v2091, %v2087
          %v2128 = vpack.c.bf16 %v2096, %v2092
          %v2129 = vpack.c.bf16 %v2097, %v2093
          %v2130 = vpack.c.bf16 %v2098, %v2094
          %v2131 = vpack.c.bf16 %v2099, %v2095
          %v2164 = vunpack.c.l.b16 %v2100
          %v2165 = vunpack.c.l.b16 %v2101
          %v2166 = vunpack.c.l.b16 %v2102
          %v2167 = vunpack.c.l.b16 %v2103
          %v2168 = vunpack.c.h.b16 %v2100
          %v2169 = vunpack.c.h.b16 %v2101
          %v2170 = vunpack.c.h.b16 %v2102
          %v2171 = vunpack.c.h.b16 %v2103
          %v2172 = vunpack.c.l.b16 %v2104
          %v2173 = vunpack.c.l.b16 %v2105
          %v2174 = vunpack.c.l.b16 %v2106
          %v2175 = vunpack.c.l.b16 %v2107
          %v2176 = vunpack.c.h.b16 %v2104
          %v2177 = vunpack.c.h.b16 %v2105
          %v2178 = vunpack.c.h.b16 %v2106
          %v2179 = vunpack.c.h.b16 %v2107
          %v2180 = vunpack.c.l.b16 %v2108
          %v2181 = vunpack.c.l.b16 %v2109
          %v2182 = vunpack.c.l.b16 %v2110
          %v2183 = vunpack.c.l.b16 %v2111
          %v2184 = vunpack.c.h.b16 %v2108
          %v2185 = vunpack.c.h.b16 %v2109
          %v2186 = vunpack.c.h.b16 %v2110
          %v2187 = vunpack.c.h.b16 %v2111
          %v2188 = vunpack.c.l.b16 %v2112
          %v2189 = vunpack.c.l.b16 %v2113
          %v2190 = vunpack.c.l.b16 %v2114
          %v2191 = vunpack.c.l.b16 %v2115
          %v2192 = vunpack.c.h.b16 %v2112
          %v2193 = vunpack.c.h.b16 %v2113
          %v2194 = vunpack.c.h.b16 %v2114
          %v2195 = vunpack.c.h.b16 %v2115
          %v2196 = vunpack.c.l.b16 %v2116
          %v2197 = vunpack.c.l.b16 %v2117
          %v2198 = vunpack.c.l.b16 %v2118
          %v2199 = vunpack.c.l.b16 %v2119
          %v2200 = vunpack.c.h.b16 %v2116
          %v2201 = vunpack.c.h.b16 %v2117
          %v2202 = vunpack.c.h.b16 %v2118
          %v2203 = vunpack.c.h.b16 %v2119
          %v2204 = vunpack.c.l.b16 %v2120
          %v2205 = vunpack.c.l.b16 %v2121
          %v2206 = vunpack.c.l.b16 %v2122
          %v2207 = vunpack.c.l.b16 %v2123
          %v2208 = vunpack.c.h.b16 %v2120
          %v2209 = vunpack.c.h.b16 %v2121
          %v2210 = vunpack.c.h.b16 %v2122
          %v2211 = vunpack.c.h.b16 %v2123
          %v2212 = vunpack.c.l.b16 %v2124
          %v2213 = vunpack.c.l.b16 %v2125
          %v2214 = vunpack.c.l.b16 %v2126
          %v2215 = vunpack.c.l.b16 %v2127
          %v2216 = vunpack.c.h.b16 %v2124
          %v2217 = vunpack.c.h.b16 %v2125
          %v2218 = vunpack.c.h.b16 %v2126
          %v2219 = vunpack.c.h.b16 %v2127
          %v2220 = vunpack.c.l.b16 %v2128
          %v2221 = vunpack.c.l.b16 %v2129
          %v2222 = vunpack.c.l.b16 %v2130
          %v2223 = vunpack.c.l.b16 %v2131
          %v2224 = vunpack.c.h.b16 %v2128
          %v2225 = vunpack.c.h.b16 %v2129
          %v2226 = vunpack.c.h.b16 %v2130
          %v2227 = vunpack.c.h.b16 %v2131
          %v2228 = vpack.c.b16 %v2165, %v2164
          %v2229 = vpack.c.b16 %v2167, %v2166
          %v2230 = vpack.c.b16 %v2169, %v2168
          %v2231 = vpack.c.b16 %v2171, %v2170
          %v2232 = vpack.c.b16 %v2173, %v2172
          %v2233 = vpack.c.b16 %v2175, %v2174
          %v2234 = vpack.c.b16 %v2177, %v2176
          %v2235 = vpack.c.b16 %v2179, %v2178
          %v2236 = vpack.c.b16 %v2181, %v2180
          %v2237 = vpack.c.b16 %v2183, %v2182
          %v2238 = vpack.c.b16 %v2185, %v2184
          %v2239 = vpack.c.b16 %v2187, %v2186
          %v2240 = vpack.c.b16 %v2189, %v2188
          %v2241 = vpack.c.b16 %v2191, %v2190
          %v2242 = vpack.c.b16 %v2193, %v2192
          %v2243 = vpack.c.b16 %v2195, %v2194
          %v2244 = vpack.c.b16 %v2197, %v2196
          %v2245 = vpack.c.b16 %v2199, %v2198
          %v2246 = vpack.c.b16 %v2201, %v2200
          %v2247 = vpack.c.b16 %v2203, %v2202
          %v2248 = vpack.c.b16 %v2205, %v2204
          %v2249 = vpack.c.b16 %v2207, %v2206
          %v2250 = vpack.c.b16 %v2209, %v2208
          %v2251 = vpack.c.b16 %v2211, %v2210
          %v2252 = vpack.c.b16 %v2213, %v2212
          %v2253 = vpack.c.b16 %v2215, %v2214
          %v2254 = vpack.c.b16 %v2217, %v2216
          %v2255 = vpack.c.b16 %v2219, %v2218
          %v2256 = vpack.c.b16 %v2221, %v2220
          %v2257 = vpack.c.b16 %v2223, %v2222
          %v2258 = vpack.c.b16 %v2225, %v2224
          %v2259 = vpack.c.b16 %v2227, %v2226
          %2292 = vst [vmem:[%s253] sm:$0xff] %v2228
          %2293 = vst [vmem:[%s253 + $0x8] sm:$0xff] %v2229
          %2294 = vst [vmem:[%s253 + $0x10] sm:$0xff] %v2230
          %2295 = vst [vmem:[%s253 + $0x18] sm:$0xff] %v2231
          %2296 = vst [vmem:[%s253 + $0x20] sm:$0xff] %v2232
          %2297 = vst [vmem:[%s253 + $0x28] sm:$0xff] %v2233
          %2298 = vst [vmem:[%s253 + $0x30] sm:$0xff] %v2234
          %2299 = vst [vmem:[%s253 + $0x38] sm:$0xff] %v2235
          %2300 = vst [vmem:[%s253 + $0x40] sm:$0xff] %v2236
          %2301 = vst [vmem:[%s253 + $0x48] sm:$0xff] %v2237
          %2302 = vst [vmem:[%s253 + $0x50] sm:$0xff] %v2238
          %2303 = vst [vmem:[%s253 + $0x58] sm:$0xff] %v2239
          %2304 = vst [vmem:[%s253 + $0x60] sm:$0xff] %v2240
          %2305 = vst [vmem:[%s253 + $0x68] sm:$0xff] %v2241
          %2306 = vst [vmem:[%s253 + $0x70] sm:$0xff] %v2242
          %2307 = vst [vmem:[%s253 + $0x78] sm:$0xff] %v2243
          %2308 = vst [vmem:[%s253 + $0x80] sm:$0xff] %v2244
          %2309 = vst [vmem:[%s253 + $0x88] sm:$0xff] %v2245
          %2310 = vst [vmem:[%s253 + $0x90] sm:$0xff] %v2246
          %2311 = vst [vmem:[%s253 + $0x98] sm:$0xff] %v2247
          %2312 = vst [vmem:[%s253 + $0xa0] sm:$0xff] %v2248
          %2313 = vst [vmem:[%s253 + $0xa8] sm:$0xff] %v2249
          %2314 = vst [vmem:[%s253 + $0xb0] sm:$0xff] %v2250
          %2315 = vst [vmem:[%s253 + $0xb8] sm:$0xff] %v2251
          %2316 = vst [vmem:[%s253 + $0xc0] sm:$0xff] %v2252
          %2317 = vst [vmem:[%s253 + $0xc8] sm:$0xff] %v2253
          %2318 = vst [vmem:[%s253 + $0xd0] sm:$0xff] %v2254
          %2319 = vst [vmem:[%s253 + $0xd8] sm:$0xff] %v2255
          %2320 = vst [vmem:[%s253 + $0xe0] sm:$0xff] %v2256
          %2321 = vst [vmem:[%s253 + $0xe8] sm:$0xff] %v2257
          %2322 = vst [vmem:[%s253 + $0xf0] sm:$0xff] %v2258
          %2323 = vst [vmem:[%s253 + $0xf8] sm:$0xff] %v2259
        $region44: #{gqa_forward.3} parent=31 // pred_fallthru
          _
        %s2324 = sand.u32 %s128, 1
        %s2325 = sand.u32 %s128, 1
        %s2326 = smul.addr %s2325, 256
        %s2327 = scalar_lea.vmem [#allocation5], %s2326
        // Predicated region
        $region45: #{gqa_forward.3} parent=31 // pred_check
          %p2328 = pneg %p138
        $region46: #{gqa_forward.3} parent=31 // pred_check_branch
          %2330 = sbr.rel (%p2328) target = $region48
        $region47: #{gqa_forward.3} parent=31 // pred_region
          %s2331 = smul.u32 16, %s22
          %s2332 = smul.u32 4, %s23
          %s2333 = smul.addr %s2331, 8
          %s2334 = sadd.s32 %s2332, %s2333
          %s2335 = smul.addr %s2334, 4
          %s2336 = scalar_lea.vmem %s3, %s2335
          // Predicated region
          $region49: #{gqa_forward.3} parent=47 // pred_check
            _
          $region50: #{gqa_forward.3} parent=47 // pred_check_branch
            %2338 = sbr.rel (0) target = $region52
          $region51: #{gqa_forward.3} parent=47 // pred_region
            // Predicated region
            $region53: #{gqa_forward.3} parent=51 // pred_check
              _
            $region54: #{gqa_forward.3} parent=51 // pred_check_branch
              %2340 = sbr.rel (0) target = $region56
            $region55: #{gqa_forward.3} parent=51 // pred_region
              loop: start=0, step=1, limit=1
              $region57: #{gqa_forward.3} parent=55 // loop_pre_header
                _
              $region58: #{gqa_forward.3} parent=55 // loop_header
                %s2342 = sphi 0, %s2346
                %p2343 = scmp.ge.s32.totalorder %s2342, 1
                %s2347 = sphi %s2327, %s2327
                %s2348 = sphi %s2336, %s2336
              $region59: #{gqa_forward.3} parent=55 // loop_header_branch
                %2345 = sbr.rel (%p2343) target = $region63
              $region60: #{gqa_forward.3} parent=55 // loop_body
                %v2349 = vld [vmem:[%s2347] sm:$0xff]
                %2350 = vst [vmem:[%s2348] sm:$0xff] %v2349
                %v2351 = vld [vmem:[%s2347 + $0x8] sm:$0xff]
                %2352 = vst [vmem:[%s2348 + $0x8] sm:$0xff] %v2351
                %v2353 = vld [vmem:[%s2347 + $0x10] sm:$0xff]
                %2354 = vst [vmem:[%s2348 + $0x20] sm:$0xff] %v2353
                %v2355 = vld [vmem:[%s2347 + $0x18] sm:$0xff]
                %2356 = vst [vmem:[%s2348 + $0x28] sm:$0xff] %v2355
                %v2357 = vld [vmem:[%s2347 + $0x20] sm:$0xff]
                %2358 = vst [vmem:[%s2348 + $0x40] sm:$0xff] %v2357
                %v2359 = vld [vmem:[%s2347 + $0x28] sm:$0xff]
                %2360 = vst [vmem:[%s2348 + $0x48] sm:$0xff] %v2359
                %v2361 = vld [vmem:[%s2347 + $0x30] sm:$0xff]
                %2362 = vst [vmem:[%s2348 + $0x60] sm:$0xff] %v2361
                %v2363 = vld [vmem:[%s2347 + $0x38] sm:$0xff]
                %2364 = vst [vmem:[%s2348 + $0x68] sm:$0xff] %v2363
                %v2365 = vld [vmem:[%s2347 + $0x40] sm:$0xff]
                %2366 = vst [vmem:[%s2348 + $0x80] sm:$0xff] %v2365
                %v2367 = vld [vmem:[%s2347 + $0x48] sm:$0xff]
                %2368 = vst [vmem:[%s2348 + $0x88] sm:$0xff] %v2367
                %v2369 = vld [vmem:[%s2347 + $0x50] sm:$0xff]
                %2370 = vst [vmem:[%s2348 + $0xa0] sm:$0xff] %v2369
                %v2371 = vld [vmem:[%s2347 + $0x58] sm:$0xff]
                %2372 = vst [vmem:[%s2348 + $0xa8] sm:$0xff] %v2371
                %v2373 = vld [vmem:[%s2347 + $0x60] sm:$0xff]
                %2374 = vst [vmem:[%s2348 + $0xc0] sm:$0xff] %v2373
                %v2375 = vld [vmem:[%s2347 + $0x68] sm:$0xff]
                %2376 = vst [vmem:[%s2348 + $0xc8] sm:$0xff] %v2375
                %v2377 = vld [vmem:[%s2347 + $0x70] sm:$0xff]
                %2378 = vst [vmem:[%s2348 + $0xe0] sm:$0xff] %v2377
                %v2379 = vld [vmem:[%s2347 + $0x78] sm:$0xff]
                %2380 = vst [vmem:[%s2348 + $0xe8] sm:$0xff] %v2379
                %v2381 = vld [vmem:[%s2347 + $0x80] sm:$0xff]
                %2382 = vst [vmem:[%s2348 + $0x100] sm:$0xff] %v2381
                %v2383 = vld [vmem:[%s2347 + $0x88] sm:$0xff]
                %2384 = vst [vmem:[%s2348 + $0x108] sm:$0xff] %v2383
                %v2385 = vld [vmem:[%s2347 + $0x90] sm:$0xff]
                %2386 = vst [vmem:[%s2348 + $0x120] sm:$0xff] %v2385
                %v2387 = vld [vmem:[%s2347 + $0x98] sm:$0xff]
                %2388 = vst [vmem:[%s2348 + $0x128] sm:$0xff] %v2387
                %v2389 = vld [vmem:[%s2347 + $0xa0] sm:$0xff]
                %2390 = vst [vmem:[%s2348 + $0x140] sm:$0xff] %v2389
                %v2391 = vld [vmem:[%s2347 + $0xa8] sm:$0xff]
                %2392 = vst [vmem:[%s2348 + $0x148] sm:$0xff] %v2391
                %v2393 = vld [vmem:[%s2347 + $0xb0] sm:$0xff]
                %2394 = vst [vmem:[%s2348 + $0x160] sm:$0xff] %v2393
                %v2395 = vld [vmem:[%s2347 + $0xb8] sm:$0xff]
                %2396 = vst [vmem:[%s2348 + $0x168] sm:$0xff] %v2395
                %v2397 = vld [vmem:[%s2347 + $0xc0] sm:$0xff]
                %2398 = vst [vmem:[%s2348 + $0x180] sm:$0xff] %v2397
                %v2399 = vld [vmem:[%s2347 + $0xc8] sm:$0xff]
                %2400 = vst [vmem:[%s2348 + $0x188] sm:$0xff] %v2399
                %v2401 = vld [vmem:[%s2347 + $0xd0] sm:$0xff]
                %2402 = vst [vmem:[%s2348 + $0x1a0] sm:$0xff] %v2401
                %v2403 = vld [vmem:[%s2347 + $0xd8] sm:$0xff]
                %2404 = vst [vmem:[%s2348 + $0x1a8] sm:$0xff] %v2403
                %v2405 = vld [vmem:[%s2347 + $0xe0] sm:$0xff]
                %2406 = vst [vmem:[%s2348 + $0x1c0] sm:$0xff] %v2405
                %v2407 = vld [vmem:[%s2347 + $0xe8] sm:$0xff]
                %2408 = vst [vmem:[%s2348 + $0x1c8] sm:$0xff] %v2407
                %v2409 = vld [vmem:[%s2347 + $0xf0] sm:$0xff]
                %2410 = vst [vmem:[%s2348 + $0x1e0] sm:$0xff] %v2409
                %v2411 = vld [vmem:[%s2347 + $0xf8] sm:$0xff]
                %2412 = vst [vmem:[%s2348 + $0x1e8] sm:$0xff] %v2411
              $region61: #{gqa_forward.3} parent=55 // loop_footer
                %s2346 = sadd.s32 1, %s2342
              $region62: #{gqa_forward.3} parent=55 // loop_footer_branch
                %2341 = sbr.rel target = $region58
              $region63: #{gqa_forward.3} parent=55 // loop_exit
                _
            $region56: #{gqa_forward.3} parent=51 // pred_fallthru
              _
            // Predicated region
            $region64: #{gqa_forward.3} parent=51 // pred_check
              _
            $region65: #{gqa_forward.3} parent=51 // pred_check_branch
              %2414 = sbr.rel target = $region67
            $region66: #{gqa_forward.3} parent=51 // pred_region
              _
            $region67: #{gqa_forward.3} parent=51 // pred_fallthru
              _
          $region52: #{gqa_forward.3} parent=47 // pred_fallthru
            _
          %2415 = vnop
        $region48: #{gqa_forward.3} parent=31 // pred_fallthru
          _
      $region32: #{gqa_forward.3} parent=5 // pred_fallthru
        _
      %p2416 = scmp.le.s32.totalorder 2, %s12
      // Predicated region
      $region68: #{gqa_forward.3} parent=5 // pred_check
        %p2417 = pneg %p2416
      $region69: #{gqa_forward.3} parent=5 // pred_check_branch
        %2419 = sbr.rel (%p2417) target = $region71
      $region70: #{gqa_forward.3} parent=5 // pred_region
        %s2420 = ssub.s32 %s12, 2
        // Predicated region
        $region72: #{gqa_forward.3} parent=70 // pred_check
          %p2421 = pneg %p144
        $region73: #{gqa_forward.3} parent=70 // pred_check_branch
          %2423 = sbr.rel (%p2421) target = $region75
        $region74: #{gqa_forward.3} parent=70 // pred_region
          %s2424 = sand.u32 %s129, 1
          %s2425 = sand.u32 %s129, 1
          %s2426 = smul.addr %s2425, 256
          %s2427 = scalar_lea.vmem [#allocation5], %s2426
        $region75: #{gqa_forward.3} parent=70 // pred_fallthru
          _
      $region71: #{gqa_forward.3} parent=5 // pred_fallthru
        _
    $region6: #{gqa_forward.3} parent=1 // loop_footer
      %s16 = sadd.s32 1, %s12
    $region7: #{gqa_forward.3} parent=1 // loop_footer_branch
      %11 = sbr.rel target = $region3
    $region8: #{gqa_forward.3} parent=1 // loop_exit
      _
    %2428 = vsyncpa [#allocation4], 1
    %s2429 = scalar_lea.sflag [#allocation4], 1
    %2430 = vsyncpa %s2429, 1

</llo_original>
